<compile_context>
chip_gen: v7x
topology: tpu7x:2x2x1
jax: 0.10.0
libtpu: 0.0.40
codegen_flags: <defaults>
</compile_context>

<pallas_src>
import functools

import jax
import jax.numpy as jnp
from jax.experimental import pallas as pl
from jax.experimental.pallas import tpu as pltpu


# ---------------------------------------------------------------------------
# Fused Pallas kernel: all LSTM layers + FC head, one T-chunk per grid step.
# ---------------------------------------------------------------------------
def _fused_lstm_kernel(*refs, num_layers, chunk_len, hidden_pad, batch_pad):
    L, Tc, Hp, Bp = num_layers, chunk_len, hidden_pad, batch_pad

    x_ref = refs[0]                                  # (Tc*Bp, Dp)   bf16
    w_ih0_ref, w_hh0_ref, b0_ref = refs[1], refs[2], refs[3]
    upper = [(refs[4 + 2 * (l - 1)], refs[5 + 2 * (l - 1)])  # (W fused, bias)
             for l in range(1, L)]
    fc_w_ref = refs[2 * L + 2]                       # (Hp, 128)     bf16
    fc_b_ref = refs[2 * L + 3]                       # (1, 128)      f32
    out_ref = refs[2 * L + 4]                        # (Bp, 128)     f32
    gx_scr = refs[2 * L + 5]                         # (Tc*Bp, 4Hp)  f32 scratch
    h_scr = refs[2 * L + 6]                          # (L, Bp, Hp)   bf16 scratch
    c_scr = refs[2 * L + 7]                          # (L, Bp, Hp)   f32 scratch

    chunk = pl.program_id(0)

    # ---- initialize the h/c carry at the first chunk ----
    @pl.when(chunk == 0)
    def _():
        h_scr[...] = jnp.zeros_like(h_scr)
        c_scr[...] = jnp.zeros_like(c_scr)

    # ---- hoisted layer-0 input projection for this chunk: ONE big MXU matmul ----
    gx_scr[...] = (jnp.dot(x_ref[...], w_ih0_ref[...],
                           preferred_element_type=jnp.float32)
                   + b0_ref[...])

    # Hoist upper-layer bias broadcasts out of the recurrence
    # (broadcast_in_dim is not CSE'd inside loops).
    b_full = [jnp.broadcast_to(b_ref[...], (Bp, 4 * Hp)) for (_, b_ref) in upper]

    def cell(gates, c_prev):
        # Lane-aligned gate slices (Hp multiple of 128): full-vreg EUP/VPU ops.
        i_g = jax.nn.sigmoid(gates[:, 0 * Hp:1 * Hp])
        f_g = jax.nn.sigmoid(gates[:, 1 * Hp:2 * Hp])
        g_g = jnp.tanh(gates[:, 2 * Hp:3 * Hp])
        o_g = jax.nn.sigmoid(gates[:, 3 * Hp:4 * Hp])
        c_new = f_g * c_prev + i_g * g_g
        # h is only ever consumed as a bf16 MXU operand -> cast once here.
        h_new = (o_g * jnp.tanh(c_new)).astype(jnp.bfloat16)
        return h_new, c_new

    def step(t, carry):
        hs = list(carry[:L])
        cs = list(carry[L:])

        # Layer 0: input projection already precomputed in gx_scr.
        row = pl.multiple_of(t * Bp, Bp)
        gates = (gx_scr[pl.ds(row, Bp), :]
                 + jnp.dot(hs[0], w_hh0_ref[...],
                           preferred_element_type=jnp.float32))
        hs[0], cs[0] = cell(gates, cs[0])

        # Upper layers: fused [h_below, h_self] @ [W_ih; W_hh] matmul.
        for l in range(1, L):
            w_f_ref, _ = upper[l - 1]
            lhs = jnp.concatenate([hs[l - 1], hs[l]], axis=-1)   # (Bp, 2Hp) bf16
            gates = (jnp.dot(lhs, w_f_ref[...],
                             preferred_element_type=jnp.float32)
                     + b_full[l - 1])
            hs[l], cs[l] = cell(gates, cs[l])

        return tuple(hs) + tuple(cs)

    carry0 = (tuple(h_scr[l] for l in range(L))
              + tuple(c_scr[l] for l in range(L)))
    final = jax.lax.fori_loop(0, Tc, step, carry0, unroll=min(Tc, 8))

    # ---- write the carry back for the next chunk ----
    for l in range(L):
        h_scr[l] = final[l]
        c_scr[l] = final[L + l]

    # ---- fused FC head on the last timestep's top-layer hidden state ----
    @pl.when(chunk == pl.num_programs(0) - 1)
    def _():
        out_ref[...] = (jnp.dot(final[L - 1], fc_w_ref[...],
                                preferred_element_type=jnp.float32)
                        + fc_b_ref[...]).astype(out_ref.dtype)


# ---------------------------------------------------------------------------
# Padding helpers (lane-dense gate layout)
# ---------------------------------------------------------------------------
def _round_up(n, m):
    return ((n + m - 1) // m) * m


def _pick_chunk(T, cap=32):
    """Largest divisor of T that is <= cap (keeps VMEM O(Tc), no T padding)."""
    for c in range(min(T, cap), 0, -1):
        if T % c == 0:
            return c
    return T


def _pad_gate_mat(w, rows_pad, H, Hp, dtype):
    """w: (rows, 4H), gate order [i|f|g|o] -> zero-padded (rows_pad, 4Hp)."""
    rows = w.shape[0]
    w4 = w.reshape(rows, 4, H)
    out = jnp.zeros((rows_pad, 4, Hp), dtype)
    out = out.at[:rows, :, :H].set(w4.astype(dtype))
    return out.reshape(rows_pad, 4 * Hp)


def _pad_gate_bias(b, H, Hp):
    """b: (1, 4H) -> (1, 4Hp), each gate block zero-padded to Hp lanes."""
    b4 = b.reshape(4, H)
    out = jnp.zeros((4, Hp), jnp.float32)
    out = out.at[:, :H].set(b4.astype(jnp.float32))
    return out.reshape(1, 4 * Hp)


# ---------------------------------------------------------------------------
# Forward wrapper (same API / semantics as the PyTorch module's forward)
# ---------------------------------------------------------------------------
def lstm_soh_forward(x, params):
    """x: (B, T, input_dim) batch-first. Returns (B,) like fc(...).squeeze(-1)."""
    B, T, D = x.shape
    lstm_params = params["lstm"]
    L = len(lstm_params)
    H = lstm_params[0][1].shape[0]          # w_hh: (H, 4H)

    Hp = _round_up(max(H, 128), 128)        # lane-dense hidden
    Bp = _round_up(max(B, 8), 8)            # f32 sublane-aligned batch
    Dp = _round_up(max(D, 128), 128)        # lane-dense input features
    Tc = _pick_chunk(T, 32)                 # time chunk per grid step
    n_chunks = T // Tc

    # Time-major, single jnp.pad, bf16 MXU operand, flattened to (T*Bp, Dp).
    # TODO(synk): fold the transpose/pad into the x BlockSpec index_map to avoid
    #             this extra HBM pass once layouts are pinned.
    x_tm = jnp.transpose(x, (1, 0, 2)).astype(jnp.bfloat16)      # (T, B, D)
    x_p = jnp.pad(x_tm, ((0, 0), (0, Bp - B), (0, Dp - D)))
    x_p = x_p.reshape(T * Bp, Dp)

    args = [x_p]
    in_specs = [pl.BlockSpec((Tc * Bp, Dp), lambda t: (t, 0))]

    # Layer 0: separate W_ih (for the hoisted projection) and W_hh (recurrence).
    w_ih0, w_hh0, b0 = lstm_params[0]
    args += [_pad_gate_mat(w_ih0, Dp, H, Hp, jnp.bfloat16),
             _pad_gate_mat(w_hh0, Hp, H, Hp, jnp.bfloat16),
             _pad_gate_bias(b0, H, Hp)]
    in_specs += [pl.BlockSpec((Dp, 4 * Hp), lambda t: (0, 0)),
                 pl.BlockSpec((Hp, 4 * Hp), lambda t: (0, 0)),
                 pl.BlockSpec((1, 4 * Hp), lambda t: (0, 0))]

    # Upper layers: fused [W_ih; W_hh] -> (2Hp, 4Hp) bf16 weight + bias.
    for l in range(1, L):
        w_ih, w_hh, b = lstm_params[l]
        w_fused = jnp.concatenate(
            [_pad_gate_mat(w_ih, Hp, H, Hp, jnp.bfloat16),
             _pad_gate_mat(w_hh, Hp, H, Hp, jnp.bfloat16)], axis=0)
        args += [w_fused, _pad_gate_bias(b, H, Hp)]
        in_specs += [pl.BlockSpec((2 * Hp, 4 * Hp), lambda t: (0, 0)),
                     pl.BlockSpec((1, 4 * Hp), lambda t: (0, 0))]

    fc_w = jnp.zeros((Hp, 128), jnp.bfloat16).at[:H, 0].set(
        params["fc_w"][:, 0].astype(jnp.bfloat16))
    fc_b = jnp.zeros((1, 128), jnp.float32).at[0, 0].set(params["fc_b"][0, 0])
    args += [fc_w, fc_b]
    in_specs += [pl.BlockSpec((Hp, 128), lambda t: (0, 0)),
                 pl.BlockSpec((1, 128), lambda t: (0, 0))]

    scratch_shapes = [
        pltpu.VMEM((Tc * Bp, 4 * Hp), jnp.float32),   # per-chunk hoisted x@W_ih
        pltpu.VMEM((L, Bp, Hp), jnp.bfloat16),        # h carry across chunks
        pltpu.VMEM((L, Bp, Hp), jnp.float32),         # c carry across chunks
    ]

    # Explicit VMEM budget: weights/x-chunk double-buffered + scratch + headroom.
    in_bytes = sum(int(a.size) * a.dtype.itemsize for a in args[1:]) \
        + Tc * Bp * Dp * 2
    scratch_bytes = (Tc * Bp * 4 * Hp * 4) + (L * Bp * Hp * 2) + (L * Bp * Hp * 4)
    out_bytes = Bp * 128 * 4
    vmem_limit = int(min(max(2 * (in_bytes + out_bytes) + scratch_bytes
                             + (4 << 20), 16 << 20), 64 << 20))

    kernel = functools.partial(
        _fused_lstm_kernel,
        num_layers=L, chunk_len=Tc, hidden_pad=Hp, batch_pad=Bp)

    out = pl.pallas_call(
        kernel,
        out_shape=jax.ShapeDtypeStruct((Bp, 128), jnp.float32),
        grid_spec=pltpu.PrefetchScalarGridSpec(
            num_scalar_prefetch=0,
            grid=(n_chunks,),
            in_specs=in_specs,
            out_specs=pl.BlockSpec((Bp, 128), lambda t: (0, 0)),
            scratch_shapes=scratch_shapes),
        compiler_params=pltpu.CompilerParams(
            dimension_semantics=("arbitrary",),
            vmem_limit_bytes=vmem_limit),
    )(*args)

    return out[:B, 0]


# ---------------------------------------------------------------------------
# Deterministic parameter init (PyTorch default: U(-1/sqrt(H), 1/sqrt(H)))
# ---------------------------------------------------------------------------
def init_params(key, input_dim, hidden_dim, num_layers):
    k = 1.0 / jnp.sqrt(hidden_dim)
    layers = []
    for layer in range(num_layers):
        d_in = input_dim if layer == 0 else hidden_dim
        key, k1, k2, k3, k4 = jax.random.split(key, 5)
        # PyTorch stores (4H, D); kernel wants (D, 4H) -> sample transposed.
        w_ih = jax.random.uniform(k1, (d_in, 4 * hidden_dim), jnp.float32, -k, k)
        w_hh = jax.random.uniform(k2, (hidden_dim, 4 * hidden_dim), jnp.float32, -k, k)
        b_ih = jax.random.uniform(k3, (4 * hidden_dim,), jnp.float32, -k, k)
        b_hh = jax.random.uniform(k4, (4 * hidden_dim,), jnp.float32, -k, k)
        layers.append((w_ih, w_hh, (b_ih + b_hh)[None, :]))
    key, k5, k6 = jax.random.split(key, 3)
    kf = 1.0 / jnp.sqrt(hidden_dim)
    fc_w = jax.random.uniform(k5, (hidden_dim, 1), jnp.float32, -kf, kf)
    fc_b = jax.random.uniform(k6, (1, 1), jnp.float32, -kf, kf)
    return {"lstm": layers, "fc_w": fc_w, "fc_b": fc_b}


# ---------------------------------------------------------------------------
# Pure-JAX f32 reference (same math, unpadded) for correctness check
# ---------------------------------------------------------------------------
def reference_forward(x, params):
    B, T, _ = x.shape
    h_seq = jnp.transpose(x, (1, 0, 2))
    for (w_ih, w_hh, b) in params["lstm"]:
        H = w_hh.shape[0]
        h = jnp.zeros((B, H), jnp.float32)
        c = jnp.zeros((B, H), jnp.float32)
        outs = []
        for t in range(T):
            g = h_seq[t] @ w_ih + h @ w_hh + b
            i = jax.nn.sigmoid(g[:, 0 * H:1 * H])
            f = jax.nn.sigmoid(g[:, 1 * H:2 * H])
            gg = jnp.tanh(g[:, 2 * H:3 * H])
            o = jax.nn.sigmoid(g[:, 3 * H:4 * H])
            c = f * c + i * gg
            h = o * jnp.tanh(c)
            outs.append(h)
        h_seq = jnp.stack(outs, axis=0)
    return (h_seq[-1] @ params["fc_w"] + params["fc_b"])[:, 0]


# ---------------------------------------------------------------------------
if __name__ == "__main__":
    B, T, INPUT_DIM, HIDDEN_DIM, NUM_LAYERS = 2, 8, 4, 32, 2

    key = jax.random.PRNGKey(0)
    key, kx = jax.random.split(key)
    x = jax.random.normal(kx, (B, T, INPUT_DIM), jnp.float32)

    params = init_params(key, INPUT_DIM, HIDDEN_DIM, NUM_LAYERS)

    out = jax.jit(lstm_soh_forward)(x, params)
    out = jax.block_until_ready(out)

    ref = reference_forward(x, params)
    assert out.shape == (B,), out.shape
    assert bool(jnp.all(jnp.isfinite(out)))
    assert bool(jnp.allclose(out, ref, rtol=2e-2, atol=2e-2)), (out, ref)

    print("KERNEL_OK")
</pallas_src>

<mosaic_0001>
module attributes {stable_mosaic.version = 11 : i64} {
  func.func @_fused_lstm_kernel(%arg0: i32, %arg1: memref<64x128xbf16, #tpu.memory_space<vmem>>, %arg2: memref<128x512xbf16, #tpu.memory_space<vmem>>, %arg3: memref<128x512xbf16, #tpu.memory_space<vmem>>, %arg4: memref<1x512xf32, #tpu.memory_space<vmem>>, %arg5: memref<256x512xbf16, #tpu.memory_space<vmem>>, %arg6: memref<1x512xf32, #tpu.memory_space<vmem>>, %arg7: memref<128x128xbf16, #tpu.memory_space<vmem>>, %arg8: memref<1x128xf32, #tpu.memory_space<vmem>>, %arg9: memref<8x128xf32, #tpu.memory_space<vmem>>, %arg10: memref<64x512xf32, #tpu.memory_space<vmem>>, %arg11: memref<2x8x128xbf16, #tpu.memory_space<vmem>>, %arg12: memref<2x8x128xf32, #tpu.memory_space<vmem>>) attributes {dimension_semantics = [#tpu.dimension_semantics<arbitrary>], iteration_bounds = array<i64: 1>, scalar_prefetch = 0 : i64, scratch_operands = 3 : i64, tpu.core_type = #tpu.core_type<tc>, window_params = [{transform_indices = @transform_0, window_bounds = array<i64: 64, 128>}, {pipeline_mode = #tpu.pipeline_mode<synchronous>, transform_indices = @transform_1, window_bounds = array<i64: 128, 512>}, {pipeline_mode = #tpu.pipeline_mode<synchronous>, transform_indices = @transform_2, window_bounds = array<i64: 128, 512>}, {pipeline_mode = #tpu.pipeline_mode<synchronous>, transform_indices = @transform_3, window_bounds = array<i64: 1, 512>}, {pipeline_mode = #tpu.pipeline_mode<synchronous>, transform_indices = @transform_4, window_bounds = array<i64: 256, 512>}, {pipeline_mode = #tpu.pipeline_mode<synchronous>, transform_indices = @transform_5, window_bounds = array<i64: 1, 512>}, {pipeline_mode = #tpu.pipeline_mode<synchronous>, transform_indices = @transform_6, window_bounds = array<i64: 128, 128>}, {pipeline_mode = #tpu.pipeline_mode<synchronous>, transform_indices = @transform_7, window_bounds = array<i64: 1, 128>}, {pipeline_mode = #tpu.pipeline_mode<synchronous>, transform_indices = @transform_8, window_bounds = array<i64: 8, 128>}]} {
    %c0_i32 = arith.constant 0 : i32
    %0 = arith.cmpi eq, %arg0, %c0_i32 : i32
    %1 = arith.extui %0 : i1 to i32
    %c0_i32_0 = arith.constant 0 : i32
    %2 = arith.cmpi ne, %1, %c0_i32_0 : i32
    scf.if %2 {
      %cst_148 = arith.constant 0.000000e+00 : bf16
      %540 = vector.broadcast %cst_148 : bf16 to vector<2x8x128xbf16>
      %c0_149 = arith.constant 0 : index
      %c0_150 = arith.constant 0 : index
      %c0_151 = arith.constant 0 : index
      %541 = vector.load %arg11[%c0_149, %c0_150, %c0_151] : memref<2x8x128xbf16, #tpu.memory_space<vmem>>, vector<2x8x128xbf16>
      tpu.vector_store %arg11[%c0_149, %c0_150, %c0_151], %540 {strides = array<i32>} : memref<2x8x128xbf16, #tpu.memory_space<vmem>>, vector<2x8x128xbf16>,
      %cst_152 = arith.constant 0.000000e+00 : f32
      %542 = vector.broadcast %cst_152 : f32 to vector<2x8x128xf32>
      %c0_153 = arith.constant 0 : index
      %c0_154 = arith.constant 0 : index
      %c0_155 = arith.constant 0 : index
      %543 = vector.load %arg12[%c0_153, %c0_154, %c0_155] : memref<2x8x128xf32, #tpu.memory_space<vmem>>, vector<2x8x128xf32>
      tpu.vector_store %arg12[%c0_153, %c0_154, %c0_155], %542 {strides = array<i32>} : memref<2x8x128xf32, #tpu.memory_space<vmem>>, vector<2x8x128xf32>,
    } else {
    }
    %c0 = arith.constant 0 : index
    %c0_1 = arith.constant 0 : index
    %3 = vector.load %arg1[%c0, %c0_1] : memref<64x128xbf16, #tpu.memory_space<vmem>>, vector<64x128xbf16>
    %c0_2 = arith.constant 0 : index
    %c0_3 = arith.constant 0 : index
    %4 = vector.load %arg2[%c0_2, %c0_3] : memref<128x512xbf16, #tpu.memory_space<vmem>>, vector<128x512xbf16>
    %cst = arith.constant dense<0.000000e+00> : vector<64x512xf32>
    %5 = tpu.matmul %3, %4, %cst {dimension_numbers = #tpu.dot_dimension_numbers<[1], [0], [0], [1], [0, 0, 1, 1], [], []>} : vector<64x128xbf16>, vector<128x512xbf16>, vector<64x512xf32> -> vector<64x512xf32>
    %c0_4 = arith.constant 0 : index
    %c0_5 = arith.constant 0 : index
    %6 = vector.load %arg4[%c0_4, %c0_5] : memref<1x512xf32, #tpu.memory_space<vmem>>, vector<1x512xf32>
    %7 = vector.broadcast %6 : vector<1x512xf32> to vector<64x512xf32>
    %8 = arith.addf %5, %7 : vector<64x512xf32>
    %c0_6 = arith.constant 0 : index
    %c0_7 = arith.constant 0 : index
    %9 = vector.load %arg10[%c0_6, %c0_7] : memref<64x512xf32, #tpu.memory_space<vmem>>, vector<64x512xf32>
    tpu.vector_store %arg10[%c0_6, %c0_7], %8 {strides = array<i32>} : memref<64x512xf32, #tpu.memory_space<vmem>>, vector<64x512xf32>,
    %c0_8 = arith.constant 0 : index
    %c0_9 = arith.constant 0 : index
    %10 = vector.load %arg6[%c0_8, %c0_9] : memref<1x512xf32, #tpu.memory_space<vmem>>, vector<1x512xf32>
    %11 = vector.shape_cast %10 : vector<1x512xf32> to vector<1x512xf32>
    %12 = vector.broadcast %11 : vector<1x512xf32> to vector<8x512xf32>
    %c0_10 = arith.constant 0 : index
    %c0_11 = arith.constant 0 : index
    %c0_12 = arith.constant 0 : index
    %13 = vector.load %arg11[%c0_10, %c0_11, %c0_12] : memref<2x8x128xbf16, #tpu.memory_space<vmem>>, vector<1x8x128xbf16>
    %14 = vector.shape_cast %13 : vector<1x8x128xbf16> to vector<8x128xbf16>
    %c1 = arith.constant 1 : index
    %c0_13 = arith.constant 0 : index
    %c0_14 = arith.constant 0 : index
    %15 = vector.load %arg11[%c1, %c0_13, %c0_14] : memref<2x8x128xbf16, #tpu.memory_space<vmem>>, vector<1x8x128xbf16>
    %16 = vector.shape_cast %15 : vector<1x8x128xbf16> to vector<8x128xbf16>
    %c0_15 = arith.constant 0 : index
    %c0_16 = arith.constant 0 : index
    %c0_17 = arith.constant 0 : index
    %17 = vector.load %arg12[%c0_15, %c0_16, %c0_17] : memref<2x8x128xf32, #tpu.memory_space<vmem>>, vector<1x8x128xf32>
    %18 = vector.shape_cast %17 : vector<1x8x128xf32> to vector<8x128xf32>
    %c1_18 = arith.constant 1 : index
    %c0_19 = arith.constant 0 : index
    %c0_20 = arith.constant 0 : index
    %19 = vector.load %arg12[%c1_18, %c0_19, %c0_20] : memref<2x8x128xf32, #tpu.memory_space<vmem>>, vector<1x8x128xf32>
    %20 = vector.shape_cast %19 : vector<1x8x128xf32> to vector<8x128xf32>
    %c0_i32_21 = arith.constant 0 : i32
    %c8_i32 = arith.constant 8 : i32
    %21 = arith.muli %c0_i32_21, %c8_i32 : i32
    %22 = tpu.assume_multiple %21, 8 : i32
    %23 = arith.index_cast %22 : i32 to index
    %c0_22 = arith.constant 0 : index
    %24 = vector.load %arg10[%23, %c0_22] : memref<64x512xf32, #tpu.memory_space<vmem>>, vector<8x512xf32>
    %c0_23 = arith.constant 0 : index
    %c0_24 = arith.constant 0 : index
    %25 = vector.load %arg3[%c0_23, %c0_24] : memref<128x512xbf16, #tpu.memory_space<vmem>>, vector<128x512xbf16>
    %cst_25 = arith.constant dense<0.000000e+00> : vector<8x512xf32>
    %26 = tpu.matmul %14, %25, %cst_25 {dimension_numbers = #tpu.dot_dimension_numbers<[1], [0], [0], [1], [0, 0, 1, 1], [], []>} : vector<8x128xbf16>, vector<128x512xbf16>, vector<8x512xf32> -> vector<8x512xf32>
    %27 = arith.addf %24, %26 : vector<8x512xf32>
    %28 = vector.extract_strided_slice %27 {offsets = [0, 0], sizes = [8, 128], strides = [1, 1]} : vector<8x512xf32> to vector<8x128xf32>
    %29 = arith.negf %28 : vector<8x128xf32>
    %30 = math.exp %29 : vector<8x128xf32>
    %cst_26 = arith.constant 1.000000e+00 : f32
    %31 = vector.broadcast %cst_26 : f32 to vector<8x128xf32>
    %32 = arith.addf %31, %30 : vector<8x128xf32>
    %33 = arith.divf %31, %32 : vector<8x128xf32>
    %34 = vector.extract_strided_slice %27 {offsets = [0, 128], sizes = [8, 128], strides = [1, 1]} : vector<8x512xf32> to vector<8x128xf32>
    %35 = arith.negf %34 : vector<8x128xf32>
    %36 = math.exp %35 : vector<8x128xf32>
    %cst_27 = arith.constant 1.000000e+00 : f32
    %37 = vector.broadcast %cst_27 : f32 to vector<8x128xf32>
    %38 = arith.addf %37, %36 : vector<8x128xf32>
    %39 = arith.divf %37, %38 : vector<8x128xf32>
    %40 = vector.extract_strided_slice %27 {offsets = [0, 256], sizes = [8, 128], strides = [1, 1]} : vector<8x512xf32> to vector<8x128xf32>
    %41 = math.tanh %40 : vector<8x128xf32>
    %42 = vector.extract_strided_slice %27 {offsets = [0, 384], sizes = [8, 128], strides = [1, 1]} : vector<8x512xf32> to vector<8x128xf32>
    %43 = arith.negf %42 : vector<8x128xf32>
    %44 = math.exp %43 : vector<8x128xf32>
    %cst_28 = arith.constant 1.000000e+00 : f32
    %45 = vector.broadcast %cst_28 : f32 to vector<8x128xf32>
    %46 = arith.addf %45, %44 : vector<8x128xf32>
    %47 = arith.divf %45, %46 : vector<8x128xf32>
    %48 = arith.mulf %39, %18 : vector<8x128xf32>
    %49 = arith.mulf %33, %41 : vector<8x128xf32>
    %50 = arith.addf %48, %49 : vector<8x128xf32>
    %51 = math.tanh %50 : vector<8x128xf32>
    %52 = arith.mulf %47, %51 : vector<8x128xf32>
    %53 = arith.truncf %52 : vector<8x128xf32> to vector<8x128xbf16>
    %54 = tpu.concatenate %53, %16 in 1 : vector<8x128xbf16>, vector<8x128xbf16> -> vector<8x256xbf16>
    %c0_29 = arith.constant 0 : index
    %c0_30 = arith.constant 0 : index
    %55 = vector.load %arg5[%c0_29, %c0_30] : memref<256x512xbf16, #tpu.memory_space<vmem>>, vector<256x512xbf16>
    %cst_31 = arith.constant dense<0.000000e+00> : vector<8x512xf32>
    %56 = tpu.matmul %54, %55, %cst_31 {dimension_numbers = #tpu.dot_dimension_numbers<[1], [0], [0], [1], [0, 0, 1, 1], [], []>} : vector<8x256xbf16>, vector<256x512xbf16>, vector<8x512xf32> -> vector<8x512xf32>
    %57 = arith.addf %56, %12 : vector<8x512xf32>
    %58 = vector.extract_strided_slice %57 {offsets = [0, 0], sizes = [8, 128], strides = [1, 1]} : vector<8x512xf32> to vector<8x128xf32>
    %59 = arith.negf %58 : vector<8x128xf32>
    %60 = math.exp %59 : vector<8x128xf32>
    %cst_32 = arith.constant 1.000000e+00 : f32
    %61 = vector.broadcast %cst_32 : f32 to vector<8x128xf32>
    %62 = arith.addf %61, %60 : vector<8x128xf32>
    %63 = arith.divf %61, %62 : vector<8x128xf32>
    %64 = vector.extract_strided_slice %57 {offsets = [0, 128], sizes = [8, 128], strides = [1, 1]} : vector<8x512xf32> to vector<8x128xf32>
    %65 = arith.negf %64 : vector<8x128xf32>
    %66 = math.exp %65 : vector<8x128xf32>
    %cst_33 = arith.constant 1.000000e+00 : f32
    %67 = vector.broadcast %cst_33 : f32 to vector<8x128xf32>
    %68 = arith.addf %67, %66 : vector<8x128xf32>
    %69 = arith.divf %67, %68 : vector<8x128xf32>
    %70 = vector.extract_strided_slice %57 {offsets = [0, 256], sizes = [8, 128], strides = [1, 1]} : vector<8x512xf32> to vector<8x128xf32>
    %71 = math.tanh %70 : vector<8x128xf32>
    %72 = vector.extract_strided_slice %57 {offsets = [0, 384], sizes = [8, 128], strides = [1, 1]} : vector<8x512xf32> to vector<8x128xf32>
    %73 = arith.negf %72 : vector<8x128xf32>
    %74 = math.exp %73 : vector<8x128xf32>
    %cst_34 = arith.constant 1.000000e+00 : f32
    %75 = vector.broadcast %cst_34 : f32 to vector<8x128xf32>
    %76 = arith.addf %75, %74 : vector<8x128xf32>
    %77 = arith.divf %75, %76 : vector<8x128xf32>
    %78 = arith.mulf %69, %20 : vector<8x128xf32>
    %79 = arith.mulf %63, %71 : vector<8x128xf32>
    %80 = arith.addf %78, %79 : vector<8x128xf32>
    %81 = math.tanh %80 : vector<8x128xf32>
    %82 = arith.mulf %77, %81 : vector<8x128xf32>
    %83 = arith.truncf %82 : vector<8x128xf32> to vector<8x128xbf16>
    %c1_i32 = arith.constant 1 : i32
    %c8_i32_35 = arith.constant 8 : i32
    %84 = arith.muli %c1_i32, %c8_i32_35 : i32
    %85 = tpu.assume_multiple %84, 8 : i32
    %86 = arith.index_cast %85 : i32 to index
    %c0_36 = arith.constant 0 : index
    %87 = vector.load %arg10[%86, %c0_36] : memref<64x512xf32, #tpu.memory_space<vmem>>, vector<8x512xf32>
    %c0_37 = arith.constant 0 : index
    %c0_38 = arith.constant 0 : index
    %88 = vector.load %arg3[%c0_37, %c0_38] : memref<128x512xbf16, #tpu.memory_space<vmem>>, vector<128x512xbf16>
    %cst_39 = arith.constant dense<0.000000e+00> : vector<8x512xf32>
    %89 = tpu.matmul %53, %88, %cst_39 {dimension_numbers = #tpu.dot_dimension_numbers<[1], [0], [0], [1], [0, 0, 1, 1], [], []>} : vector<8x128xbf16>, vector<128x512xbf16>, vector<8x512xf32> -> vector<8x512xf32>
    %90 = arith.addf %87, %89 : vector<8x512xf32>
    %91 = vector.extract_strided_slice %90 {offsets = [0, 0], sizes = [8, 128], strides = [1, 1]} : vector<8x512xf32> to vector<8x128xf32>
    %92 = arith.negf %91 : vector<8x128xf32>
    %93 = math.exp %92 : vector<8x128xf32>
    %cst_40 = arith.constant 1.000000e+00 : f32
    %94 = vector.broadcast %cst_40 : f32 to vector<8x128xf32>
    %95 = arith.addf %94, %93 : vector<8x128xf32>
    %96 = arith.divf %94, %95 : vector<8x128xf32>
    %97 = vector.extract_strided_slice %90 {offsets = [0, 128], sizes = [8, 128], strides = [1, 1]} : vector<8x512xf32> to vector<8x128xf32>
    %98 = arith.negf %97 : vector<8x128xf32>
    %99 = math.exp %98 : vector<8x128xf32>
    %cst_41 = arith.constant 1.000000e+00 : f32
    %100 = vector.broadcast %cst_41 : f32 to vector<8x128xf32>
    %101 = arith.addf %100, %99 : vector<8x128xf32>
    %102 = arith.divf %100, %101 : vector<8x128xf32>
    %103 = vector.extract_strided_slice %90 {offsets = [0, 256], sizes = [8, 128], strides = [1, 1]} : vector<8x512xf32> to vector<8x128xf32>
    %104 = math.tanh %103 : vector<8x128xf32>
    %105 = vector.extract_strided_slice %90 {offsets = [0, 384], sizes = [8, 128], strides = [1, 1]} : vector<8x512xf32> to vector<8x128xf32>
    %106 = arith.negf %105 : vector<8x128xf32>
    %107 = math.exp %106 : vector<8x128xf32>
    %cst_42 = arith.constant 1.000000e+00 : f32
    %108 = vector.broadcast %cst_42 : f32 to vector<8x128xf32>
    %109 = arith.addf %108, %107 : vector<8x128xf32>
    %110 = arith.divf %108, %109 : vector<8x128xf32>
    %111 = arith.mulf %102, %50 : vector<8x128xf32>
    %112 = arith.mulf %96, %104 : vector<8x128xf32>
    %113 = arith.addf %111, %112 : vector<8x128xf32>
    %114 = math.tanh %113 : vector<8x128xf32>
    %115 = arith.mulf %110, %114 : vector<8x128xf32>
    %116 = arith.truncf %115 : vector<8x128xf32> to vector<8x128xbf16>
    %117 = tpu.concatenate %116, %83 in 1 : vector<8x128xbf16>, vector<8x128xbf16> -> vector<8x256xbf16>
    %c0_43 = arith.constant 0 : index
    %c0_44 = arith.constant 0 : index
    %118 = vector.load %arg5[%c0_43, %c0_44] : memref<256x512xbf16, #tpu.memory_space<vmem>>, vector<256x512xbf16>
    %cst_45 = arith.constant dense<0.000000e+00> : vector<8x512xf32>
    %119 = tpu.matmul %117, %118, %cst_45 {dimension_numbers = #tpu.dot_dimension_numbers<[1], [0], [0], [1], [0, 0, 1, 1], [], []>} : vector<8x256xbf16>, vector<256x512xbf16>, vector<8x512xf32> -> vector<8x512xf32>
    %120 = arith.addf %119, %12 : vector<8x512xf32>
    %121 = vector.extract_strided_slice %120 {offsets = [0, 0], sizes = [8, 128], strides = [1, 1]} : vector<8x512xf32> to vector<8x128xf32>
    %122 = arith.negf %121 : vector<8x128xf32>
    %123 = math.exp %122 : vector<8x128xf32>
    %cst_46 = arith.constant 1.000000e+00 : f32
    %124 = vector.broadcast %cst_46 : f32 to vector<8x128xf32>
    %125 = arith.addf %124, %123 : vector<8x128xf32>
    %126 = arith.divf %124, %125 : vector<8x128xf32>
    %127 = vector.extract_strided_slice %120 {offsets = [0, 128], sizes = [8, 128], strides = [1, 1]} : vector<8x512xf32> to vector<8x128xf32>
    %128 = arith.negf %127 : vector<8x128xf32>
    %129 = math.exp %128 : vector<8x128xf32>
    %cst_47 = arith.constant 1.000000e+00 : f32
    %130 = vector.broadcast %cst_47 : f32 to vector<8x128xf32>
    %131 = arith.addf %130, %129 : vector<8x128xf32>
    %132 = arith.divf %130, %131 : vector<8x128xf32>
    %133 = vector.extract_strided_slice %120 {offsets = [0, 256], sizes = [8, 128], strides = [1, 1]} : vector<8x512xf32> to vector<8x128xf32>
    %134 = math.tanh %133 : vector<8x128xf32>
    %135 = vector.extract_strided_slice %120 {offsets = [0, 384], sizes = [8, 128], strides = [1, 1]} : vector<8x512xf32> to vector<8x128xf32>
    %136 = arith.negf %135 : vector<8x128xf32>
    %137 = math.exp %136 : vector<8x128xf32>
    %cst_48 = arith.constant 1.000000e+00 : f32
    %138 = vector.broadcast %cst_48 : f32 to vector<8x128xf32>
    %139 = arith.addf %138, %137 : vector<8x128xf32>
    %140 = arith.divf %138, %139 : vector<8x128xf32>
    %141 = arith.mulf %132, %80 : vector<8x128xf32>
    %142 = arith.mulf %126, %134 : vector<8x128xf32>
    %143 = arith.addf %141, %142 : vector<8x128xf32>
    %144 = math.tanh %143 : vector<8x128xf32>
    %145 = arith.mulf %140, %144 : vector<8x128xf32>
    %146 = arith.truncf %145 : vector<8x128xf32> to vector<8x128xbf16>
    %c2_i32 = arith.constant 2 : i32
    %c8_i32_49 = arith.constant 8 : i32
    %147 = arith.muli %c2_i32, %c8_i32_49 : i32
    %148 = tpu.assume_multiple %147, 8 : i32
    %149 = arith.index_cast %148 : i32 to index
    %c0_50 = arith.constant 0 : index
    %150 = vector.load %arg10[%149, %c0_50] : memref<64x512xf32, #tpu.memory_space<vmem>>, vector<8x512xf32>
    %c0_51 = arith.constant 0 : index
    %c0_52 = arith.constant 0 : index
    %151 = vector.load %arg3[%c0_51, %c0_52] : memref<128x512xbf16, #tpu.memory_space<vmem>>, vector<128x512xbf16>
    %cst_53 = arith.constant dense<0.000000e+00> : vector<8x512xf32>
    %152 = tpu.matmul %116, %151, %cst_53 {dimension_numbers = #tpu.dot_dimension_numbers<[1], [0], [0], [1], [0, 0, 1, 1], [], []>} : vector<8x128xbf16>, vector<128x512xbf16>, vector<8x512xf32> -> vector<8x512xf32>
    %153 = arith.addf %150, %152 : vector<8x512xf32>
    %154 = vector.extract_strided_slice %153 {offsets = [0, 0], sizes = [8, 128], strides = [1, 1]} : vector<8x512xf32> to vector<8x128xf32>
    %155 = arith.negf %154 : vector<8x128xf32>
    %156 = math.exp %155 : vector<8x128xf32>
    %cst_54 = arith.constant 1.000000e+00 : f32
    %157 = vector.broadcast %cst_54 : f32 to vector<8x128xf32>
    %158 = arith.addf %157, %156 : vector<8x128xf32>
    %159 = arith.divf %157, %158 : vector<8x128xf32>
    %160 = vector.extract_strided_slice %153 {offsets = [0, 128], sizes = [8, 128], strides = [1, 1]} : vector<8x512xf32> to vector<8x128xf32>
    %161 = arith.negf %160 : vector<8x128xf32>
    %162 = math.exp %161 : vector<8x128xf32>
    %cst_55 = arith.constant 1.000000e+00 : f32
    %163 = vector.broadcast %cst_55 : f32 to vector<8x128xf32>
    %164 = arith.addf %163, %162 : vector<8x128xf32>
    %165 = arith.divf %163, %164 : vector<8x128xf32>
    %166 = vector.extract_strided_slice %153 {offsets = [0, 256], sizes = [8, 128], strides = [1, 1]} : vector<8x512xf32> to vector<8x128xf32>
    %167 = math.tanh %166 : vector<8x128xf32>
    %168 = vector.extract_strided_slice %153 {offsets = [0, 384], sizes = [8, 128], strides = [1, 1]} : vector<8x512xf32> to vector<8x128xf32>
    %169 = arith.negf %168 : vector<8x128xf32>
    %170 = math.exp %169 : vector<8x128xf32>
    %cst_56 = arith.constant 1.000000e+00 : f32
    %171 = vector.broadcast %cst_56 : f32 to vector<8x128xf32>
    %172 = arith.addf %171, %170 : vector<8x128xf32>
    %173 = arith.divf %171, %172 : vector<8x128xf32>
    %174 = arith.mulf %165, %113 : vector<8x128xf32>
    %175 = arith.mulf %159, %167 : vector<8x128xf32>
    %176 = arith.addf %174, %175 : vector<8x128xf32>
    %177 = math.tanh %176 : vector<8x128xf32>
    %178 = arith.mulf %173, %177 : vector<8x128xf32>
    %179 = arith.truncf %178 : vector<8x128xf32> to vector<8x128xbf16>
    %180 = tpu.concatenate %179, %146 in 1 : vector<8x128xbf16>, vector<8x128xbf16> -> vector<8x256xbf16>
    %c0_57 = arith.constant 0 : index
    %c0_58 = arith.constant 0 : index
    %181 = vector.load %arg5[%c0_57, %c0_58] : memref<256x512xbf16, #tpu.memory_space<vmem>>, vector<256x512xbf16>
    %cst_59 = arith.constant dense<0.000000e+00> : vector<8x512xf32>
    %182 = tpu.matmul %180, %181, %cst_59 {dimension_numbers = #tpu.dot_dimension_numbers<[1], [0], [0], [1], [0, 0, 1, 1], [], []>} : vector<8x256xbf16>, vector<256x512xbf16>, vector<8x512xf32> -> vector<8x512xf32>
    %183 = arith.addf %182, %12 : vector<8x512xf32>
    %184 = vector.extract_strided_slice %183 {offsets = [0, 0], sizes = [8, 128], strides = [1, 1]} : vector<8x512xf32> to vector<8x128xf32>
    %185 = arith.negf %184 : vector<8x128xf32>
    %186 = math.exp %185 : vector<8x128xf32>
    %cst_60 = arith.constant 1.000000e+00 : f32
    %187 = vector.broadcast %cst_60 : f32 to vector<8x128xf32>
    %188 = arith.addf %187, %186 : vector<8x128xf32>
    %189 = arith.divf %187, %188 : vector<8x128xf32>
    %190 = vector.extract_strided_slice %183 {offsets = [0, 128], sizes = [8, 128], strides = [1, 1]} : vector<8x512xf32> to vector<8x128xf32>
    %191 = arith.negf %190 : vector<8x128xf32>
    %192 = math.exp %191 : vector<8x128xf32>
    %cst_61 = arith.constant 1.000000e+00 : f32
    %193 = vector.broadcast %cst_61 : f32 to vector<8x128xf32>
    %194 = arith.addf %193, %192 : vector<8x128xf32>
    %195 = arith.divf %193, %194 : vector<8x128xf32>
    %196 = vector.extract_strided_slice %183 {offsets = [0, 256], sizes = [8, 128], strides = [1, 1]} : vector<8x512xf32> to vector<8x128xf32>
    %197 = math.tanh %196 : vector<8x128xf32>
    %198 = vector.extract_strided_slice %183 {offsets = [0, 384], sizes = [8, 128], strides = [1, 1]} : vector<8x512xf32> to vector<8x128xf32>
    %199 = arith.negf %198 : vector<8x128xf32>
    %200 = math.exp %199 : vector<8x128xf32>
    %cst_62 = arith.constant 1.000000e+00 : f32
    %201 = vector.broadcast %cst_62 : f32 to vector<8x128xf32>
    %202 = arith.addf %201, %200 : vector<8x128xf32>
    %203 = arith.divf %201, %202 : vector<8x128xf32>
    %204 = arith.mulf %195, %143 : vector<8x128xf32>
    %205 = arith.mulf %189, %197 : vector<8x128xf32>
    %206 = arith.addf %204, %205 : vector<8x128xf32>
    %207 = math.tanh %206 : vector<8x128xf32>
    %208 = arith.mulf %203, %207 : vector<8x128xf32>
    %209 = arith.truncf %208 : vector<8x128xf32> to vector<8x128xbf16>
    %c3_i32 = arith.constant 3 : i32
    %c8_i32_63 = arith.constant 8 : i32
    %210 = arith.muli %c3_i32, %c8_i32_63 : i32
    %211 = tpu.assume_multiple %210, 8 : i32
    %212 = arith.index_cast %211 : i32 to index
    %c0_64 = arith.constant 0 : index
    %213 = vector.load %arg10[%212, %c0_64] : memref<64x512xf32, #tpu.memory_space<vmem>>, vector<8x512xf32>
    %c0_65 = arith.constant 0 : index
    %c0_66 = arith.constant 0 : index
    %214 = vector.load %arg3[%c0_65, %c0_66] : memref<128x512xbf16, #tpu.memory_space<vmem>>, vector<128x512xbf16>
    %cst_67 = arith.constant dense<0.000000e+00> : vector<8x512xf32>
    %215 = tpu.matmul %179, %214, %cst_67 {dimension_numbers = #tpu.dot_dimension_numbers<[1], [0], [0], [1], [0, 0, 1, 1], [], []>} : vector<8x128xbf16>, vector<128x512xbf16>, vector<8x512xf32> -> vector<8x512xf32>
    %216 = arith.addf %213, %215 : vector<8x512xf32>
    %217 = vector.extract_strided_slice %216 {offsets = [0, 0], sizes = [8, 128], strides = [1, 1]} : vector<8x512xf32> to vector<8x128xf32>
    %218 = arith.negf %217 : vector<8x128xf32>
    %219 = math.exp %218 : vector<8x128xf32>
    %cst_68 = arith.constant 1.000000e+00 : f32
    %220 = vector.broadcast %cst_68 : f32 to vector<8x128xf32>
    %221 = arith.addf %220, %219 : vector<8x128xf32>
    %222 = arith.divf %220, %221 : vector<8x128xf32>
    %223 = vector.extract_strided_slice %216 {offsets = [0, 128], sizes = [8, 128], strides = [1, 1]} : vector<8x512xf32> to vector<8x128xf32>
    %224 = arith.negf %223 : vector<8x128xf32>
    %225 = math.exp %224 : vector<8x128xf32>
    %cst_69 = arith.constant 1.000000e+00 : f32
    %226 = vector.broadcast %cst_69 : f32 to vector<8x128xf32>
    %227 = arith.addf %226, %225 : vector<8x128xf32>
    %228 = arith.divf %226, %227 : vector<8x128xf32>
    %229 = vector.extract_strided_slice %216 {offsets = [0, 256], sizes = [8, 128], strides = [1, 1]} : vector<8x512xf32> to vector<8x128xf32>
    %230 = math.tanh %229 : vector<8x128xf32>
    %231 = vector.extract_strided_slice %216 {offsets = [0, 384], sizes = [8, 128], strides = [1, 1]} : vector<8x512xf32> to vector<8x128xf32>
    %232 = arith.negf %231 : vector<8x128xf32>
    %233 = math.exp %232 : vector<8x128xf32>
    %cst_70 = arith.constant 1.000000e+00 : f32
    %234 = vector.broadcast %cst_70 : f32 to vector<8x128xf32>
    %235 = arith.addf %234, %233 : vector<8x128xf32>
    %236 = arith.divf %234, %235 : vector<8x128xf32>
    %237 = arith.mulf %228, %176 : vector<8x128xf32>
    %238 = arith.mulf %222, %230 : vector<8x128xf32>
    %239 = arith.addf %237, %238 : vector<8x128xf32>
    %240 = math.tanh %239 : vector<8x128xf32>
    %241 = arith.mulf %236, %240 : vector<8x128xf32>
    %242 = arith.truncf %241 : vector<8x128xf32> to vector<8x128xbf16>
    %243 = tpu.concatenate %242, %209 in 1 : vector<8x128xbf16>, vector<8x128xbf16> -> vector<8x256xbf16>
    %c0_71 = arith.constant 0 : index
    %c0_72 = arith.constant 0 : index
    %244 = vector.load %arg5[%c0_71, %c0_72] : memref<256x512xbf16, #tpu.memory_space<vmem>>, vector<256x512xbf16>
    %cst_73 = arith.constant dense<0.000000e+00> : vector<8x512xf32>
    %245 = tpu.matmul %243, %244, %cst_73 {dimension_numbers = #tpu.dot_dimension_numbers<[1], [0], [0], [1], [0, 0, 1, 1], [], []>} : vector<8x256xbf16>, vector<256x512xbf16>, vector<8x512xf32> -> vector<8x512xf32>
    %246 = arith.addf %245, %12 : vector<8x512xf32>
    %247 = vector.extract_strided_slice %246 {offsets = [0, 0], sizes = [8, 128], strides = [1, 1]} : vector<8x512xf32> to vector<8x128xf32>
    %248 = arith.negf %247 : vector<8x128xf32>
    %249 = math.exp %248 : vector<8x128xf32>
    %cst_74 = arith.constant 1.000000e+00 : f32
    %250 = vector.broadcast %cst_74 : f32 to vector<8x128xf32>
    %251 = arith.addf %250, %249 : vector<8x128xf32>
    %252 = arith.divf %250, %251 : vector<8x128xf32>
    %253 = vector.extract_strided_slice %246 {offsets = [0, 128], sizes = [8, 128], strides = [1, 1]} : vector<8x512xf32> to vector<8x128xf32>
    %254 = arith.negf %253 : vector<8x128xf32>
    %255 = math.exp %254 : vector<8x128xf32>
    %cst_75 = arith.constant 1.000000e+00 : f32
    %256 = vector.broadcast %cst_75 : f32 to vector<8x128xf32>
    %257 = arith.addf %256, %255 : vector<8x128xf32>
    %258 = arith.divf %256, %257 : vector<8x128xf32>
    %259 = vector.extract_strided_slice %246 {offsets = [0, 256], sizes = [8, 128], strides = [1, 1]} : vector<8x512xf32> to vector<8x128xf32>
    %260 = math.tanh %259 : vector<8x128xf32>
    %261 = vector.extract_strided_slice %246 {offsets = [0, 384], sizes = [8, 128], strides = [1, 1]} : vector<8x512xf32> to vector<8x128xf32>
    %262 = arith.negf %261 : vector<8x128xf32>
    %263 = math.exp %262 : vector<8x128xf32>
    %cst_76 = arith.constant 1.000000e+00 : f32
    %264 = vector.broadcast %cst_76 : f32 to vector<8x128xf32>
    %265 = arith.addf %264, %263 : vector<8x128xf32>
    %266 = arith.divf %264, %265 : vector<8x128xf32>
    %267 = arith.mulf %258, %206 : vector<8x128xf32>
    %268 = arith.mulf %252, %260 : vector<8x128xf32>
    %269 = arith.addf %267, %268 : vector<8x128xf32>
    %270 = math.tanh %269 : vector<8x128xf32>
    %271 = arith.mulf %266, %270 : vector<8x128xf32>
    %272 = arith.truncf %271 : vector<8x128xf32> to vector<8x128xbf16>
    %c4_i32 = arith.constant 4 : i32
    %c8_i32_77 = arith.constant 8 : i32
    %273 = arith.muli %c4_i32, %c8_i32_77 : i32
    %274 = tpu.assume_multiple %273, 8 : i32
    %275 = arith.index_cast %274 : i32 to index
    %c0_78 = arith.constant 0 : index
    %276 = vector.load %arg10[%275, %c0_78] : memref<64x512xf32, #tpu.memory_space<vmem>>, vector<8x512xf32>
    %c0_79 = arith.constant 0 : index
    %c0_80 = arith.constant 0 : index
    %277 = vector.load %arg3[%c0_79, %c0_80] : memref<128x512xbf16, #tpu.memory_space<vmem>>, vector<128x512xbf16>
    %cst_81 = arith.constant dense<0.000000e+00> : vector<8x512xf32>
    %278 = tpu.matmul %242, %277, %cst_81 {dimension_numbers = #tpu.dot_dimension_numbers<[1], [0], [0], [1], [0, 0, 1, 1], [], []>} : vector<8x128xbf16>, vector<128x512xbf16>, vector<8x512xf32> -> vector<8x512xf32>
    %279 = arith.addf %276, %278 : vector<8x512xf32>
    %280 = vector.extract_strided_slice %279 {offsets = [0, 0], sizes = [8, 128], strides = [1, 1]} : vector<8x512xf32> to vector<8x128xf32>
    %281 = arith.negf %280 : vector<8x128xf32>
    %282 = math.exp %281 : vector<8x128xf32>
    %cst_82 = arith.constant 1.000000e+00 : f32
    %283 = vector.broadcast %cst_82 : f32 to vector<8x128xf32>
    %284 = arith.addf %283, %282 : vector<8x128xf32>
    %285 = arith.divf %283, %284 : vector<8x128xf32>
    %286 = vector.extract_strided_slice %279 {offsets = [0, 128], sizes = [8, 128], strides = [1, 1]} : vector<8x512xf32> to vector<8x128xf32>
    %287 = arith.negf %286 : vector<8x128xf32>
    %288 = math.exp %287 : vector<8x128xf32>
    %cst_83 = arith.constant 1.000000e+00 : f32
    %289 = vector.broadcast %cst_83 : f32 to vector<8x128xf32>
    %290 = arith.addf %289, %288 : vector<8x128xf32>
    %291 = arith.divf %289, %290 : vector<8x128xf32>
    %292 = vector.extract_strided_slice %279 {offsets = [0, 256], sizes = [8, 128], strides = [1, 1]} : vector<8x512xf32> to vector<8x128xf32>
    %293 = math.tanh %292 : vector<8x128xf32>
    %294 = vector.extract_strided_slice %279 {offsets = [0, 384], sizes = [8, 128], strides = [1, 1]} : vector<8x512xf32> to vector<8x128xf32>
    %295 = arith.negf %294 : vector<8x128xf32>
    %296 = math.exp %295 : vector<8x128xf32>
    %cst_84 = arith.constant 1.000000e+00 : f32
    %297 = vector.broadcast %cst_84 : f32 to vector<8x128xf32>
    %298 = arith.addf %297, %296 : vector<8x128xf32>
    %299 = arith.divf %297, %298 : vector<8x128xf32>
    %300 = arith.mulf %291, %239 : vector<8x128xf32>
    %301 = arith.mulf %285, %293 : vector<8x128xf32>
    %302 = arith.addf %300, %301 : vector<8x128xf32>
    %303 = math.tanh %302 : vector<8x128xf32>
    %304 = arith.mulf %299, %303 : vector<8x128xf32>
    %305 = arith.truncf %304 : vector<8x128xf32> to vector<8x128xbf16>
    %306 = tpu.concatenate %305, %272 in 1 : vector<8x128xbf16>, vector<8x128xbf16> -> vector<8x256xbf16>
    %c0_85 = arith.constant 0 : index
    %c0_86 = arith.constant 0 : index
    %307 = vector.load %arg5[%c0_85, %c0_86] : memref<256x512xbf16, #tpu.memory_space<vmem>>, vector<256x512xbf16>
    %cst_87 = arith.constant dense<0.000000e+00> : vector<8x512xf32>
    %308 = tpu.matmul %306, %307, %cst_87 {dimension_numbers = #tpu.dot_dimension_numbers<[1], [0], [0], [1], [0, 0, 1, 1], [], []>} : vector<8x256xbf16>, vector<256x512xbf16>, vector<8x512xf32> -> vector<8x512xf32>
    %309 = arith.addf %308, %12 : vector<8x512xf32>
    %310 = vector.extract_strided_slice %309 {offsets = [0, 0], sizes = [8, 128], strides = [1, 1]} : vector<8x512xf32> to vector<8x128xf32>
    %311 = arith.negf %310 : vector<8x128xf32>
    %312 = math.exp %311 : vector<8x128xf32>
    %cst_88 = arith.constant 1.000000e+00 : f32
    %313 = vector.broadcast %cst_88 : f32 to vector<8x128xf32>
    %314 = arith.addf %313, %312 : vector<8x128xf32>
    %315 = arith.divf %313, %314 : vector<8x128xf32>
    %316 = vector.extract_strided_slice %309 {offsets = [0, 128], sizes = [8, 128], strides = [1, 1]} : vector<8x512xf32> to vector<8x128xf32>
    %317 = arith.negf %316 : vector<8x128xf32>
    %318 = math.exp %317 : vector<8x128xf32>
    %cst_89 = arith.constant 1.000000e+00 : f32
    %319 = vector.broadcast %cst_89 : f32 to vector<8x128xf32>
    %320 = arith.addf %319, %318 : vector<8x128xf32>
    %321 = arith.divf %319, %320 : vector<8x128xf32>
    %322 = vector.extract_strided_slice %309 {offsets = [0, 256], sizes = [8, 128], strides = [1, 1]} : vector<8x512xf32> to vector<8x128xf32>
    %323 = math.tanh %322 : vector<8x128xf32>
    %324 = vector.extract_strided_slice %309 {offsets = [0, 384], sizes = [8, 128], strides = [1, 1]} : vector<8x512xf32> to vector<8x128xf32>
    %325 = arith.negf %324 : vector<8x128xf32>
    %326 = math.exp %325 : vector<8x128xf32>
    %cst_90 = arith.constant 1.000000e+00 : f32
    %327 = vector.broadcast %cst_90 : f32 to vector<8x128xf32>
    %328 = arith.addf %327, %326 : vector<8x128xf32>
    %329 = arith.divf %327, %328 : vector<8x128xf32>
    %330 = arith.mulf %321, %269 : vector<8x128xf32>
    %331 = arith.mulf %315, %323 : vector<8x128xf32>
    %332 = arith.addf %330, %331 : vector<8x128xf32>
    %333 = math.tanh %332 : vector<8x128xf32>
    %334 = arith.mulf %329, %333 : vector<8x128xf32>
    %335 = arith.truncf %334 : vector<8x128xf32> to vector<8x128xbf16>
    %c5_i32 = arith.constant 5 : i32
    %c8_i32_91 = arith.constant 8 : i32
    %336 = arith.muli %c5_i32, %c8_i32_91 : i32
    %337 = tpu.assume_multiple %336, 8 : i32
    %338 = arith.index_cast %337 : i32 to index
    %c0_92 = arith.constant 0 : index
    %339 = vector.load %arg10[%338, %c0_92] : memref<64x512xf32, #tpu.memory_space<vmem>>, vector<8x512xf32>
    %c0_93 = arith.constant 0 : index
    %c0_94 = arith.constant 0 : index
    %340 = vector.load %arg3[%c0_93, %c0_94] : memref<128x512xbf16, #tpu.memory_space<vmem>>, vector<128x512xbf16>
    %cst_95 = arith.constant dense<0.000000e+00> : vector<8x512xf32>
    %341 = tpu.matmul %305, %340, %cst_95 {dimension_numbers = #tpu.dot_dimension_numbers<[1], [0], [0], [1], [0, 0, 1, 1], [], []>} : vector<8x128xbf16>, vector<128x512xbf16>, vector<8x512xf32> -> vector<8x512xf32>
    %342 = arith.addf %339, %341 : vector<8x512xf32>
    %343 = vector.extract_strided_slice %342 {offsets = [0, 0], sizes = [8, 128], strides = [1, 1]} : vector<8x512xf32> to vector<8x128xf32>
    %344 = arith.negf %343 : vector<8x128xf32>
    %345 = math.exp %344 : vector<8x128xf32>
    %cst_96 = arith.constant 1.000000e+00 : f32
    %346 = vector.broadcast %cst_96 : f32 to vector<8x128xf32>
    %347 = arith.addf %346, %345 : vector<8x128xf32>
    %348 = arith.divf %346, %347 : vector<8x128xf32>
    %349 = vector.extract_strided_slice %342 {offsets = [0, 128], sizes = [8, 128], strides = [1, 1]} : vector<8x512xf32> to vector<8x128xf32>
    %350 = arith.negf %349 : vector<8x128xf32>
    %351 = math.exp %350 : vector<8x128xf32>
    %cst_97 = arith.constant 1.000000e+00 : f32
    %352 = vector.broadcast %cst_97 : f32 to vector<8x128xf32>
    %353 = arith.addf %352, %351 : vector<8x128xf32>
    %354 = arith.divf %352, %353 : vector<8x128xf32>
    %355 = vector.extract_strided_slice %342 {offsets = [0, 256], sizes = [8, 128], strides = [1, 1]} : vector<8x512xf32> to vector<8x128xf32>
    %356 = math.tanh %355 : vector<8x128xf32>
    %357 = vector.extract_strided_slice %342 {offsets = [0, 384], sizes = [8, 128], strides = [1, 1]} : vector<8x512xf32> to vector<8x128xf32>
    %358 = arith.negf %357 : vector<8x128xf32>
    %359 = math.exp %358 : vector<8x128xf32>
    %cst_98 = arith.constant 1.000000e+00 : f32
    %360 = vector.broadcast %cst_98 : f32 to vector<8x128xf32>
    %361 = arith.addf %360, %359 : vector<8x128xf32>
    %362 = arith.divf %360, %361 : vector<8x128xf32>
    %363 = arith.mulf %354, %302 : vector<8x128xf32>
    %364 = arith.mulf %348, %356 : vector<8x128xf32>
    %365 = arith.addf %363, %364 : vector<8x128xf32>
    %366 = math.tanh %365 : vector<8x128xf32>
    %367 = arith.mulf %362, %366 : vector<8x128xf32>
    %368 = arith.truncf %367 : vector<8x128xf32> to vector<8x128xbf16>
    %369 = tpu.concatenate %368, %335 in 1 : vector<8x128xbf16>, vector<8x128xbf16> -> vector<8x256xbf16>
    %c0_99 = arith.constant 0 : index
    %c0_100 = arith.constant 0 : index
    %370 = vector.load %arg5[%c0_99, %c0_100] : memref<256x512xbf16, #tpu.memory_space<vmem>>, vector<256x512xbf16>
    %cst_101 = arith.constant dense<0.000000e+00> : vector<8x512xf32>
    %371 = tpu.matmul %369, %370, %cst_101 {dimension_numbers = #tpu.dot_dimension_numbers<[1], [0], [0], [1], [0, 0, 1, 1], [], []>} : vector<8x256xbf16>, vector<256x512xbf16>, vector<8x512xf32> -> vector<8x512xf32>
    %372 = arith.addf %371, %12 : vector<8x512xf32>
    %373 = vector.extract_strided_slice %372 {offsets = [0, 0], sizes = [8, 128], strides = [1, 1]} : vector<8x512xf32> to vector<8x128xf32>
    %374 = arith.negf %373 : vector<8x128xf32>
    %375 = math.exp %374 : vector<8x128xf32>
    %cst_102 = arith.constant 1.000000e+00 : f32
    %376 = vector.broadcast %cst_102 : f32 to vector<8x128xf32>
    %377 = arith.addf %376, %375 : vector<8x128xf32>
    %378 = arith.divf %376, %377 : vector<8x128xf32>
    %379 = vector.extract_strided_slice %372 {offsets = [0, 128], sizes = [8, 128], strides = [1, 1]} : vector<8x512xf32> to vector<8x128xf32>
    %380 = arith.negf %379 : vector<8x128xf32>
    %381 = math.exp %380 : vector<8x128xf32>
    %cst_103 = arith.constant 1.000000e+00 : f32
    %382 = vector.broadcast %cst_103 : f32 to vector<8x128xf32>
    %383 = arith.addf %382, %381 : vector<8x128xf32>
    %384 = arith.divf %382, %383 : vector<8x128xf32>
    %385 = vector.extract_strided_slice %372 {offsets = [0, 256], sizes = [8, 128], strides = [1, 1]} : vector<8x512xf32> to vector<8x128xf32>
    %386 = math.tanh %385 : vector<8x128xf32>
    %387 = vector.extract_strided_slice %372 {offsets = [0, 384], sizes = [8, 128], strides = [1, 1]} : vector<8x512xf32> to vector<8x128xf32>
    %388 = arith.negf %387 : vector<8x128xf32>
    %389 = math.exp %388 : vector<8x128xf32>
    %cst_104 = arith.constant 1.000000e+00 : f32
    %390 = vector.broadcast %cst_104 : f32 to vector<8x128xf32>
    %391 = arith.addf %390, %389 : vector<8x128xf32>
    %392 = arith.divf %390, %391 : vector<8x128xf32>
    %393 = arith.mulf %384, %332 : vector<8x128xf32>
    %394 = arith.mulf %378, %386 : vector<8x128xf32>
    %395 = arith.addf %393, %394 : vector<8x128xf32>
    %396 = math.tanh %395 : vector<8x128xf32>
    %397 = arith.mulf %392, %396 : vector<8x128xf32>
    %398 = arith.truncf %397 : vector<8x128xf32> to vector<8x128xbf16>
    %c6_i32 = arith.constant 6 : i32
    %c8_i32_105 = arith.constant 8 : i32
    %399 = arith.muli %c6_i32, %c8_i32_105 : i32
    %400 = tpu.assume_multiple %399, 8 : i32
    %401 = arith.index_cast %400 : i32 to index
    %c0_106 = arith.constant 0 : index
    %402 = vector.load %arg10[%401, %c0_106] : memref<64x512xf32, #tpu.memory_space<vmem>>, vector<8x512xf32>
    %c0_107 = arith.constant 0 : index
    %c0_108 = arith.constant 0 : index
    %403 = vector.load %arg3[%c0_107, %c0_108] : memref<128x512xbf16, #tpu.memory_space<vmem>>, vector<128x512xbf16>
    %cst_109 = arith.constant dense<0.000000e+00> : vector<8x512xf32>
    %404 = tpu.matmul %368, %403, %cst_109 {dimension_numbers = #tpu.dot_dimension_numbers<[1], [0], [0], [1], [0, 0, 1, 1], [], []>} : vector<8x128xbf16>, vector<128x512xbf16>, vector<8x512xf32> -> vector<8x512xf32>
    %405 = arith.addf %402, %404 : vector<8x512xf32>
    %406 = vector.extract_strided_slice %405 {offsets = [0, 0], sizes = [8, 128], strides = [1, 1]} : vector<8x512xf32> to vector<8x128xf32>
    %407 = arith.negf %406 : vector<8x128xf32>
    %408 = math.exp %407 : vector<8x128xf32>
    %cst_110 = arith.constant 1.000000e+00 : f32
    %409 = vector.broadcast %cst_110 : f32 to vector<8x128xf32>
    %410 = arith.addf %409, %408 : vector<8x128xf32>
    %411 = arith.divf %409, %410 : vector<8x128xf32>
    %412 = vector.extract_strided_slice %405 {offsets = [0, 128], sizes = [8, 128], strides = [1, 1]} : vector<8x512xf32> to vector<8x128xf32>
    %413 = arith.negf %412 : vector<8x128xf32>
    %414 = math.exp %413 : vector<8x128xf32>
    %cst_111 = arith.constant 1.000000e+00 : f32
    %415 = vector.broadcast %cst_111 : f32 to vector<8x128xf32>
    %416 = arith.addf %415, %414 : vector<8x128xf32>
    %417 = arith.divf %415, %416 : vector<8x128xf32>
    %418 = vector.extract_strided_slice %405 {offsets = [0, 256], sizes = [8, 128], strides = [1, 1]} : vector<8x512xf32> to vector<8x128xf32>
    %419 = math.tanh %418 : vector<8x128xf32>
    %420 = vector.extract_strided_slice %405 {offsets = [0, 384], sizes = [8, 128], strides = [1, 1]} : vector<8x512xf32> to vector<8x128xf32>
    %421 = arith.negf %420 : vector<8x128xf32>
    %422 = math.exp %421 : vector<8x128xf32>
    %cst_112 = arith.constant 1.000000e+00 : f32
    %423 = vector.broadcast %cst_112 : f32 to vector<8x128xf32>
    %424 = arith.addf %423, %422 : vector<8x128xf32>
    %425 = arith.divf %423, %424 : vector<8x128xf32>
    %426 = arith.mulf %417, %365 : vector<8x128xf32>
    %427 = arith.mulf %411, %419 : vector<8x128xf32>
    %428 = arith.addf %426, %427 : vector<8x128xf32>
    %429 = math.tanh %428 : vector<8x128xf32>
    %430 = arith.mulf %425, %429 : vector<8x128xf32>
    %431 = arith.truncf %430 : vector<8x128xf32> to vector<8x128xbf16>
    %432 = tpu.concatenate %431, %398 in 1 : vector<8x128xbf16>, vector<8x128xbf16> -> vector<8x256xbf16>
    %c0_113 = arith.constant 0 : index
    %c0_114 = arith.constant 0 : index
    %433 = vector.load %arg5[%c0_113, %c0_114] : memref<256x512xbf16, #tpu.memory_space<vmem>>, vector<256x512xbf16>
    %cst_115 = arith.constant dense<0.000000e+00> : vector<8x512xf32>
    %434 = tpu.matmul %432, %433, %cst_115 {dimension_numbers = #tpu.dot_dimension_numbers<[1], [0], [0], [1], [0, 0, 1, 1], [], []>} : vector<8x256xbf16>, vector<256x512xbf16>, vector<8x512xf32> -> vector<8x512xf32>
    %435 = arith.addf %434, %12 : vector<8x512xf32>
    %436 = vector.extract_strided_slice %435 {offsets = [0, 0], sizes = [8, 128], strides = [1, 1]} : vector<8x512xf32> to vector<8x128xf32>
    %437 = arith.negf %436 : vector<8x128xf32>
    %438 = math.exp %437 : vector<8x128xf32>
    %cst_116 = arith.constant 1.000000e+00 : f32
    %439 = vector.broadcast %cst_116 : f32 to vector<8x128xf32>
    %440 = arith.addf %439, %438 : vector<8x128xf32>
    %441 = arith.divf %439, %440 : vector<8x128xf32>
    %442 = vector.extract_strided_slice %435 {offsets = [0, 128], sizes = [8, 128], strides = [1, 1]} : vector<8x512xf32> to vector<8x128xf32>
    %443 = arith.negf %442 : vector<8x128xf32>
    %444 = math.exp %443 : vector<8x128xf32>
    %cst_117 = arith.constant 1.000000e+00 : f32
    %445 = vector.broadcast %cst_117 : f32 to vector<8x128xf32>
    %446 = arith.addf %445, %444 : vector<8x128xf32>
    %447 = arith.divf %445, %446 : vector<8x128xf32>
    %448 = vector.extract_strided_slice %435 {offsets = [0, 256], sizes = [8, 128], strides = [1, 1]} : vector<8x512xf32> to vector<8x128xf32>
    %449 = math.tanh %448 : vector<8x128xf32>
    %450 = vector.extract_strided_slice %435 {offsets = [0, 384], sizes = [8, 128], strides = [1, 1]} : vector<8x512xf32> to vector<8x128xf32>
    %451 = arith.negf %450 : vector<8x128xf32>
    %452 = math.exp %451 : vector<8x128xf32>
    %cst_118 = arith.constant 1.000000e+00 : f32
    %453 = vector.broadcast %cst_118 : f32 to vector<8x128xf32>
    %454 = arith.addf %453, %452 : vector<8x128xf32>
    %455 = arith.divf %453, %454 : vector<8x128xf32>
    %456 = arith.mulf %447, %395 : vector<8x128xf32>
    %457 = arith.mulf %441, %449 : vector<8x128xf32>
    %458 = arith.addf %456, %457 : vector<8x128xf32>
    %459 = math.tanh %458 : vector<8x128xf32>
    %460 = arith.mulf %455, %459 : vector<8x128xf32>
    %461 = arith.truncf %460 : vector<8x128xf32> to vector<8x128xbf16>
    %c7_i32 = arith.constant 7 : i32
    %c8_i32_119 = arith.constant 8 : i32
    %462 = arith.muli %c7_i32, %c8_i32_119 : i32
    %463 = tpu.assume_multiple %462, 8 : i32
    %464 = arith.index_cast %463 : i32 to index
    %c0_120 = arith.constant 0 : index
    %465 = vector.load %arg10[%464, %c0_120] : memref<64x512xf32, #tpu.memory_space<vmem>>, vector<8x512xf32>
    %c0_121 = arith.constant 0 : index
    %c0_122 = arith.constant 0 : index
    %466 = vector.load %arg3[%c0_121, %c0_122] : memref<128x512xbf16, #tpu.memory_space<vmem>>, vector<128x512xbf16>
    %cst_123 = arith.constant dense<0.000000e+00> : vector<8x512xf32>
    %467 = tpu.matmul %431, %466, %cst_123 {dimension_numbers = #tpu.dot_dimension_numbers<[1], [0], [0], [1], [0, 0, 1, 1], [], []>} : vector<8x128xbf16>, vector<128x512xbf16>, vector<8x512xf32> -> vector<8x512xf32>
    %468 = arith.addf %465, %467 : vector<8x512xf32>
    %469 = vector.extract_strided_slice %468 {offsets = [0, 0], sizes = [8, 128], strides = [1, 1]} : vector<8x512xf32> to vector<8x128xf32>
    %470 = arith.negf %469 : vector<8x128xf32>
    %471 = math.exp %470 : vector<8x128xf32>
    %cst_124 = arith.constant 1.000000e+00 : f32
    %472 = vector.broadcast %cst_124 : f32 to vector<8x128xf32>
    %473 = arith.addf %472, %471 : vector<8x128xf32>
    %474 = arith.divf %472, %473 : vector<8x128xf32>
    %475 = vector.extract_strided_slice %468 {offsets = [0, 128], sizes = [8, 128], strides = [1, 1]} : vector<8x512xf32> to vector<8x128xf32>
    %476 = arith.negf %475 : vector<8x128xf32>
    %477 = math.exp %476 : vector<8x128xf32>
    %cst_125 = arith.constant 1.000000e+00 : f32
    %478 = vector.broadcast %cst_125 : f32 to vector<8x128xf32>
    %479 = arith.addf %478, %477 : vector<8x128xf32>
    %480 = arith.divf %478, %479 : vector<8x128xf32>
    %481 = vector.extract_strided_slice %468 {offsets = [0, 256], sizes = [8, 128], strides = [1, 1]} : vector<8x512xf32> to vector<8x128xf32>
    %482 = math.tanh %481 : vector<8x128xf32>
    %483 = vector.extract_strided_slice %468 {offsets = [0, 384], sizes = [8, 128], strides = [1, 1]} : vector<8x512xf32> to vector<8x128xf32>
    %484 = arith.negf %483 : vector<8x128xf32>
    %485 = math.exp %484 : vector<8x128xf32>
    %cst_126 = arith.constant 1.000000e+00 : f32
    %486 = vector.broadcast %cst_126 : f32 to vector<8x128xf32>
    %487 = arith.addf %486, %485 : vector<8x128xf32>
    %488 = arith.divf %486, %487 : vector<8x128xf32>
    %489 = arith.mulf %480, %428 : vector<8x128xf32>
    %490 = arith.mulf %474, %482 : vector<8x128xf32>
    %491 = arith.addf %489, %490 : vector<8x128xf32>
    %492 = math.tanh %491 : vector<8x128xf32>
    %493 = arith.mulf %488, %492 : vector<8x128xf32>
    %494 = arith.truncf %493 : vector<8x128xf32> to vector<8x128xbf16>
    %495 = tpu.concatenate %494, %461 in 1 : vector<8x128xbf16>, vector<8x128xbf16> -> vector<8x256xbf16>
    %c0_127 = arith.constant 0 : index
    %c0_128 = arith.constant 0 : index
    %496 = vector.load %arg5[%c0_127, %c0_128] : memref<256x512xbf16, #tpu.memory_space<vmem>>, vector<256x512xbf16>
    %cst_129 = arith.constant dense<0.000000e+00> : vector<8x512xf32>
    %497 = tpu.matmul %495, %496, %cst_129 {dimension_numbers = #tpu.dot_dimension_numbers<[1], [0], [0], [1], [0, 0, 1, 1], [], []>} : vector<8x256xbf16>, vector<256x512xbf16>, vector<8x512xf32> -> vector<8x512xf32>
    %498 = arith.addf %497, %12 : vector<8x512xf32>
    %499 = vector.extract_strided_slice %498 {offsets = [0, 0], sizes = [8, 128], strides = [1, 1]} : vector<8x512xf32> to vector<8x128xf32>
    %500 = arith.negf %499 : vector<8x128xf32>
    %501 = math.exp %500 : vector<8x128xf32>
    %cst_130 = arith.constant 1.000000e+00 : f32
    %502 = vector.broadcast %cst_130 : f32 to vector<8x128xf32>
    %503 = arith.addf %502, %501 : vector<8x128xf32>
    %504 = arith.divf %502, %503 : vector<8x128xf32>
    %505 = vector.extract_strided_slice %498 {offsets = [0, 128], sizes = [8, 128], strides = [1, 1]} : vector<8x512xf32> to vector<8x128xf32>
    %506 = arith.negf %505 : vector<8x128xf32>
    %507 = math.exp %506 : vector<8x128xf32>
    %cst_131 = arith.constant 1.000000e+00 : f32
    %508 = vector.broadcast %cst_131 : f32 to vector<8x128xf32>
    %509 = arith.addf %508, %507 : vector<8x128xf32>
    %510 = arith.divf %508, %509 : vector<8x128xf32>
    %511 = vector.extract_strided_slice %498 {offsets = [0, 256], sizes = [8, 128], strides = [1, 1]} : vector<8x512xf32> to vector<8x128xf32>
    %512 = math.tanh %511 : vector<8x128xf32>
    %513 = vector.extract_strided_slice %498 {offsets = [0, 384], sizes = [8, 128], strides = [1, 1]} : vector<8x512xf32> to vector<8x128xf32>
    %514 = arith.negf %513 : vector<8x128xf32>
    %515 = math.exp %514 : vector<8x128xf32>
    %cst_132 = arith.constant 1.000000e+00 : f32
    %516 = vector.broadcast %cst_132 : f32 to vector<8x128xf32>
    %517 = arith.addf %516, %515 : vector<8x128xf32>
    %518 = arith.divf %516, %517 : vector<8x128xf32>
    %519 = arith.mulf %510, %458 : vector<8x128xf32>
    %520 = arith.mulf %504, %512 : vector<8x128xf32>
    %521 = arith.addf %519, %520 : vector<8x128xf32>
    %522 = math.tanh %521 : vector<8x128xf32>
    %523 = arith.mulf %518, %522 : vector<8x128xf32>
    %524 = arith.truncf %523 : vector<8x128xf32> to vector<8x128xbf16>
    %c8_i32_133 = arith.constant 8 : i32
    %c0_134 = arith.constant 0 : index
    %c0_135 = arith.constant 0 : index
    %c0_136 = arith.constant 0 : index
    %525 = vector.load %arg11[%c0_134, %c0_135, %c0_136] : memref<2x8x128xbf16, #tpu.memory_space<vmem>>, vector<1x8x128xbf16>
    %526 = vector.shape_cast %525 : vector<1x8x128xbf16> to vector<8x128xbf16>
    %527 = vector.shape_cast %494 : vector<8x128xbf16> to vector<1x8x128xbf16>
    tpu.vector_store %arg11[%c0_134, %c0_135, %c0_136], %527 {strides = array<i32>} : memref<2x8x128xbf16, #tpu.memory_space<vmem>>, vector<1x8x128xbf16>,
    %c0_137 = arith.constant 0 : index
    %c0_138 = arith.constant 0 : index
    %c0_139 = arith.constant 0 : index
    %528 = vector.load %arg12[%c0_137, %c0_138, %c0_139] : memref<2x8x128xf32, #tpu.memory_space<vmem>>, vector<1x8x128xf32>
    %529 = vector.shape_cast %528 : vector<1x8x128xf32> to vector<8x128xf32>
    %530 = vector.shape_cast %491 : vector<8x128xf32> to vector<1x8x128xf32>
    tpu.vector_store %arg12[%c0_137, %c0_138, %c0_139], %530 {strides = array<i32>} : memref<2x8x128xf32, #tpu.memory_space<vmem>>, vector<1x8x128xf32>,
    %c1_140 = arith.constant 1 : index
    %c0_141 = arith.constant 0 : index
    %c0_142 = arith.constant 0 : index
    %531 = vector.load %arg11[%c1_140, %c0_141, %c0_142] : memref<2x8x128xbf16, #tpu.memory_space<vmem>>, vector<1x8x128xbf16>
    %532 = vector.shape_cast %531 : vector<1x8x128xbf16> to vector<8x128xbf16>
    %533 = vector.shape_cast %524 : vector<8x128xbf16> to vector<1x8x128xbf16>
    tpu.vector_store %arg11[%c1_140, %c0_141, %c0_142], %533 {strides = array<i32>} : memref<2x8x128xbf16, #tpu.memory_space<vmem>>, vector<1x8x128xbf16>,
    %c1_143 = arith.constant 1 : index
    %c0_144 = arith.constant 0 : index
    %c0_145 = arith.constant 0 : index
    %534 = vector.load %arg12[%c1_143, %c0_144, %c0_145] : memref<2x8x128xf32, #tpu.memory_space<vmem>>, vector<1x8x128xf32>
    %535 = vector.shape_cast %534 : vector<1x8x128xf32> to vector<8x128xf32>
    %536 = vector.shape_cast %521 : vector<8x128xf32> to vector<1x8x128xf32>
    tpu.vector_store %arg12[%c1_143, %c0_144, %c0_145], %536 {strides = array<i32>} : memref<2x8x128xf32, #tpu.memory_space<vmem>>, vector<1x8x128xf32>,
    %c0_i32_146 = arith.constant 0 : i32
    %537 = arith.cmpi eq, %arg0, %c0_i32_146 : i32
    %538 = arith.extui %537 : i1 to i32
    %c0_i32_147 = arith.constant 0 : i32
    %539 = arith.cmpi ne, %538, %c0_i32_147 : i32
    scf.if %539 {
      %c0_148 = arith.constant 0 : index
      %c0_149 = arith.constant 0 : index
      %540 = vector.load %arg7[%c0_148, %c0_149] : memref<128x128xbf16, #tpu.memory_space<vmem>>, vector<128x128xbf16>
      %cst_150 = arith.constant dense<0.000000e+00> : vector<8x128xf32>
      %541 = tpu.matmul %524, %540, %cst_150 {dimension_numbers = #tpu.dot_dimension_numbers<[1], [0], [0], [1], [0, 0, 1, 1], [], []>} : vector<8x128xbf16>, vector<128x128xbf16>, vector<8x128xf32> -> vector<8x128xf32>
      %c0_151 = arith.constant 0 : index
      %c0_152 = arith.constant 0 : index
      %542 = vector.load %arg8[%c0_151, %c0_152] : memref<1x128xf32, #tpu.memory_space<vmem>>, vector<1x128xf32>
      %543 = vector.broadcast %542 : vector<1x128xf32> to vector<8x128xf32>
      %544 = arith.addf %541, %543 : vector<8x128xf32>
      %c0_153 = arith.constant 0 : index
      %c0_154 = arith.constant 0 : index
      %545 = vector.load %arg9[%c0_153, %c0_154] : memref<8x128xf32, #tpu.memory_space<vmem>>, vector<8x128xf32>
      tpu.vector_store %arg9[%c0_153, %c0_154], %544 {strides = array<i32>} : memref<8x128xf32, #tpu.memory_space<vmem>>, vector<8x128xf32>,
    } else {
    }
    return
  }
  func.func @transform_0(%arg0: i32) -> (i32, i32) {
    %c0_i32 = arith.constant 0 : i32
    %c0_i32_0 = arith.constant 0 : i32
    return %arg0, %c0_i32 : i32, i32
  }
  func.func @transform_1(%arg0: i32) -> (i32, i32) {
    %c0_i32 = arith.constant 0 : i32
    %c0_i32_0 = arith.constant 0 : i32
    %c0_i32_1 = arith.constant 0 : i32
    return %c0_i32, %c0_i32_0 : i32, i32
  }
  func.func @transform_2(%arg0: i32) -> (i32, i32) {
    %c0_i32 = arith.constant 0 : i32
    %c0_i32_0 = arith.constant 0 : i32
    %c0_i32_1 = arith.constant 0 : i32
    return %c0_i32, %c0_i32_0 : i32, i32
  }
  func.func @transform_3(%arg0: i32) -> (i32, i32) {
    %c0_i32 = arith.constant 0 : i32
    %c0_i32_0 = arith.constant 0 : i32
    %c0_i32_1 = arith.constant 0 : i32
    return %c0_i32, %c0_i32_0 : i32, i32
  }
  func.func @transform_4(%arg0: i32) -> (i32, i32) {
    %c0_i32 = arith.constant 0 : i32
    %c0_i32_0 = arith.constant 0 : i32
    %c0_i32_1 = arith.constant 0 : i32
    return %c0_i32, %c0_i32_0 : i32, i32
  }
  func.func @transform_5(%arg0: i32) -> (i32, i32) {
    %c0_i32 = arith.constant 0 : i32
    %c0_i32_0 = arith.constant 0 : i32
    %c0_i32_1 = arith.constant 0 : i32
    return %c0_i32, %c0_i32_0 : i32, i32
  }
  func.func @transform_6(%arg0: i32) -> (i32, i32) {
    %c0_i32 = arith.constant 0 : i32
    %c0_i32_0 = arith.constant 0 : i32
    %c0_i32_1 = arith.constant 0 : i32
    return %c0_i32, %c0_i32_0 : i32, i32
  }
  func.func @transform_7(%arg0: i32) -> (i32, i32) {
    %c0_i32 = arith.constant 0 : i32
    %c0_i32_0 = arith.constant 0 : i32
    %c0_i32_1 = arith.constant 0 : i32
    return %c0_i32, %c0_i32_0 : i32, i32
  }
  func.func @transform_8(%arg0: i32) -> (i32, i32) {
    %c0_i32 = arith.constant 0 : i32
    %c0_i32_0 = arith.constant 0 : i32
    %c0_i32_1 = arith.constant 0 : i32
    return %c0_i32, %c0_i32_0 : i32, i32
  }
}

</mosaic_0001>

<llo_original>
// kernel: lstm_soh_forward.1
$region0: #{lstm_soh_forward.1}
  #allocation0 [shape = 'u32[]', space=smem, size = 0x4, offset = 0x4, fixed_abs, tag = 'smem constant byte address 0x4 - core index']
  #allocation1 [shape = 'u32[144,128]{1,0:T(1,128)}', space=vmem, size = 0x12000, scoped, tag = 'internal scratch']
  #allocation2 [shape = 'f32[64,512]{1,0:T(8,128)}', space=vmem, size = 0x20000, scoped, tag = 'scratch operand']
  #allocation3 [shape = 'bf16[2,8,128]{2,1,0:T(8,128)(2,1)}', space=vmem, size = 0x1000, scoped, tag = 'scratch operand']
  #allocation4 [shape = 'f32[2,8,128]{2,1,0:T(8,128)}', space=vmem, size = 0x2000, scoped, tag = 'scratch operand']
  %s0 = inlined_call_operand.vmem [shape: bf16[64,128], index: 0, kind: input, shape index: {}]
  %s1 = inlined_call_operand.vmem [shape: bf16[128,512], index: 1, kind: input, shape index: {}]
  %s2 = inlined_call_operand.vmem [shape: bf16[128,512], index: 2, kind: input, shape index: {}]
  %s3 = inlined_call_operand.vmem [shape: f32[1,512], index: 3, kind: input, shape index: {}]
  %s4 = inlined_call_operand.vmem [shape: bf16[256,512], index: 4, kind: input, shape index: {}]
  %s5 = inlined_call_operand.vmem [shape: f32[1,512], index: 5, kind: input, shape index: {}]
  %s6 = inlined_call_operand.vmem [shape: bf16[128,128], index: 6, kind: input, shape index: {}]
  %s7 = inlined_call_operand.vmem [shape: f32[1,128], index: 7, kind: input, shape index: {}]
  %s8 = inlined_call_operand.vmem [shape: f32[8,128], index: 8, kind: output, shape index: {}]
  %s9 = sld [smem:[#allocation0]]
  $region50: #{lstm_soh_forward.1} parent=0
    _
  %s11 = ssub.s32 1, %s9
  %s12 = scalar_select 0, %s11, %s9
  // Predicated region
  $region2: #{lstm_soh_forward.1} parent=0 // pred_check
    _
  $region3: #{lstm_soh_forward.1} parent=0 // pred_check_branch
    %14 = sbr.rel (0) target = $region5
  $region4: #{lstm_soh_forward.1} parent=0 // pred_region
    _
  $region5: #{lstm_soh_forward.1} parent=0 // pred_fallthru
    _
  // Predicated region
  $region6: #{lstm_soh_forward.1} parent=0 // pred_check
    _
  $region7: #{lstm_soh_forward.1} parent=0 // pred_check_branch
    %16 = sbr.rel (0) target = $region9
  $region8: #{lstm_soh_forward.1} parent=0 // pred_region
    _
  $region9: #{lstm_soh_forward.1} parent=0 // pred_fallthru
    _
  // Predicated region
  $region10: #{lstm_soh_forward.1} parent=0 // pred_check
    _
  $region11: #{lstm_soh_forward.1} parent=0 // pred_check_branch
    %18 = sbr.rel (0) target = $region13
  $region12: #{lstm_soh_forward.1} parent=0 // pred_region
    _
  $region13: #{lstm_soh_forward.1} parent=0 // pred_fallthru
    _
  // Predicated region
  $region14: #{lstm_soh_forward.1} parent=0 // pred_check
    _
  $region15: #{lstm_soh_forward.1} parent=0 // pred_check_branch
    %20 = sbr.rel (0) target = $region17
  $region16: #{lstm_soh_forward.1} parent=0 // pred_region
    _
  $region17: #{lstm_soh_forward.1} parent=0 // pred_fallthru
    _
  // Predicated region
  $region18: #{lstm_soh_forward.1} parent=0 // pred_check
    _
  $region19: #{lstm_soh_forward.1} parent=0 // pred_check_branch
    %22 = sbr.rel (0) target = $region21
  $region20: #{lstm_soh_forward.1} parent=0 // pred_region
    _
  $region21: #{lstm_soh_forward.1} parent=0 // pred_fallthru
    _
  // Predicated region
  $region22: #{lstm_soh_forward.1} parent=0 // pred_check
    _
  $region23: #{lstm_soh_forward.1} parent=0 // pred_check_branch
    %24 = sbr.rel (0) target = $region25
  $region24: #{lstm_soh_forward.1} parent=0 // pred_region
    _
  $region25: #{lstm_soh_forward.1} parent=0 // pred_fallthru
    _
  // Predicated region
  $region26: #{lstm_soh_forward.1} parent=0 // pred_check
    _
  $region27: #{lstm_soh_forward.1} parent=0 // pred_check_branch
    %26 = sbr.rel (0) target = $region29
  $region28: #{lstm_soh_forward.1} parent=0 // pred_region
    _
  $region29: #{lstm_soh_forward.1} parent=0 // pred_fallthru
    _
  // Predicated region
  $region30: #{lstm_soh_forward.1} parent=0 // pred_check
    _
  $region31: #{lstm_soh_forward.1} parent=0 // pred_check_branch
    %28 = sbr.rel (0) target = $region33
  $region32: #{lstm_soh_forward.1} parent=0 // pred_region
    _
  $region33: #{lstm_soh_forward.1} parent=0 // pred_fallthru
    _
  %p30 = scmp.eq.s32.totalorder 0, 0
  // Predicated region
  $region34: #{lstm_soh_forward.1} parent=0 // pred_check
    %p31 = pneg %p30
  $region35: #{lstm_soh_forward.1} parent=0 // pred_check_branch
    %33 = sbr.rel (%p31) target = $region37
  $region36: #{lstm_soh_forward.1} parent=0 // pred_region
    %34 = vst [vmem:[#allocation3] sm:$0xf] 0
    %35 = vst [vmem:[#allocation3 + $0x4] sm:$0xf] 0
    %36 = vst [vmem:[#allocation4] sm:$0xff] 0.0
    %37 = vst [vmem:[#allocation4 + $0x8] sm:$0xff] 0.0
  $region37: #{lstm_soh_forward.1} parent=0 // pred_fallthru
    _
  %v38 = vld [vmem:[%s0] sm:$0xf]
  %v39 = vld [vmem:[%s0 + $0x4] sm:$0xf]
  %v40 = vld [vmem:[%s0 + $0x8] sm:$0xf]
  %v41 = vld [vmem:[%s0 + $0xc] sm:$0xf]
  %v42 = vld [vmem:[%s0 + $0x10] sm:$0xf]
  %v43 = vld [vmem:[%s0 + $0x14] sm:$0xf]
  %v44 = vld [vmem:[%s0 + $0x18] sm:$0xf]
  %v45 = vld [vmem:[%s0 + $0x1c] sm:$0xf]
  %v46 = vld [vmem:[%s1] sm:$0xff]
  %v47 = vld [vmem:[%s1 + $0x8] sm:$0xff]
  %v48 = vld [vmem:[%s1 + $0x10] sm:$0xff]
  %v49 = vld [vmem:[%s1 + $0x18] sm:$0xff]
  %v50 = vld [vmem:[%s1 + $0x20] sm:$0xff]
  %v51 = vld [vmem:[%s1 + $0x28] sm:$0xff]
  %v52 = vld [vmem:[%s1 + $0x30] sm:$0xff]
  %v53 = vld [vmem:[%s1 + $0x38] sm:$0xff]
  %v54 = vld [vmem:[%s1 + $0x40] sm:$0xff]
  %v55 = vld [vmem:[%s1 + $0x48] sm:$0xff]
  %v56 = vld [vmem:[%s1 + $0x50] sm:$0xff]
  %v57 = vld [vmem:[%s1 + $0x58] sm:$0xff]
  %v58 = vld [vmem:[%s1 + $0x60] sm:$0xff]
  %v59 = vld [vmem:[%s1 + $0x68] sm:$0xff]
  %v60 = vld [vmem:[%s1 + $0x70] sm:$0xff]
  %v61 = vld [vmem:[%s1 + $0x78] sm:$0xff]
  %v62 = vld [vmem:[%s1 + $0x80] sm:$0xff]
  %v63 = vld [vmem:[%s1 + $0x88] sm:$0xff]
  %v64 = vld [vmem:[%s1 + $0x90] sm:$0xff]
  %v65 = vld [vmem:[%s1 + $0x98] sm:$0xff]
  %v66 = vld [vmem:[%s1 + $0xa0] sm:$0xff]
  %v67 = vld [vmem:[%s1 + $0xa8] sm:$0xff]
  %v68 = vld [vmem:[%s1 + $0xb0] sm:$0xff]
  %v69 = vld [vmem:[%s1 + $0xb8] sm:$0xff]
  %v70 = vld [vmem:[%s1 + $0xc0] sm:$0xff]
  %v71 = vld [vmem:[%s1 + $0xc8] sm:$0xff]
  %v72 = vld [vmem:[%s1 + $0xd0] sm:$0xff]
  %v73 = vld [vmem:[%s1 + $0xd8] sm:$0xff]
  %v74 = vld [vmem:[%s1 + $0xe0] sm:$0xff]
  %v75 = vld [vmem:[%s1 + $0xe8] sm:$0xff]
  %v76 = vld [vmem:[%s1 + $0xf0] sm:$0xff]
  %v77 = vld [vmem:[%s1 + $0xf8] sm:$0xff]
  %v78 = vld [vmem:[%s3] sm:$0xf]
  %v80 = vlaneseq
  %v81 = vshrl.u32 %v80, 7
  %v82 = vsub.s32 0, %v81
  %v83 = vrot.slane %v78, %v82
  %v84 = vlaneseq
  %v85 = vshrl.u32 %v84, 7
  %v86 = vsub.s32 1, %v85
  %v87 = vrot.slane %v78, %v86
  %v88 = vlaneseq
  %v89 = vshrl.u32 %v88, 7
  %v90 = vsub.s32 2, %v89
  %v91 = vrot.slane %v78, %v90
  %v92 = vlaneseq
  %v93 = vshrl.u32 %v92, 7
  %v94 = vsub.s32 3, %v93
  %v95 = vrot.slane %v78, %v94
  %v108 = vunpack.c.l.b16 %v38
  %v109 = vunpack.c.l.b16 %v39
  %v110 = vunpack.c.l.b16 %v40
  %v111 = vunpack.c.l.b16 %v41
  %v112 = vunpack.c.l.b16 %v42
  %v113 = vunpack.c.l.b16 %v43
  %v114 = vunpack.c.l.b16 %v44
  %v115 = vunpack.c.l.b16 %v45
  %v116 = vpack.c.b16 %v109, %v108
  %v117 = vpack.c.b16 %v111, %v110
  %v118 = vpack.c.b16 %v113, %v112
  %v119 = vpack.c.b16 %v115, %v114
  %v156 = vunpack.c.l.b16 %v46
  %v157 = vunpack.c.h.b16 %v46
  %v158 = vunpack.c.l.b16 %v47
  %v159 = vunpack.c.h.b16 %v47
  %v160 = vunpack.c.l.b16 %v48
  %v161 = vunpack.c.h.b16 %v48
  %v162 = vunpack.c.l.b16 %v49
  %v163 = vunpack.c.h.b16 %v49
  %v164 = vunpack.c.l.b16 %v50
  %v165 = vunpack.c.h.b16 %v50
  %v166 = vunpack.c.l.b16 %v51
  %v167 = vunpack.c.h.b16 %v51
  %v168 = vunpack.c.l.b16 %v52
  %v169 = vunpack.c.h.b16 %v52
  %v170 = vunpack.c.l.b16 %v53
  %v171 = vunpack.c.h.b16 %v53
  %v172 = vunpack.c.l.b16 %v54
  %v173 = vunpack.c.h.b16 %v54
  %v174 = vunpack.c.l.b16 %v55
  %v175 = vunpack.c.h.b16 %v55
  %v176 = vunpack.c.l.b16 %v56
  %v177 = vunpack.c.h.b16 %v56
  %v178 = vunpack.c.l.b16 %v57
  %v179 = vunpack.c.h.b16 %v57
  %v180 = vunpack.c.l.b16 %v58
  %v181 = vunpack.c.h.b16 %v58
  %v182 = vunpack.c.l.b16 %v59
  %v183 = vunpack.c.h.b16 %v59
  %v184 = vunpack.c.l.b16 %v60
  %v185 = vunpack.c.h.b16 %v60
  %v186 = vunpack.c.l.b16 %v61
  %v187 = vunpack.c.h.b16 %v61
  %v188 = vunpack.c.l.b16 %v62
  %v189 = vunpack.c.h.b16 %v62
  %v190 = vunpack.c.l.b16 %v63
  %v191 = vunpack.c.h.b16 %v63
  %v192 = vunpack.c.l.b16 %v64
  %v193 = vunpack.c.h.b16 %v64
  %v194 = vunpack.c.l.b16 %v65
  %v195 = vunpack.c.h.b16 %v65
  %v196 = vunpack.c.l.b16 %v66
  %v197 = vunpack.c.h.b16 %v66
  %v198 = vunpack.c.l.b16 %v67
  %v199 = vunpack.c.h.b16 %v67
  %v200 = vunpack.c.l.b16 %v68
  %v201 = vunpack.c.h.b16 %v68
  %v202 = vunpack.c.l.b16 %v69
  %v203 = vunpack.c.h.b16 %v69
  %v204 = vunpack.c.l.b16 %v70
  %v205 = vunpack.c.h.b16 %v70
  %v206 = vunpack.c.l.b16 %v71
  %v207 = vunpack.c.h.b16 %v71
  %v208 = vunpack.c.l.b16 %v72
  %v209 = vunpack.c.h.b16 %v72
  %v210 = vunpack.c.l.b16 %v73
  %v211 = vunpack.c.h.b16 %v73
  %v212 = vunpack.c.l.b16 %v74
  %v213 = vunpack.c.h.b16 %v74
  %v214 = vunpack.c.l.b16 %v75
  %v215 = vunpack.c.h.b16 %v75
  %v216 = vunpack.c.l.b16 %v76
  %v217 = vunpack.c.h.b16 %v76
  %v218 = vunpack.c.l.b16 %v77
  %v219 = vunpack.c.h.b16 %v77
  %v220 = vpack.c.b16 %v160, %v156
  %v221 = vpack.c.b16 %v161, %v157
  %v222 = vpack.c.b16 %v162, %v158
  %v223 = vpack.c.b16 %v163, %v159
  %v224 = vpack.c.b16 %v168, %v164
  %v225 = vpack.c.b16 %v169, %v165
  %v226 = vpack.c.b16 %v170, %v166
  %v227 = vpack.c.b16 %v171, %v167
  %v228 = vpack.c.b16 %v176, %v172
  %v229 = vpack.c.b16 %v177, %v173
  %v230 = vpack.c.b16 %v178, %v174
  %v231 = vpack.c.b16 %v179, %v175
  %v232 = vpack.c.b16 %v184, %v180
  %v233 = vpack.c.b16 %v185, %v181
  %v234 = vpack.c.b16 %v186, %v182
  %v235 = vpack.c.b16 %v187, %v183
  %v236 = vpack.c.b16 %v192, %v188
  %v237 = vpack.c.b16 %v193, %v189
  %v238 = vpack.c.b16 %v194, %v190
  %v239 = vpack.c.b16 %v195, %v191
  %v240 = vpack.c.b16 %v200, %v196
  %v241 = vpack.c.b16 %v201, %v197
  %v242 = vpack.c.b16 %v202, %v198
  %v243 = vpack.c.b16 %v203, %v199
  %v244 = vpack.c.b16 %v208, %v204
  %v245 = vpack.c.b16 %v209, %v205
  %v246 = vpack.c.b16 %v210, %v206
  %v247 = vpack.c.b16 %v211, %v207
  %v248 = vpack.c.b16 %v216, %v212
  %v249 = vpack.c.b16 %v217, %v213
  %v250 = vpack.c.b16 %v218, %v214
  %v251 = vpack.c.b16 %v219, %v215
  %284 = vmatprep.subr.bf16.mxu0 %v221
  %285 = vmatpush1.bf16.msra.mxu0 %v220
  %286 = vmatprep.subr.bf16.mxu0 %v225
  %287 = vmatpush1.bf16.msra.mxu0 %v224
  %288 = vmatprep.subr.bf16.mxu0 %v229
  %289 = vmatpush1.bf16.msra.mxu0 %v228
  %290 = vmatprep.subr.bf16.mxu0 %v233
  %291 = vmatpush1.bf16.msra.mxu0 %v232
  %292 = vmatprep.subr.bf16.mxu0 %v237
  %293 = vmatpush1.bf16.msra.mxu0 %v236
  %294 = vmatprep.subr.bf16.mxu0 %v241
  %295 = vmatpush1.bf16.msra.mxu0 %v240
  %296 = vmatprep.subr.bf16.mxu0 %v245
  %297 = vmatpush1.bf16.msra.mxu0 %v244
  %298 = vmatprep.subr.bf16.mxu0 %v249
  %299 = vmatpush1.bf16.msra.mxu0 %v248
  %300 = vmatprep.subr.bf16.mxu0 0
  %301 = vmatpush1.bf16.msra.mxu0 0
  %302 = vmatprep.subr.bf16.mxu0 0
  %303 = vmatpush1.bf16.msra.mxu0 0
  %304 = vmatprep.subr.bf16.mxu0 0
  %305 = vmatpush1.bf16.msra.mxu0 0
  %306 = vmatprep.subr.bf16.mxu0 0
  %307 = vmatpush1.bf16.msra.mxu0 0
  %308 = vmatprep.subr.bf16.mxu0 0
  %309 = vmatpush1.bf16.msra.mxu0 0
  %310 = vmatprep.subr.bf16.mxu0 0
  %311 = vmatpush1.bf16.msra.mxu0 0
  %312 = vmatprep.subr.bf16.mxu0 0
  %313 = vmatpush1.bf16.msra.mxu0 0
  %314 = vmatprep.subr.bf16.mxu0 0
  %315 = vmatpush1.bf16.msra.mxu0 0
  %316 = vmatprep.mubr.bf16.mxu0 0
  %317 = vmatmul.mubr.bf16.gmra.mrb[0].mxu0 %v116
  %v318 = vpop.f32.mrb[0].mxu0
  %v319 = vadd.f32 %v83, %v318
  %v320 = vpop.f32.mrb[0].mxu0
  %v321 = vadd.f32 %v87, %v320
  %v322 = vpop.f32.mrb[0].mxu0
  %v323 = vadd.f32 %v83, %v322
  %v324 = vpop.f32.mrb[0].mxu0
  %v325 = vadd.f32 %v87, %v324
  %326 = vmatprep.mubr.bf16.mxu0 0
  %327 = vmatmul.mubr.bf16.gmra.mrb[0].mxu0 %v117
  %v328 = vpop.f32.mrb[0].mxu0
  %v329 = vadd.f32 %v83, %v328
  %v330 = vpop.f32.mrb[0].mxu0
  %v331 = vadd.f32 %v87, %v330
  %v332 = vpop.f32.mrb[0].mxu0
  %v333 = vadd.f32 %v83, %v332
  %v334 = vpop.f32.mrb[0].mxu0
  %v335 = vadd.f32 %v87, %v334
  %336 = vmatprep.mubr.bf16.mxu0 0
  %337 = vmatmul.mubr.bf16.gmra.mrb[0].mxu0 %v118
  %v338 = vpop.f32.mrb[0].mxu0
  %v339 = vadd.f32 %v83, %v338
  %v340 = vpop.f32.mrb[0].mxu0
  %v341 = vadd.f32 %v87, %v340
  %v342 = vpop.f32.mrb[0].mxu0
  %v343 = vadd.f32 %v83, %v342
  %v344 = vpop.f32.mrb[0].mxu0
  %v345 = vadd.f32 %v87, %v344
  %346 = vmatprep.mubr.bf16.mxu0 0
  %347 = vmatmul.mubr.bf16.gmra.mrb[0].mxu0 %v119
  %v348 = vpop.f32.mrb[0].mxu0
  %v349 = vadd.f32 %v83, %v348
  %v350 = vpop.f32.mrb[0].mxu0
  %v351 = vadd.f32 %v87, %v350
  %v352 = vpop.f32.mrb[0].mxu0
  %v353 = vadd.f32 %v83, %v352
  %v354 = vpop.f32.mrb[0].mxu0
  %v355 = vadd.f32 %v87, %v354
  %356 = vdwg.mxu0
  %357 = vmatprep.subr.bf16.mxu0 %v223
  %358 = vmatpush1.bf16.msra.mxu0 %v222
  %359 = vmatprep.subr.bf16.mxu0 %v227
  %360 = vmatpush1.bf16.msra.mxu0 %v226
  %361 = vmatprep.subr.bf16.mxu0 %v231
  %362 = vmatpush1.bf16.msra.mxu0 %v230
  %363 = vmatprep.subr.bf16.mxu0 %v235
  %364 = vmatpush1.bf16.msra.mxu0 %v234
  %365 = vmatprep.subr.bf16.mxu0 %v239
  %366 = vmatpush1.bf16.msra.mxu0 %v238
  %367 = vmatprep.subr.bf16.mxu0 %v243
  %368 = vmatpush1.bf16.msra.mxu0 %v242
  %369 = vmatprep.subr.bf16.mxu0 %v247
  %370 = vmatpush1.bf16.msra.mxu0 %v246
  %371 = vmatprep.subr.bf16.mxu0 %v251
  %372 = vmatpush1.bf16.msra.mxu0 %v250
  %373 = vmatprep.subr.bf16.mxu0 0
  %374 = vmatpush1.bf16.msra.mxu0 0
  %375 = vmatprep.subr.bf16.mxu0 0
  %376 = vmatpush1.bf16.msra.mxu0 0
  %377 = vmatprep.subr.bf16.mxu0 0
  %378 = vmatpush1.bf16.msra.mxu0 0
  %379 = vmatprep.subr.bf16.mxu0 0
  %380 = vmatpush1.bf16.msra.mxu0 0
  %381 = vmatprep.subr.bf16.mxu0 0
  %382 = vmatpush1.bf16.msra.mxu0 0
  %383 = vmatprep.subr.bf16.mxu0 0
  %384 = vmatpush1.bf16.msra.mxu0 0
  %385 = vmatprep.subr.bf16.mxu0 0
  %386 = vmatpush1.bf16.msra.mxu0 0
  %387 = vmatprep.subr.bf16.mxu0 0
  %388 = vmatpush1.bf16.msra.mxu0 0
  %389 = vmatprep.mubr.bf16.mxu0 0
  %390 = vmatmul.mubr.bf16.gmra.mrb[0].mxu0 %v116
  %v391 = vpop.f32.mrb[0].mxu0
  %v392 = vadd.f32 %v91, %v391
  %v393 = vpop.f32.mrb[0].mxu0
  %v394 = vadd.f32 %v95, %v393
  %v395 = vpop.f32.mrb[0].mxu0
  %v396 = vadd.f32 %v91, %v395
  %v397 = vpop.f32.mrb[0].mxu0
  %v398 = vadd.f32 %v95, %v397
  %399 = vmatprep.mubr.bf16.mxu0 0
  %400 = vmatmul.mubr.bf16.gmra.mrb[0].mxu0 %v117
  %v401 = vpop.f32.mrb[0].mxu0
  %v402 = vadd.f32 %v91, %v401
  %v403 = vpop.f32.mrb[0].mxu0
  %v404 = vadd.f32 %v95, %v403
  %v405 = vpop.f32.mrb[0].mxu0
  %v406 = vadd.f32 %v91, %v405
  %v407 = vpop.f32.mrb[0].mxu0
  %v408 = vadd.f32 %v95, %v407
  %409 = vmatprep.mubr.bf16.mxu0 0
  %410 = vmatmul.mubr.bf16.gmra.mrb[0].mxu0 %v118
  %v411 = vpop.f32.mrb[0].mxu0
  %v412 = vadd.f32 %v91, %v411
  %v413 = vpop.f32.mrb[0].mxu0
  %v414 = vadd.f32 %v95, %v413
  %v415 = vpop.f32.mrb[0].mxu0
  %v416 = vadd.f32 %v91, %v415
  %v417 = vpop.f32.mrb[0].mxu0
  %v418 = vadd.f32 %v95, %v417
  %419 = vmatprep.mubr.bf16.mxu0 0
  %420 = vmatmul.mubr.bf16.gmra.mrb[0].mxu0 %v119
  %v421 = vpop.f32.mrb[0].mxu0
  %v422 = vadd.f32 %v91, %v421
  %v423 = vpop.f32.mrb[0].mxu0
  %v424 = vadd.f32 %v95, %v423
  %v425 = vpop.f32.mrb[0].mxu0
  %v426 = vadd.f32 %v91, %v425
  %v427 = vpop.f32.mrb[0].mxu0
  %v428 = vadd.f32 %v95, %v427
  %429 = vdwg.mxu0
  %430 = vst [vmem:[#allocation2] sm:$0xff] %v319
  %431 = vst [vmem:[#allocation2 + $0x8] sm:$0xff] %v321
  %432 = vst [vmem:[#allocation2 + $0x10] sm:$0xff] %v392
  %433 = vst [vmem:[#allocation2 + $0x18] sm:$0xff] %v394
  %434 = vst [vmem:[#allocation2 + $0x20] sm:$0xff] %v323
  %435 = vst [vmem:[#allocation2 + $0x28] sm:$0xff] %v325
  %436 = vst [vmem:[#allocation2 + $0x30] sm:$0xff] %v396
  %437 = vst [vmem:[#allocation2 + $0x38] sm:$0xff] %v398
  %438 = vst [vmem:[#allocation2 + $0x40] sm:$0xff] %v329
  %439 = vst [vmem:[#allocation2 + $0x48] sm:$0xff] %v331
  %440 = vst [vmem:[#allocation2 + $0x50] sm:$0xff] %v402
  %441 = vst [vmem:[#allocation2 + $0x58] sm:$0xff] %v404
  %442 = vst [vmem:[#allocation2 + $0x60] sm:$0xff] %v333
  %443 = vst [vmem:[#allocation2 + $0x68] sm:$0xff] %v335
  %444 = vst [vmem:[#allocation2 + $0x70] sm:$0xff] %v406
  %445 = vst [vmem:[#allocation2 + $0x78] sm:$0xff] %v408
  %446 = vst [vmem:[#allocation2 + $0x80] sm:$0xff] %v339
  %447 = vst [vmem:[#allocation2 + $0x88] sm:$0xff] %v341
  %448 = vst [vmem:[#allocation2 + $0x90] sm:$0xff] %v412
  %449 = vst [vmem:[#allocation2 + $0x98] sm:$0xff] %v414
  %450 = vst [vmem:[#allocation2 + $0xa0] sm:$0xff] %v343
  %451 = vst [vmem:[#allocation2 + $0xa8] sm:$0xff] %v345
  %452 = vst [vmem:[#allocation2 + $0xb0] sm:$0xff] %v416
  %453 = vst [vmem:[#allocation2 + $0xb8] sm:$0xff] %v418
  %454 = vst [vmem:[#allocation2 + $0xc0] sm:$0xff] %v349
  %455 = vst [vmem:[#allocation2 + $0xc8] sm:$0xff] %v351
  %456 = vst [vmem:[#allocation2 + $0xd0] sm:$0xff] %v422
  %457 = vst [vmem:[#allocation2 + $0xd8] sm:$0xff] %v424
  %458 = vst [vmem:[#allocation2 + $0xe0] sm:$0xff] %v353
  %459 = vst [vmem:[#allocation2 + $0xe8] sm:$0xff] %v355
  %460 = vst [vmem:[#allocation2 + $0xf0] sm:$0xff] %v426
  %461 = vst [vmem:[#allocation2 + $0xf8] sm:$0xff] %v428
  %v462 = vld [vmem:[%s5] sm:$0xf]
  %v464 = vlaneseq
  %v465 = vshrl.u32 %v464, 7
  %v466 = vsub.s32 0, %v465
  %v467 = vrot.slane %v462, %v466
  %v468 = vlaneseq
  %v469 = vshrl.u32 %v468, 7
  %v470 = vsub.s32 1, %v469
  %v471 = vrot.slane %v462, %v470
  %v472 = vlaneseq
  %v473 = vshrl.u32 %v472, 7
  %v474 = vsub.s32 2, %v473
  %v475 = vrot.slane %v462, %v474
  %v476 = vlaneseq
  %v477 = vshrl.u32 %v476, 7
  %v478 = vsub.s32 3, %v477
  %v479 = vrot.slane %v462, %v478
  %v484 = vld [vmem:[#allocation3] sm:$0xf]
  %s485 = scalar_lea.vmem [#allocation3], 4
  %v486 = vld [vmem:[%s485] sm:$0xf]
  %v487 = vld [vmem:[#allocation4] sm:$0xff]
  %s488 = scalar_lea.vmem [#allocation4], 8
  %v489 = vld [vmem:[%s488] sm:$0xff]
  %s490 = smul.u32 0, 4
  %s491 = smul.addr %s490, 8
  %s492 = scalar_lea.vmem [#allocation2], %s491
  %v493 = vld [vmem:[%s492] sm:$0xff]
  %v494 = vld [vmem:[%s492 + $0x8] sm:$0xff]
  %v495 = vld [vmem:[%s492 + $0x10] sm:$0xff]
  %v496 = vld [vmem:[%s492 + $0x18] sm:$0xff]
  %v497 = vld [vmem:[%s2] sm:$0xff]
  %v498 = vld [vmem:[%s2 + $0x8] sm:$0xff]
  %v499 = vld [vmem:[%s2 + $0x10] sm:$0xff]
  %v500 = vld [vmem:[%s2 + $0x18] sm:$0xff]
  %v501 = vld [vmem:[%s2 + $0x20] sm:$0xff]
  %v502 = vld [vmem:[%s2 + $0x28] sm:$0xff]
  %v503 = vld [vmem:[%s2 + $0x30] sm:$0xff]
  %v504 = vld [vmem:[%s2 + $0x38] sm:$0xff]
  %v505 = vld [vmem:[%s2 + $0x40] sm:$0xff]
  %v506 = vld [vmem:[%s2 + $0x48] sm:$0xff]
  %v507 = vld [vmem:[%s2 + $0x50] sm:$0xff]
  %v508 = vld [vmem:[%s2 + $0x58] sm:$0xff]
  %v509 = vld [vmem:[%s2 + $0x60] sm:$0xff]
  %v510 = vld [vmem:[%s2 + $0x68] sm:$0xff]
  %v511 = vld [vmem:[%s2 + $0x70] sm:$0xff]
  %v512 = vld [vmem:[%s2 + $0x78] sm:$0xff]
  %v513 = vld [vmem:[%s2 + $0x80] sm:$0xff]
  %v514 = vld [vmem:[%s2 + $0x88] sm:$0xff]
  %v515 = vld [vmem:[%s2 + $0x90] sm:$0xff]
  %v516 = vld [vmem:[%s2 + $0x98] sm:$0xff]
  %v517 = vld [vmem:[%s2 + $0xa0] sm:$0xff]
  %v518 = vld [vmem:[%s2 + $0xa8] sm:$0xff]
  %v519 = vld [vmem:[%s2 + $0xb0] sm:$0xff]
  %v520 = vld [vmem:[%s2 + $0xb8] sm:$0xff]
  %v521 = vld [vmem:[%s2 + $0xc0] sm:$0xff]
  %v522 = vld [vmem:[%s2 + $0xc8] sm:$0xff]
  %v523 = vld [vmem:[%s2 + $0xd0] sm:$0xff]
  %v524 = vld [vmem:[%s2 + $0xd8] sm:$0xff]
  %v525 = vld [vmem:[%s2 + $0xe0] sm:$0xff]
  %v526 = vld [vmem:[%s2 + $0xe8] sm:$0xff]
  %v527 = vld [vmem:[%s2 + $0xf0] sm:$0xff]
  %v528 = vld [vmem:[%s2 + $0xf8] sm:$0xff]
  %v561 = vunpack.c.l.b16 %v497
  %v562 = vunpack.c.h.b16 %v497
  %v563 = vunpack.c.l.b16 %v498
  %v564 = vunpack.c.h.b16 %v498
  %v565 = vunpack.c.l.b16 %v499
  %v566 = vunpack.c.h.b16 %v499
  %v567 = vunpack.c.l.b16 %v500
  %v568 = vunpack.c.h.b16 %v500
  %v569 = vunpack.c.l.b16 %v501
  %v570 = vunpack.c.h.b16 %v501
  %v571 = vunpack.c.l.b16 %v502
  %v572 = vunpack.c.h.b16 %v502
  %v573 = vunpack.c.l.b16 %v503
  %v574 = vunpack.c.h.b16 %v503
  %v575 = vunpack.c.l.b16 %v504
  %v576 = vunpack.c.h.b16 %v504
  %v577 = vunpack.c.l.b16 %v505
  %v578 = vunpack.c.h.b16 %v505
  %v579 = vunpack.c.l.b16 %v506
  %v580 = vunpack.c.h.b16 %v506
  %v581 = vunpack.c.l.b16 %v507
  %v582 = vunpack.c.h.b16 %v507
  %v583 = vunpack.c.l.b16 %v508
  %v584 = vunpack.c.h.b16 %v508
  %v585 = vunpack.c.l.b16 %v509
  %v586 = vunpack.c.h.b16 %v509
  %v587 = vunpack.c.l.b16 %v510
  %v588 = vunpack.c.h.b16 %v510
  %v589 = vunpack.c.l.b16 %v511
  %v590 = vunpack.c.h.b16 %v511
  %v591 = vunpack.c.l.b16 %v512
  %v592 = vunpack.c.h.b16 %v512
  %v593 = vunpack.c.l.b16 %v513
  %v594 = vunpack.c.h.b16 %v513
  %v595 = vunpack.c.l.b16 %v514
  %v596 = vunpack.c.h.b16 %v514
  %v597 = vunpack.c.l.b16 %v515
  %v598 = vunpack.c.h.b16 %v515
  %v599 = vunpack.c.l.b16 %v516
  %v600 = vunpack.c.h.b16 %v516
  %v601 = vunpack.c.l.b16 %v517
  %v602 = vunpack.c.h.b16 %v517
  %v603 = vunpack.c.l.b16 %v518
  %v604 = vunpack.c.h.b16 %v518
  %v605 = vunpack.c.l.b16 %v519
  %v606 = vunpack.c.h.b16 %v519
  %v607 = vunpack.c.l.b16 %v520
  %v608 = vunpack.c.h.b16 %v520
  %v609 = vunpack.c.l.b16 %v521
  %v610 = vunpack.c.h.b16 %v521
  %v611 = vunpack.c.l.b16 %v522
  %v612 = vunpack.c.h.b16 %v522
  %v613 = vunpack.c.l.b16 %v523
  %v614 = vunpack.c.h.b16 %v523
  %v615 = vunpack.c.l.b16 %v524
  %v616 = vunpack.c.h.b16 %v524
  %v617 = vunpack.c.l.b16 %v525
  %v618 = vunpack.c.h.b16 %v525
  %v619 = vunpack.c.l.b16 %v526
  %v620 = vunpack.c.h.b16 %v526
  %v621 = vunpack.c.l.b16 %v527
  %v622 = vunpack.c.h.b16 %v527
  %v623 = vunpack.c.l.b16 %v528
  %v624 = vunpack.c.h.b16 %v528
  %v625 = vpack.c.b16 %v565, %v561
  %v626 = vpack.c.b16 %v566, %v562
  %v627 = vpack.c.b16 %v567, %v563
  %v628 = vpack.c.b16 %v568, %v564
  %v629 = vpack.c.b16 %v573, %v569
  %v630 = vpack.c.b16 %v574, %v570
  %v631 = vpack.c.b16 %v575, %v571
  %v632 = vpack.c.b16 %v576, %v572
  %v633 = vpack.c.b16 %v581, %v577
  %v634 = vpack.c.b16 %v582, %v578
  %v635 = vpack.c.b16 %v583, %v579
  %v636 = vpack.c.b16 %v584, %v580
  %v637 = vpack.c.b16 %v589, %v585
  %v638 = vpack.c.b16 %v590, %v586
  %v639 = vpack.c.b16 %v591, %v587
  %v640 = vpack.c.b16 %v592, %v588
  %v641 = vpack.c.b16 %v597, %v593
  %v642 = vpack.c.b16 %v598, %v594
  %v643 = vpack.c.b16 %v599, %v595
  %v644 = vpack.c.b16 %v600, %v596
  %v645 = vpack.c.b16 %v605, %v601
  %v646 = vpack.c.b16 %v606, %v602
  %v647 = vpack.c.b16 %v607, %v603
  %v648 = vpack.c.b16 %v608, %v604
  %v649 = vpack.c.b16 %v613, %v609
  %v650 = vpack.c.b16 %v614, %v610
  %v651 = vpack.c.b16 %v615, %v611
  %v652 = vpack.c.b16 %v616, %v612
  %v653 = vpack.c.b16 %v621, %v617
  %v654 = vpack.c.b16 %v622, %v618
  %v655 = vpack.c.b16 %v623, %v619
  %v656 = vpack.c.b16 %v624, %v620
  %689 = vmatprep.subr.bf16.mxu0 %v626
  %690 = vmatpush1.bf16.msra.mxu0 %v625
  %691 = vmatprep.subr.bf16.mxu0 %v630
  %692 = vmatpush1.bf16.msra.mxu0 %v629
  %693 = vmatprep.subr.bf16.mxu0 %v634
  %694 = vmatpush1.bf16.msra.mxu0 %v633
  %695 = vmatprep.subr.bf16.mxu0 %v638
  %696 = vmatpush1.bf16.msra.mxu0 %v637
  %697 = vmatprep.subr.bf16.mxu0 %v642
  %698 = vmatpush1.bf16.msra.mxu0 %v641
  %699 = vmatprep.subr.bf16.mxu0 %v646
  %700 = vmatpush1.bf16.msra.mxu0 %v645
  %701 = vmatprep.subr.bf16.mxu0 %v650
  %702 = vmatpush1.bf16.msra.mxu0 %v649
  %703 = vmatprep.subr.bf16.mxu0 %v654
  %704 = vmatpush1.bf16.msra.mxu0 %v653
  %705 = vmatprep.subr.bf16.mxu0 0
  %706 = vmatpush1.bf16.msra.mxu0 0
  %707 = vmatprep.subr.bf16.mxu0 0
  %708 = vmatpush1.bf16.msra.mxu0 0
  %709 = vmatprep.subr.bf16.mxu0 0
  %710 = vmatpush1.bf16.msra.mxu0 0
  %711 = vmatprep.subr.bf16.mxu0 0
  %712 = vmatpush1.bf16.msra.mxu0 0
  %713 = vmatprep.subr.bf16.mxu0 0
  %714 = vmatpush1.bf16.msra.mxu0 0
  %715 = vmatprep.subr.bf16.mxu0 0
  %716 = vmatpush1.bf16.msra.mxu0 0
  %717 = vmatprep.subr.bf16.mxu0 0
  %718 = vmatpush1.bf16.msra.mxu0 0
  %719 = vmatprep.subr.bf16.mxu0 0
  %720 = vmatpush1.bf16.msra.mxu0 0
  %721 = vmatprep.mubr.bf16.mxu0 0
  %722 = vmatmul.mubr.bf16.gmra.mrb[0].mxu0 %v484
  %v723 = vpop.f32.mrb[0].mxu0
  %v724 = vadd.f32 0.0, %v723
  %v725 = vpop.f32.mrb[0].mxu0
  %v726 = vadd.f32 0.0, %v725
  %v727 = vpop.f32.mrb[0].mxu0
  %v728 = vpop.f32.mrb[0].mxu0
  %729 = vdwg.mxu0
  %730 = vmatprep.subr.bf16.mxu0 %v628
  %731 = vmatpush1.bf16.msra.mxu0 %v627
  %732 = vmatprep.subr.bf16.mxu0 %v632
  %733 = vmatpush1.bf16.msra.mxu0 %v631
  %734 = vmatprep.subr.bf16.mxu0 %v636
  %735 = vmatpush1.bf16.msra.mxu0 %v635
  %736 = vmatprep.subr.bf16.mxu0 %v640
  %737 = vmatpush1.bf16.msra.mxu0 %v639
  %738 = vmatprep.subr.bf16.mxu0 %v644
  %739 = vmatpush1.bf16.msra.mxu0 %v643
  %740 = vmatprep.subr.bf16.mxu0 %v648
  %741 = vmatpush1.bf16.msra.mxu0 %v647
  %742 = vmatprep.subr.bf16.mxu0 %v652
  %743 = vmatpush1.bf16.msra.mxu0 %v651
  %744 = vmatprep.subr.bf16.mxu0 %v656
  %745 = vmatpush1.bf16.msra.mxu0 %v655
  %746 = vmatprep.subr.bf16.mxu0 0
  %747 = vmatpush1.bf16.msra.mxu0 0
  %748 = vmatprep.subr.bf16.mxu0 0
  %749 = vmatpush1.bf16.msra.mxu0 0
  %750 = vmatprep.subr.bf16.mxu0 0
  %751 = vmatpush1.bf16.msra.mxu0 0
  %752 = vmatprep.subr.bf16.mxu0 0
  %753 = vmatpush1.bf16.msra.mxu0 0
  %754 = vmatprep.subr.bf16.mxu0 0
  %755 = vmatpush1.bf16.msra.mxu0 0
  %756 = vmatprep.subr.bf16.mxu0 0
  %757 = vmatpush1.bf16.msra.mxu0 0
  %758 = vmatprep.subr.bf16.mxu0 0
  %759 = vmatpush1.bf16.msra.mxu0 0
  %760 = vmatprep.subr.bf16.mxu0 0
  %761 = vmatpush1.bf16.msra.mxu0 0
  %762 = vmatprep.mubr.bf16.mxu0 0
  %763 = vmatmul.mubr.bf16.gmra.mrb[0].mxu0 %v484
  %v764 = vpop.f32.mrb[0].mxu0
  %v765 = vadd.f32 0.0, %v764
  %v766 = vpop.f32.mrb[0].mxu0
  %v767 = vadd.f32 0.0, %v766
  %v768 = vpop.f32.mrb[0].mxu0
  %v769 = vpop.f32.mrb[0].mxu0
  %770 = vdwg.mxu0
  %v771 = vadd.f32 %v493, %v724
  %v772 = vadd.f32 %v494, %v726
  %v773 = vadd.f32 %v495, %v765
  %v774 = vadd.f32 %v496, %v767
  %v775 = vxor.u32 %v771, 2147483648
  %v776 = vmul.f32 %v775, 1.442695
  %v777 = vpow.pop %v776
  %v778 = vadd.f32 %v777, 1.0
  %v779 = vrcp.pop %v778
  %v780 = vmul.f32 1.0, %v779
  %v781 = vxor.u32 %v772, 2147483648
  %v782 = vmul.f32 %v781, 1.442695
  %v783 = vpow.pop %v782
  %v784 = vadd.f32 %v783, 1.0
  %v785 = vrcp.pop %v784
  %v786 = vmul.f32 1.0, %v785
  %v787 = vtanh.pop %v773
  %v788 = vxor.u32 %v774, 2147483648
  %v789 = vmul.f32 %v788, 1.442695
  %v790 = vpow.pop %v789
  %v791 = vadd.f32 %v790, 1.0
  %v792 = vrcp.pop %v791
  %v793 = vmul.f32 1.0, %v792
  %v794 = vmul.f32 %v786, %v487
  %v795 = vmul.f32 %v780, %v787
  %v796 = vadd.f32 %v794, %v795
  %v797 = vtanh.pop %v796
  %v798 = vmul.f32 %v793, %v797
  %v799 = vpack.c.bf16 %v798, %v798
  %v800 = vld [vmem:[%s4] sm:$0xff]
  %v801 = vld [vmem:[%s4 + $0x8] sm:$0xff]
  %v802 = vld [vmem:[%s4 + $0x10] sm:$0xff]
  %v803 = vld [vmem:[%s4 + $0x18] sm:$0xff]
  %v804 = vld [vmem:[%s4 + $0x20] sm:$0xff]
  %v805 = vld [vmem:[%s4 + $0x28] sm:$0xff]
  %v806 = vld [vmem:[%s4 + $0x30] sm:$0xff]
  %v807 = vld [vmem:[%s4 + $0x38] sm:$0xff]
  %v808 = vld [vmem:[%s4 + $0x40] sm:$0xff]
  %v809 = vld [vmem:[%s4 + $0x48] sm:$0xff]
  %v810 = vld [vmem:[%s4 + $0x50] sm:$0xff]
  %v811 = vld [vmem:[%s4 + $0x58] sm:$0xff]
  %v812 = vld [vmem:[%s4 + $0x60] sm:$0xff]
  %v813 = vld [vmem:[%s4 + $0x68] sm:$0xff]
  %v814 = vld [vmem:[%s4 + $0x70] sm:$0xff]
  %v815 = vld [vmem:[%s4 + $0x78] sm:$0xff]
  %v816 = vld [vmem:[%s4 + $0x80] sm:$0xff]
  %v817 = vld [vmem:[%s4 + $0x88] sm:$0xff]
  %v818 = vld [vmem:[%s4 + $0x90] sm:$0xff]
  %v819 = vld [vmem:[%s4 + $0x98] sm:$0xff]
  %v820 = vld [vmem:[%s4 + $0xa0] sm:$0xff]
  %v821 = vld [vmem:[%s4 + $0xa8] sm:$0xff]
  %v822 = vld [vmem:[%s4 + $0xb0] sm:$0xff]
  %v823 = vld [vmem:[%s4 + $0xb8] sm:$0xff]
  %v824 = vld [vmem:[%s4 + $0xc0] sm:$0xff]
  %v825 = vld [vmem:[%s4 + $0xc8] sm:$0xff]
  %v826 = vld [vmem:[%s4 + $0xd0] sm:$0xff]
  %v827 = vld [vmem:[%s4 + $0xd8] sm:$0xff]
  %v828 = vld [vmem:[%s4 + $0xe0] sm:$0xff]
  %v829 = vld [vmem:[%s4 + $0xe8] sm:$0xff]
  %v830 = vld [vmem:[%s4 + $0xf0] sm:$0xff]
  %v831 = vld [vmem:[%s4 + $0xf8] sm:$0xff]
  %v832 = vld [vmem:[%s4 + $0x100] sm:$0xff]
  %v833 = vld [vmem:[%s4 + $0x108] sm:$0xff]
  %v834 = vld [vmem:[%s4 + $0x110] sm:$0xff]
  %v835 = vld [vmem:[%s4 + $0x118] sm:$0xff]
  %v836 = vld [vmem:[%s4 + $0x120] sm:$0xff]
  %v837 = vld [vmem:[%s4 + $0x128] sm:$0xff]
  %v838 = vld [vmem:[%s4 + $0x130] sm:$0xff]
  %v839 = vld [vmem:[%s4 + $0x138] sm:$0xff]
  %v840 = vld [vmem:[%s4 + $0x140] sm:$0xff]
  %v841 = vld [vmem:[%s4 + $0x148] sm:$0xff]
  %v842 = vld [vmem:[%s4 + $0x150] sm:$0xff]
  %v843 = vld [vmem:[%s4 + $0x158] sm:$0xff]
  %v844 = vld [vmem:[%s4 + $0x160] sm:$0xff]
  %v845 = vld [vmem:[%s4 + $0x168] sm:$0xff]
  %v846 = vld [vmem:[%s4 + $0x170] sm:$0xff]
  %v847 = vld [vmem:[%s4 + $0x178] sm:$0xff]
  %v848 = vld [vmem:[%s4 + $0x180] sm:$0xff]
  %v849 = vld [vmem:[%s4 + $0x188] sm:$0xff]
  %v850 = vld [vmem:[%s4 + $0x190] sm:$0xff]
  %v851 = vld [vmem:[%s4 + $0x198] sm:$0xff]
  %v852 = vld [vmem:[%s4 + $0x1a0] sm:$0xff]
  %v853 = vld [vmem:[%s4 + $0x1a8] sm:$0xff]
  %v854 = vld [vmem:[%s4 + $0x1b0] sm:$0xff]
  %v855 = vld [vmem:[%s4 + $0x1b8] sm:$0xff]
  %v856 = vld [vmem:[%s4 + $0x1c0] sm:$0xff]
  %v857 = vld [vmem:[%s4 + $0x1c8] sm:$0xff]
  %v858 = vld [vmem:[%s4 + $0x1d0] sm:$0xff]
  %v859 = vld [vmem:[%s4 + $0x1d8] sm:$0xff]
  %v860 = vld [vmem:[%s4 + $0x1e0] sm:$0xff]
  %v861 = vld [vmem:[%s4 + $0x1e8] sm:$0xff]
  %v862 = vld [vmem:[%s4 + $0x1f0] sm:$0xff]
  %v863 = vld [vmem:[%s4 + $0x1f8] sm:$0xff]
  %v928 = vunpack.c.l.b16 %v800
  %v929 = vunpack.c.h.b16 %v800
  %v930 = vunpack.c.l.b16 %v801
  %v931 = vunpack.c.h.b16 %v801
  %v932 = vunpack.c.l.b16 %v802
  %v933 = vunpack.c.h.b16 %v802
  %v934 = vunpack.c.l.b16 %v803
  %v935 = vunpack.c.h.b16 %v803
  %v936 = vunpack.c.l.b16 %v804
  %v937 = vunpack.c.h.b16 %v804
  %v938 = vunpack.c.l.b16 %v805
  %v939 = vunpack.c.h.b16 %v805
  %v940 = vunpack.c.l.b16 %v806
  %v941 = vunpack.c.h.b16 %v806
  %v942 = vunpack.c.l.b16 %v807
  %v943 = vunpack.c.h.b16 %v807
  %v944 = vunpack.c.l.b16 %v808
  %v945 = vunpack.c.h.b16 %v808
  %v946 = vunpack.c.l.b16 %v809
  %v947 = vunpack.c.h.b16 %v809
  %v948 = vunpack.c.l.b16 %v810
  %v949 = vunpack.c.h.b16 %v810
  %v950 = vunpack.c.l.b16 %v811
  %v951 = vunpack.c.h.b16 %v811
  %v952 = vunpack.c.l.b16 %v812
  %v953 = vunpack.c.h.b16 %v812
  %v954 = vunpack.c.l.b16 %v813
  %v955 = vunpack.c.h.b16 %v813
  %v956 = vunpack.c.l.b16 %v814
  %v957 = vunpack.c.h.b16 %v814
  %v958 = vunpack.c.l.b16 %v815
  %v959 = vunpack.c.h.b16 %v815
  %v960 = vunpack.c.l.b16 %v816
  %v961 = vunpack.c.h.b16 %v816
  %v962 = vunpack.c.l.b16 %v817
  %v963 = vunpack.c.h.b16 %v817
  %v964 = vunpack.c.l.b16 %v818
  %v965 = vunpack.c.h.b16 %v818
  %v966 = vunpack.c.l.b16 %v819
  %v967 = vunpack.c.h.b16 %v819
  %v968 = vunpack.c.l.b16 %v820
  %v969 = vunpack.c.h.b16 %v820
  %v970 = vunpack.c.l.b16 %v821
  %v971 = vunpack.c.h.b16 %v821
  %v972 = vunpack.c.l.b16 %v822
  %v973 = vunpack.c.h.b16 %v822
  %v974 = vunpack.c.l.b16 %v823
  %v975 = vunpack.c.h.b16 %v823
  %v976 = vunpack.c.l.b16 %v824
  %v977 = vunpack.c.h.b16 %v824
  %v978 = vunpack.c.l.b16 %v825
  %v979 = vunpack.c.h.b16 %v825
  %v980 = vunpack.c.l.b16 %v826
  %v981 = vunpack.c.h.b16 %v826
  %v982 = vunpack.c.l.b16 %v827
  %v983 = vunpack.c.h.b16 %v827
  %v984 = vunpack.c.l.b16 %v828
  %v985 = vunpack.c.h.b16 %v828
  %v986 = vunpack.c.l.b16 %v829
  %v987 = vunpack.c.h.b16 %v829
  %v988 = vunpack.c.l.b16 %v830
  %v989 = vunpack.c.h.b16 %v830
  %v990 = vunpack.c.l.b16 %v831
  %v991 = vunpack.c.h.b16 %v831
  %v992 = vunpack.c.l.b16 %v832
  %v993 = vunpack.c.h.b16 %v832
  %v994 = vunpack.c.l.b16 %v833
  %v995 = vunpack.c.h.b16 %v833
  %v996 = vunpack.c.l.b16 %v834
  %v997 = vunpack.c.h.b16 %v834
  %v998 = vunpack.c.l.b16 %v835
  %v999 = vunpack.c.h.b16 %v835
  %v1000 = vunpack.c.l.b16 %v836
  %v1001 = vunpack.c.h.b16 %v836
  %v1002 = vunpack.c.l.b16 %v837
  %v1003 = vunpack.c.h.b16 %v837
  %v1004 = vunpack.c.l.b16 %v838
  %v1005 = vunpack.c.h.b16 %v838
  %v1006 = vunpack.c.l.b16 %v839
  %v1007 = vunpack.c.h.b16 %v839
  %v1008 = vunpack.c.l.b16 %v840
  %v1009 = vunpack.c.h.b16 %v840
  %v1010 = vunpack.c.l.b16 %v841
  %v1011 = vunpack.c.h.b16 %v841
  %v1012 = vunpack.c.l.b16 %v842
  %v1013 = vunpack.c.h.b16 %v842
  %v1014 = vunpack.c.l.b16 %v843
  %v1015 = vunpack.c.h.b16 %v843
  %v1016 = vunpack.c.l.b16 %v844
  %v1017 = vunpack.c.h.b16 %v844
  %v1018 = vunpack.c.l.b16 %v845
  %v1019 = vunpack.c.h.b16 %v845
  %v1020 = vunpack.c.l.b16 %v846
  %v1021 = vunpack.c.h.b16 %v846
  %v1022 = vunpack.c.l.b16 %v847
  %v1023 = vunpack.c.h.b16 %v847
  %v1024 = vunpack.c.l.b16 %v848
  %v1025 = vunpack.c.h.b16 %v848
  %v1026 = vunpack.c.l.b16 %v849
  %v1027 = vunpack.c.h.b16 %v849
  %v1028 = vunpack.c.l.b16 %v850
  %v1029 = vunpack.c.h.b16 %v850
  %v1030 = vunpack.c.l.b16 %v851
  %v1031 = vunpack.c.h.b16 %v851
  %v1032 = vunpack.c.l.b16 %v852
  %v1033 = vunpack.c.h.b16 %v852
  %v1034 = vunpack.c.l.b16 %v853
  %v1035 = vunpack.c.h.b16 %v853
  %v1036 = vunpack.c.l.b16 %v854
  %v1037 = vunpack.c.h.b16 %v854
  %v1038 = vunpack.c.l.b16 %v855
  %v1039 = vunpack.c.h.b16 %v855
  %v1040 = vunpack.c.l.b16 %v856
  %v1041 = vunpack.c.h.b16 %v856
  %v1042 = vunpack.c.l.b16 %v857
  %v1043 = vunpack.c.h.b16 %v857
  %v1044 = vunpack.c.l.b16 %v858
  %v1045 = vunpack.c.h.b16 %v858
  %v1046 = vunpack.c.l.b16 %v859
  %v1047 = vunpack.c.h.b16 %v859
  %v1048 = vunpack.c.l.b16 %v860
  %v1049 = vunpack.c.h.b16 %v860
  %v1050 = vunpack.c.l.b16 %v861
  %v1051 = vunpack.c.h.b16 %v861
  %v1052 = vunpack.c.l.b16 %v862
  %v1053 = vunpack.c.h.b16 %v862
  %v1054 = vunpack.c.l.b16 %v863
  %v1055 = vunpack.c.h.b16 %v863
  %v1056 = vpack.c.b16 %v932, %v928
  %v1057 = vpack.c.b16 %v933, %v929
  %v1058 = vpack.c.b16 %v934, %v930
  %v1059 = vpack.c.b16 %v935, %v931
  %v1060 = vpack.c.b16 %v940, %v936
  %v1061 = vpack.c.b16 %v941, %v937
  %v1062 = vpack.c.b16 %v942, %v938
  %v1063 = vpack.c.b16 %v943, %v939
  %v1064 = vpack.c.b16 %v948, %v944
  %v1065 = vpack.c.b16 %v949, %v945
  %v1066 = vpack.c.b16 %v950, %v946
  %v1067 = vpack.c.b16 %v951, %v947
  %v1068 = vpack.c.b16 %v956, %v952
  %v1069 = vpack.c.b16 %v957, %v953
  %v1070 = vpack.c.b16 %v958, %v954
  %v1071 = vpack.c.b16 %v959, %v955
  %v1072 = vpack.c.b16 %v964, %v960
  %v1073 = vpack.c.b16 %v965, %v961
  %v1074 = vpack.c.b16 %v966, %v962
  %v1075 = vpack.c.b16 %v967, %v963
  %v1076 = vpack.c.b16 %v972, %v968
  %v1077 = vpack.c.b16 %v973, %v969
  %v1078 = vpack.c.b16 %v974, %v970
  %v1079 = vpack.c.b16 %v975, %v971
  %v1080 = vpack.c.b16 %v980, %v976
  %v1081 = vpack.c.b16 %v981, %v977
  %v1082 = vpack.c.b16 %v982, %v978
  %v1083 = vpack.c.b16 %v983, %v979
  %v1084 = vpack.c.b16 %v988, %v984
  %v1085 = vpack.c.b16 %v989, %v985
  %v1086 = vpack.c.b16 %v990, %v986
  %v1087 = vpack.c.b16 %v991, %v987
  %v1088 = vpack.c.b16 %v996, %v992
  %v1089 = vpack.c.b16 %v997, %v993
  %v1090 = vpack.c.b16 %v998, %v994
  %v1091 = vpack.c.b16 %v999, %v995
  %v1092 = vpack.c.b16 %v1004, %v1000
  %v1093 = vpack.c.b16 %v1005, %v1001
  %v1094 = vpack.c.b16 %v1006, %v1002
  %v1095 = vpack.c.b16 %v1007, %v1003
  %v1096 = vpack.c.b16 %v1012, %v1008
  %v1097 = vpack.c.b16 %v1013, %v1009
  %v1098 = vpack.c.b16 %v1014, %v1010
  %v1099 = vpack.c.b16 %v1015, %v1011
  %v1100 = vpack.c.b16 %v1020, %v1016
  %v1101 = vpack.c.b16 %v1021, %v1017
  %v1102 = vpack.c.b16 %v1022, %v1018
  %v1103 = vpack.c.b16 %v1023, %v1019
  %v1104 = vpack.c.b16 %v1028, %v1024
  %v1105 = vpack.c.b16 %v1029, %v1025
  %v1106 = vpack.c.b16 %v1030, %v1026
  %v1107 = vpack.c.b16 %v1031, %v1027
  %v1108 = vpack.c.b16 %v1036, %v1032
  %v1109 = vpack.c.b16 %v1037, %v1033
  %v1110 = vpack.c.b16 %v1038, %v1034
  %v1111 = vpack.c.b16 %v1039, %v1035
  %v1112 = vpack.c.b16 %v1044, %v1040
  %v1113 = vpack.c.b16 %v1045, %v1041
  %v1114 = vpack.c.b16 %v1046, %v1042
  %v1115 = vpack.c.b16 %v1047, %v1043
  %v1116 = vpack.c.b16 %v1052, %v1048
  %v1117 = vpack.c.b16 %v1053, %v1049
  %v1118 = vpack.c.b16 %v1054, %v1050
  %v1119 = vpack.c.b16 %v1055, %v1051
  %1184 = vmatprep.subr.bf16.mxu0 %v1057
  %1185 = vmatpush1.bf16.msra.mxu0 %v1056
  %1186 = vmatprep.subr.bf16.mxu0 %v1061
  %1187 = vmatpush1.bf16.msra.mxu0 %v1060
  %1188 = vmatprep.subr.bf16.mxu0 %v1065
  %1189 = vmatpush1.bf16.msra.mxu0 %v1064
  %1190 = vmatprep.subr.bf16.mxu0 %v1069
  %1191 = vmatpush1.bf16.msra.mxu0 %v1068
  %1192 = vmatprep.subr.bf16.mxu0 %v1073
  %1193 = vmatpush1.bf16.msra.mxu0 %v1072
  %1194 = vmatprep.subr.bf16.mxu0 %v1077
  %1195 = vmatpush1.bf16.msra.mxu0 %v1076
  %1196 = vmatprep.subr.bf16.mxu0 %v1081
  %1197 = vmatpush1.bf16.msra.mxu0 %v1080
  %1198 = vmatprep.subr.bf16.mxu0 %v1085
  %1199 = vmatpush1.bf16.msra.mxu0 %v1084
  %1200 = vmatprep.subr.bf16.mxu0 %v1089
  %1201 = vmatpush1.bf16.msra.mxu0 %v1088
  %1202 = vmatprep.subr.bf16.mxu0 %v1093
  %1203 = vmatpush1.bf16.msra.mxu0 %v1092
  %1204 = vmatprep.subr.bf16.mxu0 %v1097
  %1205 = vmatpush1.bf16.msra.mxu0 %v1096
  %1206 = vmatprep.subr.bf16.mxu0 %v1101
  %1207 = vmatpush1.bf16.msra.mxu0 %v1100
  %1208 = vmatprep.subr.bf16.mxu0 %v1105
  %1209 = vmatpush1.bf16.msra.mxu0 %v1104
  %1210 = vmatprep.subr.bf16.mxu0 %v1109
  %1211 = vmatpush1.bf16.msra.mxu0 %v1108
  %1212 = vmatprep.subr.bf16.mxu0 %v1113
  %1213 = vmatpush1.bf16.msra.mxu0 %v1112
  %1214 = vmatprep.subr.bf16.mxu0 %v1117
  %1215 = vmatpush1.bf16.msra.mxu0 %v1116
  %1216 = vmatprep.mubr.bf16.mxu0 %v486
  %1217 = vmatmul.mubr.bf16.gmra.mrb[0].mxu0 %v799
  %v1218 = vpop.f32.mrb[0].mxu0
  %v1219 = vadd.f32 %v467, %v1218
  %v1220 = vpop.f32.mrb[0].mxu0
  %v1221 = vadd.f32 %v471, %v1220
  %v1222 = vpop.f32.mrb[0].mxu0
  %v1223 = vpop.f32.mrb[0].mxu0
  %1224 = vdwg.mxu0
  %1225 = vmatprep.subr.bf16.mxu0 %v1059
  %1226 = vmatpush1.bf16.msra.mxu0 %v1058
  %1227 = vmatprep.subr.bf16.mxu0 %v1063
  %1228 = vmatpush1.bf16.msra.mxu0 %v1062
  %1229 = vmatprep.subr.bf16.mxu0 %v1067
  %1230 = vmatpush1.bf16.msra.mxu0 %v1066
  %1231 = vmatprep.subr.bf16.mxu0 %v1071
  %1232 = vmatpush1.bf16.msra.mxu0 %v1070
  %1233 = vmatprep.subr.bf16.mxu0 %v1075
  %1234 = vmatpush1.bf16.msra.mxu0 %v1074
  %1235 = vmatprep.subr.bf16.mxu0 %v1079
  %1236 = vmatpush1.bf16.msra.mxu0 %v1078
  %1237 = vmatprep.subr.bf16.mxu0 %v1083
  %1238 = vmatpush1.bf16.msra.mxu0 %v1082
  %1239 = vmatprep.subr.bf16.mxu0 %v1087
  %1240 = vmatpush1.bf16.msra.mxu0 %v1086
  %1241 = vmatprep.subr.bf16.mxu0 %v1091
  %1242 = vmatpush1.bf16.msra.mxu0 %v1090
  %1243 = vmatprep.subr.bf16.mxu0 %v1095
  %1244 = vmatpush1.bf16.msra.mxu0 %v1094
  %1245 = vmatprep.subr.bf16.mxu0 %v1099
  %1246 = vmatpush1.bf16.msra.mxu0 %v1098
  %1247 = vmatprep.subr.bf16.mxu0 %v1103
  %1248 = vmatpush1.bf16.msra.mxu0 %v1102
  %1249 = vmatprep.subr.bf16.mxu0 %v1107
  %1250 = vmatpush1.bf16.msra.mxu0 %v1106
  %1251 = vmatprep.subr.bf16.mxu0 %v1111
  %1252 = vmatpush1.bf16.msra.mxu0 %v1110
  %1253 = vmatprep.subr.bf16.mxu0 %v1115
  %1254 = vmatpush1.bf16.msra.mxu0 %v1114
  %1255 = vmatprep.subr.bf16.mxu0 %v1119
  %1256 = vmatpush1.bf16.msra.mxu0 %v1118
  %1257 = vmatprep.mubr.bf16.mxu0 %v486
  %1258 = vmatmul.mubr.bf16.gmra.mrb[0].mxu0 %v799
  %v1259 = vpop.f32.mrb[0].mxu0
  %v1260 = vadd.f32 %v475, %v1259
  %v1261 = vpop.f32.mrb[0].mxu0
  %v1262 = vadd.f32 %v479, %v1261
  %v1263 = vpop.f32.mrb[0].mxu0
  %v1264 = vpop.f32.mrb[0].mxu0
  %1265 = vdwg.mxu0
  %v1266 = vxor.u32 %v1219, 2147483648
  %v1267 = vmul.f32 %v1266, 1.442695
  %v1268 = vpow.pop %v1267
  %v1269 = vadd.f32 %v1268, 1.0
  %v1270 = vrcp.pop %v1269
  %v1271 = vmul.f32 1.0, %v1270
  %v1272 = vxor.u32 %v1221, 2147483648
  %v1273 = vmul.f32 %v1272, 1.442695
  %v1274 = vpow.pop %v1273
  %v1275 = vadd.f32 %v1274, 1.0
  %v1276 = vrcp.pop %v1275
  %v1277 = vmul.f32 1.0, %v1276
  %v1278 = vtanh.pop %v1260
  %v1279 = vxor.u32 %v1262, 2147483648
  %v1280 = vmul.f32 %v1279, 1.442695
  %v1281 = vpow.pop %v1280
  %v1282 = vadd.f32 %v1281, 1.0
  %v1283 = vrcp.pop %v1282
  %v1284 = vmul.f32 1.0, %v1283
  %v1285 = vmul.f32 %v1277, %v489
  %v1286 = vmul.f32 %v1271, %v1278
  %v1287 = vadd.f32 %v1285, %v1286
  %v1288 = vtanh.pop %v1287
  %v1289 = vmul.f32 %v1284, %v1288
  %v1290 = vpack.c.bf16 %v1289, %v1289
  %s1291 = smul.u32 1, 4
  %s1292 = smul.addr %s1291, 8
  %s1293 = scalar_lea.vmem [#allocation2], %s1292
  %v1294 = vld [vmem:[%s1293] sm:$0xff]
  %v1295 = vld [vmem:[%s1293 + $0x8] sm:$0xff]
  %v1296 = vld [vmem:[%s1293 + $0x10] sm:$0xff]
  %v1297 = vld [vmem:[%s1293 + $0x18] sm:$0xff]
  %1298 = vmatprep.subr.bf16.mxu0 %v626
  %1299 = vmatpush1.bf16.msra.mxu0 %v625
  %1300 = vmatprep.subr.bf16.mxu0 %v630
  %1301 = vmatpush1.bf16.msra.mxu0 %v629
  %1302 = vmatprep.subr.bf16.mxu0 %v634
  %1303 = vmatpush1.bf16.msra.mxu0 %v633
  %1304 = vmatprep.subr.bf16.mxu0 %v638
  %1305 = vmatpush1.bf16.msra.mxu0 %v637
  %1306 = vmatprep.subr.bf16.mxu0 %v642
  %1307 = vmatpush1.bf16.msra.mxu0 %v641
  %1308 = vmatprep.subr.bf16.mxu0 %v646
  %1309 = vmatpush1.bf16.msra.mxu0 %v645
  %1310 = vmatprep.subr.bf16.mxu0 %v650
  %1311 = vmatpush1.bf16.msra.mxu0 %v649
  %1312 = vmatprep.subr.bf16.mxu0 %v654
  %1313 = vmatpush1.bf16.msra.mxu0 %v653
  %1314 = vmatprep.subr.bf16.mxu0 0
  %1315 = vmatpush1.bf16.msra.mxu0 0
  %1316 = vmatprep.subr.bf16.mxu0 0
  %1317 = vmatpush1.bf16.msra.mxu0 0
  %1318 = vmatprep.subr.bf16.mxu0 0
  %1319 = vmatpush1.bf16.msra.mxu0 0
  %1320 = vmatprep.subr.bf16.mxu0 0
  %1321 = vmatpush1.bf16.msra.mxu0 0
  %1322 = vmatprep.subr.bf16.mxu0 0
  %1323 = vmatpush1.bf16.msra.mxu0 0
  %1324 = vmatprep.subr.bf16.mxu0 0
  %1325 = vmatpush1.bf16.msra.mxu0 0
  %1326 = vmatprep.subr.bf16.mxu0 0
  %1327 = vmatpush1.bf16.msra.mxu0 0
  %1328 = vmatprep.subr.bf16.mxu0 0
  %1329 = vmatpush1.bf16.msra.mxu0 0
  %1330 = vmatprep.mubr.bf16.mxu0 0
  %1331 = vmatmul.mubr.bf16.gmra.mrb[0].mxu0 %v799
  %v1332 = vpop.f32.mrb[0].mxu0
  %v1333 = vadd.f32 0.0, %v1332
  %v1334 = vpop.f32.mrb[0].mxu0
  %v1335 = vadd.f32 0.0, %v1334
  %v1336 = vpop.f32.mrb[0].mxu0
  %v1337 = vpop.f32.mrb[0].mxu0
  %1338 = vdwg.mxu0
  %1339 = vmatprep.subr.bf16.mxu0 %v628
  %1340 = vmatpush1.bf16.msra.mxu0 %v627
  %1341 = vmatprep.subr.bf16.mxu0 %v632
  %1342 = vmatpush1.bf16.msra.mxu0 %v631
  %1343 = vmatprep.subr.bf16.mxu0 %v636
  %1344 = vmatpush1.bf16.msra.mxu0 %v635
  %1345 = vmatprep.subr.bf16.mxu0 %v640
  %1346 = vmatpush1.bf16.msra.mxu0 %v639
  %1347 = vmatprep.subr.bf16.mxu0 %v644
  %1348 = vmatpush1.bf16.msra.mxu0 %v643
  %1349 = vmatprep.subr.bf16.mxu0 %v648
  %1350 = vmatpush1.bf16.msra.mxu0 %v647
  %1351 = vmatprep.subr.bf16.mxu0 %v652
  %1352 = vmatpush1.bf16.msra.mxu0 %v651
  %1353 = vmatprep.subr.bf16.mxu0 %v656
  %1354 = vmatpush1.bf16.msra.mxu0 %v655
  %1355 = vmatprep.subr.bf16.mxu0 0
  %1356 = vmatpush1.bf16.msra.mxu0 0
  %1357 = vmatprep.subr.bf16.mxu0 0
  %1358 = vmatpush1.bf16.msra.mxu0 0
  %1359 = vmatprep.subr.bf16.mxu0 0
  %1360 = vmatpush1.bf16.msra.mxu0 0
  %1361 = vmatprep.subr.bf16.mxu0 0
  %1362 = vmatpush1.bf16.msra.mxu0 0
  %1363 = vmatprep.subr.bf16.mxu0 0
  %1364 = vmatpush1.bf16.msra.mxu0 0
  %1365 = vmatprep.subr.bf16.mxu0 0
  %1366 = vmatpush1.bf16.msra.mxu0 0
  %1367 = vmatprep.subr.bf16.mxu0 0
  %1368 = vmatpush1.bf16.msra.mxu0 0
  %1369 = vmatprep.subr.bf16.mxu0 0
  %1370 = vmatpush1.bf16.msra.mxu0 0
  %1371 = vmatprep.mubr.bf16.mxu0 0
  %1372 = vmatmul.mubr.bf16.gmra.mrb[0].mxu0 %v799
  %v1373 = vpop.f32.mrb[0].mxu0
  %v1374 = vadd.f32 0.0, %v1373
  %v1375 = vpop.f32.mrb[0].mxu0
  %v1376 = vadd.f32 0.0, %v1375
  %v1377 = vpop.f32.mrb[0].mxu0
  %v1378 = vpop.f32.mrb[0].mxu0
  %1379 = vdwg.mxu0
  %v1380 = vadd.f32 %v1294, %v1333
  %v1381 = vadd.f32 %v1295, %v1335
  %v1382 = vadd.f32 %v1296, %v1374
  %v1383 = vadd.f32 %v1297, %v1376
  %v1384 = vxor.u32 %v1380, 2147483648
  %v1385 = vmul.f32 %v1384, 1.442695
  %v1386 = vpow.pop %v1385
  %v1387 = vadd.f32 %v1386, 1.0
  %v1388 = vrcp.pop %v1387
  %v1389 = vmul.f32 1.0, %v1388
  %v1390 = vxor.u32 %v1381, 2147483648
  %v1391 = vmul.f32 %v1390, 1.442695
  %v1392 = vpow.pop %v1391
  %v1393 = vadd.f32 %v1392, 1.0
  %v1394 = vrcp.pop %v1393
  %v1395 = vmul.f32 1.0, %v1394
  %v1396 = vtanh.pop %v1382
  %v1397 = vxor.u32 %v1383, 2147483648
  %v1398 = vmul.f32 %v1397, 1.442695
  %v1399 = vpow.pop %v1398
  %v1400 = vadd.f32 %v1399, 1.0
  %v1401 = vrcp.pop %v1400
  %v1402 = vmul.f32 1.0, %v1401
  %v1403 = vmul.f32 %v1395, %v796
  %v1404 = vmul.f32 %v1389, %v1396
  %v1405 = vadd.f32 %v1403, %v1404
  %v1406 = vtanh.pop %v1405
  %v1407 = vmul.f32 %v1402, %v1406
  %v1408 = vpack.c.bf16 %v1407, %v1407
  %1409 = vmatprep.subr.bf16.mxu0 %v1057
  %1410 = vmatpush1.bf16.msra.mxu0 %v1056
  %1411 = vmatprep.subr.bf16.mxu0 %v1061
  %1412 = vmatpush1.bf16.msra.mxu0 %v1060
  %1413 = vmatprep.subr.bf16.mxu0 %v1065
  %1414 = vmatpush1.bf16.msra.mxu0 %v1064
  %1415 = vmatprep.subr.bf16.mxu0 %v1069
  %1416 = vmatpush1.bf16.msra.mxu0 %v1068
  %1417 = vmatprep.subr.bf16.mxu0 %v1073
  %1418 = vmatpush1.bf16.msra.mxu0 %v1072
  %1419 = vmatprep.subr.bf16.mxu0 %v1077
  %1420 = vmatpush1.bf16.msra.mxu0 %v1076
  %1421 = vmatprep.subr.bf16.mxu0 %v1081
  %1422 = vmatpush1.bf16.msra.mxu0 %v1080
  %1423 = vmatprep.subr.bf16.mxu0 %v1085
  %1424 = vmatpush1.bf16.msra.mxu0 %v1084
  %1425 = vmatprep.subr.bf16.mxu0 %v1089
  %1426 = vmatpush1.bf16.msra.mxu0 %v1088
  %1427 = vmatprep.subr.bf16.mxu0 %v1093
  %1428 = vmatpush1.bf16.msra.mxu0 %v1092
  %1429 = vmatprep.subr.bf16.mxu0 %v1097
  %1430 = vmatpush1.bf16.msra.mxu0 %v1096
  %1431 = vmatprep.subr.bf16.mxu0 %v1101
  %1432 = vmatpush1.bf16.msra.mxu0 %v1100
  %1433 = vmatprep.subr.bf16.mxu0 %v1105
  %1434 = vmatpush1.bf16.msra.mxu0 %v1104
  %1435 = vmatprep.subr.bf16.mxu0 %v1109
  %1436 = vmatpush1.bf16.msra.mxu0 %v1108
  %1437 = vmatprep.subr.bf16.mxu0 %v1113
  %1438 = vmatpush1.bf16.msra.mxu0 %v1112
  %1439 = vmatprep.subr.bf16.mxu0 %v1117
  %1440 = vmatpush1.bf16.msra.mxu0 %v1116
  %1441 = vmatprep.mubr.bf16.mxu0 %v1290
  %1442 = vmatmul.mubr.bf16.gmra.mrb[0].mxu0 %v1408
  %v1443 = vpop.f32.mrb[0].mxu0
  %v1444 = vadd.f32 %v467, %v1443
  %v1445 = vpop.f32.mrb[0].mxu0
  %v1446 = vadd.f32 %v471, %v1445
  %v1447 = vpop.f32.mrb[0].mxu0
  %v1448 = vpop.f32.mrb[0].mxu0
  %1449 = vdwg.mxu0
  %1450 = vmatprep.subr.bf16.mxu0 %v1059
  %1451 = vmatpush1.bf16.msra.mxu0 %v1058
  %1452 = vmatprep.subr.bf16.mxu0 %v1063
  %1453 = vmatpush1.bf16.msra.mxu0 %v1062
  %1454 = vmatprep.subr.bf16.mxu0 %v1067
  %1455 = vmatpush1.bf16.msra.mxu0 %v1066
  %1456 = vmatprep.subr.bf16.mxu0 %v1071
  %1457 = vmatpush1.bf16.msra.mxu0 %v1070
  %1458 = vmatprep.subr.bf16.mxu0 %v1075
  %1459 = vmatpush1.bf16.msra.mxu0 %v1074
  %1460 = vmatprep.subr.bf16.mxu0 %v1079
  %1461 = vmatpush1.bf16.msra.mxu0 %v1078
  %1462 = vmatprep.subr.bf16.mxu0 %v1083
  %1463 = vmatpush1.bf16.msra.mxu0 %v1082
  %1464 = vmatprep.subr.bf16.mxu0 %v1087
  %1465 = vmatpush1.bf16.msra.mxu0 %v1086
  %1466 = vmatprep.subr.bf16.mxu0 %v1091
  %1467 = vmatpush1.bf16.msra.mxu0 %v1090
  %1468 = vmatprep.subr.bf16.mxu0 %v1095
  %1469 = vmatpush1.bf16.msra.mxu0 %v1094
  %1470 = vmatprep.subr.bf16.mxu0 %v1099
  %1471 = vmatpush1.bf16.msra.mxu0 %v1098
  %1472 = vmatprep.subr.bf16.mxu0 %v1103
  %1473 = vmatpush1.bf16.msra.mxu0 %v1102
  %1474 = vmatprep.subr.bf16.mxu0 %v1107
  %1475 = vmatpush1.bf16.msra.mxu0 %v1106
  %1476 = vmatprep.subr.bf16.mxu0 %v1111
  %1477 = vmatpush1.bf16.msra.mxu0 %v1110
  %1478 = vmatprep.subr.bf16.mxu0 %v1115
  %1479 = vmatpush1.bf16.msra.mxu0 %v1114
  %1480 = vmatprep.subr.bf16.mxu0 %v1119
  %1481 = vmatpush1.bf16.msra.mxu0 %v1118
  %1482 = vmatprep.mubr.bf16.mxu0 %v1290
  %1483 = vmatmul.mubr.bf16.gmra.mrb[0].mxu0 %v1408
  %v1484 = vpop.f32.mrb[0].mxu0
  %v1485 = vadd.f32 %v475, %v1484
  %v1486 = vpop.f32.mrb[0].mxu0
  %v1487 = vadd.f32 %v479, %v1486
  %v1488 = vpop.f32.mrb[0].mxu0
  %v1489 = vpop.f32.mrb[0].mxu0
  %1490 = vdwg.mxu0
  %v1491 = vxor.u32 %v1444, 2147483648
  %v1492 = vmul.f32 %v1491, 1.442695
  %v1493 = vpow.pop %v1492
  %v1494 = vadd.f32 %v1493, 1.0
  %v1495 = vrcp.pop %v1494
  %v1496 = vmul.f32 1.0, %v1495
  %v1497 = vxor.u32 %v1446, 2147483648
  %v1498 = vmul.f32 %v1497, 1.442695
  %v1499 = vpow.pop %v1498
  %v1500 = vadd.f32 %v1499, 1.0
  %v1501 = vrcp.pop %v1500
  %v1502 = vmul.f32 1.0, %v1501
  %v1503 = vtanh.pop %v1485
  %v1504 = vxor.u32 %v1487, 2147483648
  %v1505 = vmul.f32 %v1504, 1.442695
  %v1506 = vpow.pop %v1505
  %v1507 = vadd.f32 %v1506, 1.0
  %v1508 = vrcp.pop %v1507
  %v1509 = vmul.f32 1.0, %v1508
  %v1510 = vmul.f32 %v1502, %v1287
  %v1511 = vmul.f32 %v1496, %v1503
  %v1512 = vadd.f32 %v1510, %v1511
  %v1513 = vtanh.pop %v1512
  %v1514 = vmul.f32 %v1509, %v1513
  %v1515 = vpack.c.bf16 %v1514, %v1514
  %s1516 = smul.u32 2, 4
  %s1517 = smul.addr %s1516, 8
  %s1518 = scalar_lea.vmem [#allocation2], %s1517
  %v1519 = vld [vmem:[%s1518] sm:$0xff]
  %v1520 = vld [vmem:[%s1518 + $0x8] sm:$0xff]
  %v1521 = vld [vmem:[%s1518 + $0x10] sm:$0xff]
  %v1522 = vld [vmem:[%s1518 + $0x18] sm:$0xff]
  %1523 = vmatprep.subr.bf16.mxu0 %v626
  %1524 = vmatpush1.bf16.msra.mxu0 %v625
  %1525 = vmatprep.subr.bf16.mxu0 %v630
  %1526 = vmatpush1.bf16.msra.mxu0 %v629
  %1527 = vmatprep.subr.bf16.mxu0 %v634
  %1528 = vmatpush1.bf16.msra.mxu0 %v633
  %1529 = vmatprep.subr.bf16.mxu0 %v638
  %1530 = vmatpush1.bf16.msra.mxu0 %v637
  %1531 = vmatprep.subr.bf16.mxu0 %v642
  %1532 = vmatpush1.bf16.msra.mxu0 %v641
  %1533 = vmatprep.subr.bf16.mxu0 %v646
  %1534 = vmatpush1.bf16.msra.mxu0 %v645
  %1535 = vmatprep.subr.bf16.mxu0 %v650
  %1536 = vmatpush1.bf16.msra.mxu0 %v649
  %1537 = vmatprep.subr.bf16.mxu0 %v654
  %1538 = vmatpush1.bf16.msra.mxu0 %v653
  %1539 = vmatprep.subr.bf16.mxu0 0
  %1540 = vmatpush1.bf16.msra.mxu0 0
  %1541 = vmatprep.subr.bf16.mxu0 0
  %1542 = vmatpush1.bf16.msra.mxu0 0
  %1543 = vmatprep.subr.bf16.mxu0 0
  %1544 = vmatpush1.bf16.msra.mxu0 0
  %1545 = vmatprep.subr.bf16.mxu0 0
  %1546 = vmatpush1.bf16.msra.mxu0 0
  %1547 = vmatprep.subr.bf16.mxu0 0
  %1548 = vmatpush1.bf16.msra.mxu0 0
  %1549 = vmatprep.subr.bf16.mxu0 0
  %1550 = vmatpush1.bf16.msra.mxu0 0
  %1551 = vmatprep.subr.bf16.mxu0 0
  %1552 = vmatpush1.bf16.msra.mxu0 0
  %1553 = vmatprep.subr.bf16.mxu0 0
  %1554 = vmatpush1.bf16.msra.mxu0 0
  %1555 = vmatprep.mubr.bf16.mxu0 0
  %1556 = vmatmul.mubr.bf16.gmra.mrb[0].mxu0 %v1408
  %v1557 = vpop.f32.mrb[0].mxu0
  %v1558 = vadd.f32 0.0, %v1557
  %v1559 = vpop.f32.mrb[0].mxu0
  %v1560 = vadd.f32 0.0, %v1559
  %v1561 = vpop.f32.mrb[0].mxu0
  %v1562 = vpop.f32.mrb[0].mxu0
  %1563 = vdwg.mxu0
  %1564 = vmatprep.subr.bf16.mxu0 %v628
  %1565 = vmatpush1.bf16.msra.mxu0 %v627
  %1566 = vmatprep.subr.bf16.mxu0 %v632
  %1567 = vmatpush1.bf16.msra.mxu0 %v631
  %1568 = vmatprep.subr.bf16.mxu0 %v636
  %1569 = vmatpush1.bf16.msra.mxu0 %v635
  %1570 = vmatprep.subr.bf16.mxu0 %v640
  %1571 = vmatpush1.bf16.msra.mxu0 %v639
  %1572 = vmatprep.subr.bf16.mxu0 %v644
  %1573 = vmatpush1.bf16.msra.mxu0 %v643
  %1574 = vmatprep.subr.bf16.mxu0 %v648
  %1575 = vmatpush1.bf16.msra.mxu0 %v647
  %1576 = vmatprep.subr.bf16.mxu0 %v652
  %1577 = vmatpush1.bf16.msra.mxu0 %v651
  %1578 = vmatprep.subr.bf16.mxu0 %v656
  %1579 = vmatpush1.bf16.msra.mxu0 %v655
  %1580 = vmatprep.subr.bf16.mxu0 0
  %1581 = vmatpush1.bf16.msra.mxu0 0
  %1582 = vmatprep.subr.bf16.mxu0 0
  %1583 = vmatpush1.bf16.msra.mxu0 0
  %1584 = vmatprep.subr.bf16.mxu0 0
  %1585 = vmatpush1.bf16.msra.mxu0 0
  %1586 = vmatprep.subr.bf16.mxu0 0
  %1587 = vmatpush1.bf16.msra.mxu0 0
  %1588 = vmatprep.subr.bf16.mxu0 0
  %1589 = vmatpush1.bf16.msra.mxu0 0
  %1590 = vmatprep.subr.bf16.mxu0 0
  %1591 = vmatpush1.bf16.msra.mxu0 0
  %1592 = vmatprep.subr.bf16.mxu0 0
  %1593 = vmatpush1.bf16.msra.mxu0 0
  %1594 = vmatprep.subr.bf16.mxu0 0
  %1595 = vmatpush1.bf16.msra.mxu0 0
  %1596 = vmatprep.mubr.bf16.mxu0 0
  %1597 = vmatmul.mubr.bf16.gmra.mrb[0].mxu0 %v1408
  %v1598 = vpop.f32.mrb[0].mxu0
  %v1599 = vadd.f32 0.0, %v1598
  %v1600 = vpop.f32.mrb[0].mxu0
  %v1601 = vadd.f32 0.0, %v1600
  %v1602 = vpop.f32.mrb[0].mxu0
  %v1603 = vpop.f32.mrb[0].mxu0
  %1604 = vdwg.mxu0
  %v1605 = vadd.f32 %v1519, %v1558
  %v1606 = vadd.f32 %v1520, %v1560
  %v1607 = vadd.f32 %v1521, %v1599
  %v1608 = vadd.f32 %v1522, %v1601
  %v1609 = vxor.u32 %v1605, 2147483648
  %v1610 = vmul.f32 %v1609, 1.442695
  %v1611 = vpow.pop %v1610
  %v1612 = vadd.f32 %v1611, 1.0
  %v1613 = vrcp.pop %v1612
  %v1614 = vmul.f32 1.0, %v1613
  %v1615 = vxor.u32 %v1606, 2147483648
  %v1616 = vmul.f32 %v1615, 1.442695
  %v1617 = vpow.pop %v1616
  %v1618 = vadd.f32 %v1617, 1.0
  %v1619 = vrcp.pop %v1618
  %v1620 = vmul.f32 1.0, %v1619
  %v1621 = vtanh.pop %v1607
  %v1622 = vxor.u32 %v1608, 2147483648
  %v1623 = vmul.f32 %v1622, 1.442695
  %v1624 = vpow.pop %v1623
  %v1625 = vadd.f32 %v1624, 1.0
  %v1626 = vrcp.pop %v1625
  %v1627 = vmul.f32 1.0, %v1626
  %v1628 = vmul.f32 %v1620, %v1405
  %v1629 = vmul.f32 %v1614, %v1621
  %v1630 = vadd.f32 %v1628, %v1629
  %v1631 = vtanh.pop %v1630
  %v1632 = vmul.f32 %v1627, %v1631
  %v1633 = vpack.c.bf16 %v1632, %v1632
  %1634 = vmatprep.subr.bf16.mxu0 %v1057
  %1635 = vmatpush1.bf16.msra.mxu0 %v1056
  %1636 = vmatprep.subr.bf16.mxu0 %v1061
  %1637 = vmatpush1.bf16.msra.mxu0 %v1060
  %1638 = vmatprep.subr.bf16.mxu0 %v1065
  %1639 = vmatpush1.bf16.msra.mxu0 %v1064
  %1640 = vmatprep.subr.bf16.mxu0 %v1069
  %1641 = vmatpush1.bf16.msra.mxu0 %v1068
  %1642 = vmatprep.subr.bf16.mxu0 %v1073
  %1643 = vmatpush1.bf16.msra.mxu0 %v1072
  %1644 = vmatprep.subr.bf16.mxu0 %v1077
  %1645 = vmatpush1.bf16.msra.mxu0 %v1076
  %1646 = vmatprep.subr.bf16.mxu0 %v1081
  %1647 = vmatpush1.bf16.msra.mxu0 %v1080
  %1648 = vmatprep.subr.bf16.mxu0 %v1085
  %1649 = vmatpush1.bf16.msra.mxu0 %v1084
  %1650 = vmatprep.subr.bf16.mxu0 %v1089
  %1651 = vmatpush1.bf16.msra.mxu0 %v1088
  %1652 = vmatprep.subr.bf16.mxu0 %v1093
  %1653 = vmatpush1.bf16.msra.mxu0 %v1092
  %1654 = vmatprep.subr.bf16.mxu0 %v1097
  %1655 = vmatpush1.bf16.msra.mxu0 %v1096
  %1656 = vmatprep.subr.bf16.mxu0 %v1101
  %1657 = vmatpush1.bf16.msra.mxu0 %v1100
  %1658 = vmatprep.subr.bf16.mxu0 %v1105
  %1659 = vmatpush1.bf16.msra.mxu0 %v1104
  %1660 = vmatprep.subr.bf16.mxu0 %v1109
  %1661 = vmatpush1.bf16.msra.mxu0 %v1108
  %1662 = vmatprep.subr.bf16.mxu0 %v1113
  %1663 = vmatpush1.bf16.msra.mxu0 %v1112
  %1664 = vmatprep.subr.bf16.mxu0 %v1117
  %1665 = vmatpush1.bf16.msra.mxu0 %v1116
  %1666 = vmatprep.mubr.bf16.mxu0 %v1515
  %1667 = vmatmul.mubr.bf16.gmra.mrb[0].mxu0 %v1633
  %v1668 = vpop.f32.mrb[0].mxu0
  %v1669 = vadd.f32 %v467, %v1668
  %v1670 = vpop.f32.mrb[0].mxu0
  %v1671 = vadd.f32 %v471, %v1670
  %v1672 = vpop.f32.mrb[0].mxu0
  %v1673 = vpop.f32.mrb[0].mxu0
  %1674 = vdwg.mxu0
  %1675 = vmatprep.subr.bf16.mxu0 %v1059
  %1676 = vmatpush1.bf16.msra.mxu0 %v1058
  %1677 = vmatprep.subr.bf16.mxu0 %v1063
  %1678 = vmatpush1.bf16.msra.mxu0 %v1062
  %1679 = vmatprep.subr.bf16.mxu0 %v1067
  %1680 = vmatpush1.bf16.msra.mxu0 %v1066
  %1681 = vmatprep.subr.bf16.mxu0 %v1071
  %1682 = vmatpush1.bf16.msra.mxu0 %v1070
  %1683 = vmatprep.subr.bf16.mxu0 %v1075
  %1684 = vmatpush1.bf16.msra.mxu0 %v1074
  %1685 = vmatprep.subr.bf16.mxu0 %v1079
  %1686 = vmatpush1.bf16.msra.mxu0 %v1078
  %1687 = vmatprep.subr.bf16.mxu0 %v1083
  %1688 = vmatpush1.bf16.msra.mxu0 %v1082
  %1689 = vmatprep.subr.bf16.mxu0 %v1087
  %1690 = vmatpush1.bf16.msra.mxu0 %v1086
  %1691 = vmatprep.subr.bf16.mxu0 %v1091
  %1692 = vmatpush1.bf16.msra.mxu0 %v1090
  %1693 = vmatprep.subr.bf16.mxu0 %v1095
  %1694 = vmatpush1.bf16.msra.mxu0 %v1094
  %1695 = vmatprep.subr.bf16.mxu0 %v1099
  %1696 = vmatpush1.bf16.msra.mxu0 %v1098
  %1697 = vmatprep.subr.bf16.mxu0 %v1103
  %1698 = vmatpush1.bf16.msra.mxu0 %v1102
  %1699 = vmatprep.subr.bf16.mxu0 %v1107
  %1700 = vmatpush1.bf16.msra.mxu0 %v1106
  %1701 = vmatprep.subr.bf16.mxu0 %v1111
  %1702 = vmatpush1.bf16.msra.mxu0 %v1110
  %1703 = vmatprep.subr.bf16.mxu0 %v1115
  %1704 = vmatpush1.bf16.msra.mxu0 %v1114
  %1705 = vmatprep.subr.bf16.mxu0 %v1119
  %1706 = vmatpush1.bf16.msra.mxu0 %v1118
  %1707 = vmatprep.mubr.bf16.mxu0 %v1515
  %1708 = vmatmul.mubr.bf16.gmra.mrb[0].mxu0 %v1633
  %v1709 = vpop.f32.mrb[0].mxu0
  %v1710 = vadd.f32 %v475, %v1709
  %v1711 = vpop.f32.mrb[0].mxu0
  %v1712 = vadd.f32 %v479, %v1711
  %v1713 = vpop.f32.mrb[0].mxu0
  %v1714 = vpop.f32.mrb[0].mxu0
  %1715 = vdwg.mxu0
  %v1716 = vxor.u32 %v1669, 2147483648
  %v1717 = vmul.f32 %v1716, 1.442695
  %v1718 = vpow.pop %v1717
  %v1719 = vadd.f32 %v1718, 1.0
  %v1720 = vrcp.pop %v1719
  %v1721 = vmul.f32 1.0, %v1720
  %v1722 = vxor.u32 %v1671, 2147483648
  %v1723 = vmul.f32 %v1722, 1.442695
  %v1724 = vpow.pop %v1723
  %v1725 = vadd.f32 %v1724, 1.0
  %v1726 = vrcp.pop %v1725
  %v1727 = vmul.f32 1.0, %v1726
  %v1728 = vtanh.pop %v1710
  %v1729 = vxor.u32 %v1712, 2147483648
  %v1730 = vmul.f32 %v1729, 1.442695
  %v1731 = vpow.pop %v1730
  %v1732 = vadd.f32 %v1731, 1.0
  %v1733 = vrcp.pop %v1732
  %v1734 = vmul.f32 1.0, %v1733
  %v1735 = vmul.f32 %v1727, %v1512
  %v1736 = vmul.f32 %v1721, %v1728
  %v1737 = vadd.f32 %v1735, %v1736
  %v1738 = vtanh.pop %v1737
  %v1739 = vmul.f32 %v1734, %v1738
  %v1740 = vpack.c.bf16 %v1739, %v1739
  %s1741 = smul.u32 3, 4
  %s1742 = smul.addr %s1741, 8
  %s1743 = scalar_lea.vmem [#allocation2], %s1742
  %v1744 = vld [vmem:[%s1743] sm:$0xff]
  %v1745 = vld [vmem:[%s1743 + $0x8] sm:$0xff]
  %v1746 = vld [vmem:[%s1743 + $0x10] sm:$0xff]
  %v1747 = vld [vmem:[%s1743 + $0x18] sm:$0xff]
  %1748 = vmatprep.subr.bf16.mxu0 %v626
  %1749 = vmatpush1.bf16.msra.mxu0 %v625
  %1750 = vmatprep.subr.bf16.mxu0 %v630
  %1751 = vmatpush1.bf16.msra.mxu0 %v629
  %1752 = vmatprep.subr.bf16.mxu0 %v634
  %1753 = vmatpush1.bf16.msra.mxu0 %v633
  %1754 = vmatprep.subr.bf16.mxu0 %v638
  %1755 = vmatpush1.bf16.msra.mxu0 %v637
  %1756 = vmatprep.subr.bf16.mxu0 %v642
  %1757 = vmatpush1.bf16.msra.mxu0 %v641
  %1758 = vmatprep.subr.bf16.mxu0 %v646
  %1759 = vmatpush1.bf16.msra.mxu0 %v645
  %1760 = vmatprep.subr.bf16.mxu0 %v650
  %1761 = vmatpush1.bf16.msra.mxu0 %v649
  %1762 = vmatprep.subr.bf16.mxu0 %v654
  %1763 = vmatpush1.bf16.msra.mxu0 %v653
  %1764 = vmatprep.subr.bf16.mxu0 0
  %1765 = vmatpush1.bf16.msra.mxu0 0
  %1766 = vmatprep.subr.bf16.mxu0 0
  %1767 = vmatpush1.bf16.msra.mxu0 0
  %1768 = vmatprep.subr.bf16.mxu0 0
  %1769 = vmatpush1.bf16.msra.mxu0 0
  %1770 = vmatprep.subr.bf16.mxu0 0
  %1771 = vmatpush1.bf16.msra.mxu0 0
  %1772 = vmatprep.subr.bf16.mxu0 0
  %1773 = vmatpush1.bf16.msra.mxu0 0
  %1774 = vmatprep.subr.bf16.mxu0 0
  %1775 = vmatpush1.bf16.msra.mxu0 0
  %1776 = vmatprep.subr.bf16.mxu0 0
  %1777 = vmatpush1.bf16.msra.mxu0 0
  %1778 = vmatprep.subr.bf16.mxu0 0
  %1779 = vmatpush1.bf16.msra.mxu0 0
  %1780 = vmatprep.mubr.bf16.mxu0 0
  %1781 = vmatmul.mubr.bf16.gmra.mrb[0].mxu0 %v1633
  %v1782 = vpop.f32.mrb[0].mxu0
  %v1783 = vadd.f32 0.0, %v1782
  %v1784 = vpop.f32.mrb[0].mxu0
  %v1785 = vadd.f32 0.0, %v1784
  %v1786 = vpop.f32.mrb[0].mxu0
  %v1787 = vpop.f32.mrb[0].mxu0
  %1788 = vdwg.mxu0
  %1789 = vmatprep.subr.bf16.mxu0 %v628
  %1790 = vmatpush1.bf16.msra.mxu0 %v627
  %1791 = vmatprep.subr.bf16.mxu0 %v632
  %1792 = vmatpush1.bf16.msra.mxu0 %v631
  %1793 = vmatprep.subr.bf16.mxu0 %v636
  %1794 = vmatpush1.bf16.msra.mxu0 %v635
  %1795 = vmatprep.subr.bf16.mxu0 %v640
  %1796 = vmatpush1.bf16.msra.mxu0 %v639
  %1797 = vmatprep.subr.bf16.mxu0 %v644
  %1798 = vmatpush1.bf16.msra.mxu0 %v643
  %1799 = vmatprep.subr.bf16.mxu0 %v648
  %1800 = vmatpush1.bf16.msra.mxu0 %v647
  %1801 = vmatprep.subr.bf16.mxu0 %v652
  %1802 = vmatpush1.bf16.msra.mxu0 %v651
  %1803 = vmatprep.subr.bf16.mxu0 %v656
  %1804 = vmatpush1.bf16.msra.mxu0 %v655
  %1805 = vmatprep.subr.bf16.mxu0 0
  %1806 = vmatpush1.bf16.msra.mxu0 0
  %1807 = vmatprep.subr.bf16.mxu0 0
  %1808 = vmatpush1.bf16.msra.mxu0 0
  %1809 = vmatprep.subr.bf16.mxu0 0
  %1810 = vmatpush1.bf16.msra.mxu0 0
  %1811 = vmatprep.subr.bf16.mxu0 0
  %1812 = vmatpush1.bf16.msra.mxu0 0
  %1813 = vmatprep.subr.bf16.mxu0 0
  %1814 = vmatpush1.bf16.msra.mxu0 0
  %1815 = vmatprep.subr.bf16.mxu0 0
  %1816 = vmatpush1.bf16.msra.mxu0 0
  %1817 = vmatprep.subr.bf16.mxu0 0
  %1818 = vmatpush1.bf16.msra.mxu0 0
  %1819 = vmatprep.subr.bf16.mxu0 0
  %1820 = vmatpush1.bf16.msra.mxu0 0
  %1821 = vmatprep.mubr.bf16.mxu0 0
  %1822 = vmatmul.mubr.bf16.gmra.mrb[0].mxu0 %v1633
  %v1823 = vpop.f32.mrb[0].mxu0
  %v1824 = vadd.f32 0.0, %v1823
  %v1825 = vpop.f32.mrb[0].mxu0
  %v1826 = vadd.f32 0.0, %v1825
  %v1827 = vpop.f32.mrb[0].mxu0
  %v1828 = vpop.f32.mrb[0].mxu0
  %1829 = vdwg.mxu0
  %v1830 = vadd.f32 %v1744, %v1783
  %v1831 = vadd.f32 %v1745, %v1785
  %v1832 = vadd.f32 %v1746, %v1824
  %v1833 = vadd.f32 %v1747, %v1826
  %v1834 = vxor.u32 %v1830, 2147483648
  %v1835 = vmul.f32 %v1834, 1.442695
  %v1836 = vpow.pop %v1835
  %v1837 = vadd.f32 %v1836, 1.0
  %v1838 = vrcp.pop %v1837
  %v1839 = vmul.f32 1.0, %v1838
  %v1840 = vxor.u32 %v1831, 2147483648
  %v1841 = vmul.f32 %v1840, 1.442695
  %v1842 = vpow.pop %v1841
  %v1843 = vadd.f32 %v1842, 1.0
  %v1844 = vrcp.pop %v1843
  %v1845 = vmul.f32 1.0, %v1844
  %v1846 = vtanh.pop %v1832
  %v1847 = vxor.u32 %v1833, 2147483648
  %v1848 = vmul.f32 %v1847, 1.442695
  %v1849 = vpow.pop %v1848
  %v1850 = vadd.f32 %v1849, 1.0
  %v1851 = vrcp.pop %v1850
  %v1852 = vmul.f32 1.0, %v1851
  %v1853 = vmul.f32 %v1845, %v1630
  %v1854 = vmul.f32 %v1839, %v1846
  %v1855 = vadd.f32 %v1853, %v1854
  %v1856 = vtanh.pop %v1855
  %v1857 = vmul.f32 %v1852, %v1856
  %v1858 = vpack.c.bf16 %v1857, %v1857
  %1859 = vmatprep.subr.bf16.mxu0 %v1057
  %1860 = vmatpush1.bf16.msra.mxu0 %v1056
  %1861 = vmatprep.subr.bf16.mxu0 %v1061
  %1862 = vmatpush1.bf16.msra.mxu0 %v1060
  %1863 = vmatprep.subr.bf16.mxu0 %v1065
  %1864 = vmatpush1.bf16.msra.mxu0 %v1064
  %1865 = vmatprep.subr.bf16.mxu0 %v1069
  %1866 = vmatpush1.bf16.msra.mxu0 %v1068
  %1867 = vmatprep.subr.bf16.mxu0 %v1073
  %1868 = vmatpush1.bf16.msra.mxu0 %v1072
  %1869 = vmatprep.subr.bf16.mxu0 %v1077
  %1870 = vmatpush1.bf16.msra.mxu0 %v1076
  %1871 = vmatprep.subr.bf16.mxu0 %v1081
  %1872 = vmatpush1.bf16.msra.mxu0 %v1080
  %1873 = vmatprep.subr.bf16.mxu0 %v1085
  %1874 = vmatpush1.bf16.msra.mxu0 %v1084
  %1875 = vmatprep.subr.bf16.mxu0 %v1089
  %1876 = vmatpush1.bf16.msra.mxu0 %v1088
  %1877 = vmatprep.subr.bf16.mxu0 %v1093
  %1878 = vmatpush1.bf16.msra.mxu0 %v1092
  %1879 = vmatprep.subr.bf16.mxu0 %v1097
  %1880 = vmatpush1.bf16.msra.mxu0 %v1096
  %1881 = vmatprep.subr.bf16.mxu0 %v1101
  %1882 = vmatpush1.bf16.msra.mxu0 %v1100
  %1883 = vmatprep.subr.bf16.mxu0 %v1105
  %1884 = vmatpush1.bf16.msra.mxu0 %v1104
  %1885 = vmatprep.subr.bf16.mxu0 %v1109
  %1886 = vmatpush1.bf16.msra.mxu0 %v1108
  %1887 = vmatprep.subr.bf16.mxu0 %v1113
  %1888 = vmatpush1.bf16.msra.mxu0 %v1112
  %1889 = vmatprep.subr.bf16.mxu0 %v1117
  %1890 = vmatpush1.bf16.msra.mxu0 %v1116
  %1891 = vmatprep.mubr.bf16.mxu0 %v1740
  %1892 = vmatmul.mubr.bf16.gmra.mrb[0].mxu0 %v1858
  %v1893 = vpop.f32.mrb[0].mxu0
  %v1894 = vadd.f32 %v467, %v1893
  %v1895 = vpop.f32.mrb[0].mxu0
  %v1896 = vadd.f32 %v471, %v1895
  %v1897 = vpop.f32.mrb[0].mxu0
  %v1898 = vpop.f32.mrb[0].mxu0
  %1899 = vdwg.mxu0
  %1900 = vmatprep.subr.bf16.mxu0 %v1059
  %1901 = vmatpush1.bf16.msra.mxu0 %v1058
  %1902 = vmatprep.subr.bf16.mxu0 %v1063
  %1903 = vmatpush1.bf16.msra.mxu0 %v1062
  %1904 = vmatprep.subr.bf16.mxu0 %v1067
  %1905 = vmatpush1.bf16.msra.mxu0 %v1066
  %1906 = vmatprep.subr.bf16.mxu0 %v1071
  %1907 = vmatpush1.bf16.msra.mxu0 %v1070
  %1908 = vmatprep.subr.bf16.mxu0 %v1075
  %1909 = vmatpush1.bf16.msra.mxu0 %v1074
  %1910 = vmatprep.subr.bf16.mxu0 %v1079
  %1911 = vmatpush1.bf16.msra.mxu0 %v1078
  %1912 = vmatprep.subr.bf16.mxu0 %v1083
  %1913 = vmatpush1.bf16.msra.mxu0 %v1082
  %1914 = vmatprep.subr.bf16.mxu0 %v1087
  %1915 = vmatpush1.bf16.msra.mxu0 %v1086
  %1916 = vmatprep.subr.bf16.mxu0 %v1091
  %1917 = vmatpush1.bf16.msra.mxu0 %v1090
  %1918 = vmatprep.subr.bf16.mxu0 %v1095
  %1919 = vmatpush1.bf16.msra.mxu0 %v1094
  %1920 = vmatprep.subr.bf16.mxu0 %v1099
  %1921 = vmatpush1.bf16.msra.mxu0 %v1098
  %1922 = vmatprep.subr.bf16.mxu0 %v1103
  %1923 = vmatpush1.bf16.msra.mxu0 %v1102
  %1924 = vmatprep.subr.bf16.mxu0 %v1107
  %1925 = vmatpush1.bf16.msra.mxu0 %v1106
  %1926 = vmatprep.subr.bf16.mxu0 %v1111
  %1927 = vmatpush1.bf16.msra.mxu0 %v1110
  %1928 = vmatprep.subr.bf16.mxu0 %v1115
  %1929 = vmatpush1.bf16.msra.mxu0 %v1114
  %1930 = vmatprep.subr.bf16.mxu0 %v1119
  %1931 = vmatpush1.bf16.msra.mxu0 %v1118
  %1932 = vmatprep.mubr.bf16.mxu0 %v1740
  %1933 = vmatmul.mubr.bf16.gmra.mrb[0].mxu0 %v1858
  %v1934 = vpop.f32.mrb[0].mxu0
  %v1935 = vadd.f32 %v475, %v1934
  %v1936 = vpop.f32.mrb[0].mxu0
  %v1937 = vadd.f32 %v479, %v1936
  %v1938 = vpop.f32.mrb[0].mxu0
  %v1939 = vpop.f32.mrb[0].mxu0
  %1940 = vdwg.mxu0
  %v1941 = vxor.u32 %v1894, 2147483648
  %v1942 = vmul.f32 %v1941, 1.442695
  %v1943 = vpow.pop %v1942
  %v1944 = vadd.f32 %v1943, 1.0
  %v1945 = vrcp.pop %v1944
  %v1946 = vmul.f32 1.0, %v1945
  %v1947 = vxor.u32 %v1896, 2147483648
  %v1948 = vmul.f32 %v1947, 1.442695
  %v1949 = vpow.pop %v1948
  %v1950 = vadd.f32 %v1949, 1.0
  %v1951 = vrcp.pop %v1950
  %v1952 = vmul.f32 1.0, %v1951
  %v1953 = vtanh.pop %v1935
  %v1954 = vxor.u32 %v1937, 2147483648
  %v1955 = vmul.f32 %v1954, 1.442695
  %v1956 = vpow.pop %v1955
  %v1957 = vadd.f32 %v1956, 1.0
  %v1958 = vrcp.pop %v1957
  %v1959 = vmul.f32 1.0, %v1958
  %v1960 = vmul.f32 %v1952, %v1737
  %v1961 = vmul.f32 %v1946, %v1953
  %v1962 = vadd.f32 %v1960, %v1961
  %v1963 = vtanh.pop %v1962
  %v1964 = vmul.f32 %v1959, %v1963
  %v1965 = vpack.c.bf16 %v1964, %v1964
  %s1966 = smul.u32 4, 4
  %s1967 = smul.addr %s1966, 8
  %s1968 = scalar_lea.vmem [#allocation2], %s1967
  %v1969 = vld [vmem:[%s1968] sm:$0xff]
  %v1970 = vld [vmem:[%s1968 + $0x8] sm:$0xff]
  %v1971 = vld [vmem:[%s1968 + $0x10] sm:$0xff]
  %v1972 = vld [vmem:[%s1968 + $0x18] sm:$0xff]
  %1973 = vmatprep.subr.bf16.mxu0 %v626
  %1974 = vmatpush1.bf16.msra.mxu0 %v625
  %1975 = vmatprep.subr.bf16.mxu0 %v630
  %1976 = vmatpush1.bf16.msra.mxu0 %v629
  %1977 = vmatprep.subr.bf16.mxu0 %v634
  %1978 = vmatpush1.bf16.msra.mxu0 %v633
  %1979 = vmatprep.subr.bf16.mxu0 %v638
  %1980 = vmatpush1.bf16.msra.mxu0 %v637
  %1981 = vmatprep.subr.bf16.mxu0 %v642
  %1982 = vmatpush1.bf16.msra.mxu0 %v641
  %1983 = vmatprep.subr.bf16.mxu0 %v646
  %1984 = vmatpush1.bf16.msra.mxu0 %v645
  %1985 = vmatprep.subr.bf16.mxu0 %v650
  %1986 = vmatpush1.bf16.msra.mxu0 %v649
  %1987 = vmatprep.subr.bf16.mxu0 %v654
  %1988 = vmatpush1.bf16.msra.mxu0 %v653
  %1989 = vmatprep.subr.bf16.mxu0 0
  %1990 = vmatpush1.bf16.msra.mxu0 0
  %1991 = vmatprep.subr.bf16.mxu0 0
  %1992 = vmatpush1.bf16.msra.mxu0 0
  %1993 = vmatprep.subr.bf16.mxu0 0
  %1994 = vmatpush1.bf16.msra.mxu0 0
  %1995 = vmatprep.subr.bf16.mxu0 0
  %1996 = vmatpush1.bf16.msra.mxu0 0
  %1997 = vmatprep.subr.bf16.mxu0 0
  %1998 = vmatpush1.bf16.msra.mxu0 0
  %1999 = vmatprep.subr.bf16.mxu0 0
  %2000 = vmatpush1.bf16.msra.mxu0 0
  %2001 = vmatprep.subr.bf16.mxu0 0
  %2002 = vmatpush1.bf16.msra.mxu0 0
  %2003 = vmatprep.subr.bf16.mxu0 0
  %2004 = vmatpush1.bf16.msra.mxu0 0
  %2005 = vmatprep.mubr.bf16.mxu0 0
  %2006 = vmatmul.mubr.bf16.gmra.mrb[0].mxu0 %v1858
  %v2007 = vpop.f32.mrb[0].mxu0
  %v2008 = vadd.f32 0.0, %v2007
  %v2009 = vpop.f32.mrb[0].mxu0
  %v2010 = vadd.f32 0.0, %v2009
  %v2011 = vpop.f32.mrb[0].mxu0
  %v2012 = vpop.f32.mrb[0].mxu0
  %2013 = vdwg.mxu0
  %2014 = vmatprep.subr.bf16.mxu0 %v628
  %2015 = vmatpush1.bf16.msra.mxu0 %v627
  %2016 = vmatprep.subr.bf16.mxu0 %v632
  %2017 = vmatpush1.bf16.msra.mxu0 %v631
  %2018 = vmatprep.subr.bf16.mxu0 %v636
  %2019 = vmatpush1.bf16.msra.mxu0 %v635
  %2020 = vmatprep.subr.bf16.mxu0 %v640
  %2021 = vmatpush1.bf16.msra.mxu0 %v639
  %2022 = vmatprep.subr.bf16.mxu0 %v644
  %2023 = vmatpush1.bf16.msra.mxu0 %v643
  %2024 = vmatprep.subr.bf16.mxu0 %v648
  %2025 = vmatpush1.bf16.msra.mxu0 %v647
  %2026 = vmatprep.subr.bf16.mxu0 %v652
  %2027 = vmatpush1.bf16.msra.mxu0 %v651
  %2028 = vmatprep.subr.bf16.mxu0 %v656
  %2029 = vmatpush1.bf16.msra.mxu0 %v655
  %2030 = vmatprep.subr.bf16.mxu0 0
  %2031 = vmatpush1.bf16.msra.mxu0 0
  %2032 = vmatprep.subr.bf16.mxu0 0
  %2033 = vmatpush1.bf16.msra.mxu0 0
  %2034 = vmatprep.subr.bf16.mxu0 0
  %2035 = vmatpush1.bf16.msra.mxu0 0
  %2036 = vmatprep.subr.bf16.mxu0 0
  %2037 = vmatpush1.bf16.msra.mxu0 0
  %2038 = vmatprep.subr.bf16.mxu0 0
  %2039 = vmatpush1.bf16.msra.mxu0 0
  %2040 = vmatprep.subr.bf16.mxu0 0
  %2041 = vmatpush1.bf16.msra.mxu0 0
  %2042 = vmatprep.subr.bf16.mxu0 0
  %2043 = vmatpush1.bf16.msra.mxu0 0
  %2044 = vmatprep.subr.bf16.mxu0 0
  %2045 = vmatpush1.bf16.msra.mxu0 0
  %2046 = vmatprep.mubr.bf16.mxu0 0
  %2047 = vmatmul.mubr.bf16.gmra.mrb[0].mxu0 %v1858
  %v2048 = vpop.f32.mrb[0].mxu0
  %v2049 = vadd.f32 0.0, %v2048
  %v2050 = vpop.f32.mrb[0].mxu0
  %v2051 = vadd.f32 0.0, %v2050
  %v2052 = vpop.f32.mrb[0].mxu0
  %v2053 = vpop.f32.mrb[0].mxu0
  %2054 = vdwg.mxu0
  %v2055 = vadd.f32 %v1969, %v2008
  %v2056 = vadd.f32 %v1970, %v2010
  %v2057 = vadd.f32 %v1971, %v2049
  %v2058 = vadd.f32 %v1972, %v2051
  %v2059 = vxor.u32 %v2055, 2147483648
  %v2060 = vmul.f32 %v2059, 1.442695
  %v2061 = vpow.pop %v2060
  %v2062 = vadd.f32 %v2061, 1.0
  %v2063 = vrcp.pop %v2062
  %v2064 = vmul.f32 1.0, %v2063
  %v2065 = vxor.u32 %v2056, 2147483648
  %v2066 = vmul.f32 %v2065, 1.442695
  %v2067 = vpow.pop %v2066
  %v2068 = vadd.f32 %v2067, 1.0
  %v2069 = vrcp.pop %v2068
  %v2070 = vmul.f32 1.0, %v2069
  %v2071 = vtanh.pop %v2057
  %v2072 = vxor.u32 %v2058, 2147483648
  %v2073 = vmul.f32 %v2072, 1.442695
  %v2074 = vpow.pop %v2073
  %v2075 = vadd.f32 %v2074, 1.0
  %v2076 = vrcp.pop %v2075
  %v2077 = vmul.f32 1.0, %v2076
  %v2078 = vmul.f32 %v2070, %v1855
  %v2079 = vmul.f32 %v2064, %v2071
  %v2080 = vadd.f32 %v2078, %v2079
  %v2081 = vtanh.pop %v2080
  %v2082 = vmul.f32 %v2077, %v2081
  %v2083 = vpack.c.bf16 %v2082, %v2082
  %2084 = vmatprep.subr.bf16.mxu0 %v1057
  %2085 = vmatpush1.bf16.msra.mxu0 %v1056
  %2086 = vmatprep.subr.bf16.mxu0 %v1061
  %2087 = vmatpush1.bf16.msra.mxu0 %v1060
  %2088 = vmatprep.subr.bf16.mxu0 %v1065
  %2089 = vmatpush1.bf16.msra.mxu0 %v1064
  %2090 = vmatprep.subr.bf16.mxu0 %v1069
  %2091 = vmatpush1.bf16.msra.mxu0 %v1068
  %2092 = vmatprep.subr.bf16.mxu0 %v1073
  %2093 = vmatpush1.bf16.msra.mxu0 %v1072
  %2094 = vmatprep.subr.bf16.mxu0 %v1077
  %2095 = vmatpush1.bf16.msra.mxu0 %v1076
  %2096 = vmatprep.subr.bf16.mxu0 %v1081
  %2097 = vmatpush1.bf16.msra.mxu0 %v1080
  %2098 = vmatprep.subr.bf16.mxu0 %v1085
  %2099 = vmatpush1.bf16.msra.mxu0 %v1084
  %2100 = vmatprep.subr.bf16.mxu0 %v1089
  %2101 = vmatpush1.bf16.msra.mxu0 %v1088
  %2102 = vmatprep.subr.bf16.mxu0 %v1093
  %2103 = vmatpush1.bf16.msra.mxu0 %v1092
  %2104 = vmatprep.subr.bf16.mxu0 %v1097
  %2105 = vmatpush1.bf16.msra.mxu0 %v1096
  %2106 = vmatprep.subr.bf16.mxu0 %v1101
  %2107 = vmatpush1.bf16.msra.mxu0 %v1100
  %2108 = vmatprep.subr.bf16.mxu0 %v1105
  %2109 = vmatpush1.bf16.msra.mxu0 %v1104
  %2110 = vmatprep.subr.bf16.mxu0 %v1109
  %2111 = vmatpush1.bf16.msra.mxu0 %v1108
  %2112 = vmatprep.subr.bf16.mxu0 %v1113
  %2113 = vmatpush1.bf16.msra.mxu0 %v1112
  %2114 = vmatprep.subr.bf16.mxu0 %v1117
  %2115 = vmatpush1.bf16.msra.mxu0 %v1116
  %2116 = vmatprep.mubr.bf16.mxu0 %v1965
  %2117 = vmatmul.mubr.bf16.gmra.mrb[0].mxu0 %v2083
  %v2118 = vpop.f32.mrb[0].mxu0
  %v2119 = vadd.f32 %v467, %v2118
  %v2120 = vpop.f32.mrb[0].mxu0
  %v2121 = vadd.f32 %v471, %v2120
  %v2122 = vpop.f32.mrb[0].mxu0
  %v2123 = vpop.f32.mrb[0].mxu0
  %2124 = vdwg.mxu0
  %2125 = vmatprep.subr.bf16.mxu0 %v1059
  %2126 = vmatpush1.bf16.msra.mxu0 %v1058
  %2127 = vmatprep.subr.bf16.mxu0 %v1063
  %2128 = vmatpush1.bf16.msra.mxu0 %v1062
  %2129 = vmatprep.subr.bf16.mxu0 %v1067
  %2130 = vmatpush1.bf16.msra.mxu0 %v1066
  %2131 = vmatprep.subr.bf16.mxu0 %v1071
  %2132 = vmatpush1.bf16.msra.mxu0 %v1070
  %2133 = vmatprep.subr.bf16.mxu0 %v1075
  %2134 = vmatpush1.bf16.msra.mxu0 %v1074
  %2135 = vmatprep.subr.bf16.mxu0 %v1079
  %2136 = vmatpush1.bf16.msra.mxu0 %v1078
  %2137 = vmatprep.subr.bf16.mxu0 %v1083
  %2138 = vmatpush1.bf16.msra.mxu0 %v1082
  %2139 = vmatprep.subr.bf16.mxu0 %v1087
  %2140 = vmatpush1.bf16.msra.mxu0 %v1086
  %2141 = vmatprep.subr.bf16.mxu0 %v1091
  %2142 = vmatpush1.bf16.msra.mxu0 %v1090
  %2143 = vmatprep.subr.bf16.mxu0 %v1095
  %2144 = vmatpush1.bf16.msra.mxu0 %v1094
  %2145 = vmatprep.subr.bf16.mxu0 %v1099
  %2146 = vmatpush1.bf16.msra.mxu0 %v1098
  %2147 = vmatprep.subr.bf16.mxu0 %v1103
  %2148 = vmatpush1.bf16.msra.mxu0 %v1102
  %2149 = vmatprep.subr.bf16.mxu0 %v1107
  %2150 = vmatpush1.bf16.msra.mxu0 %v1106
  %2151 = vmatprep.subr.bf16.mxu0 %v1111
  %2152 = vmatpush1.bf16.msra.mxu0 %v1110
  %2153 = vmatprep.subr.bf16.mxu0 %v1115
  %2154 = vmatpush1.bf16.msra.mxu0 %v1114
  %2155 = vmatprep.subr.bf16.mxu0 %v1119
  %2156 = vmatpush1.bf16.msra.mxu0 %v1118
  %2157 = vmatprep.mubr.bf16.mxu0 %v1965
  %2158 = vmatmul.mubr.bf16.gmra.mrb[0].mxu0 %v2083
  %v2159 = vpop.f32.mrb[0].mxu0
  %v2160 = vadd.f32 %v475, %v2159
  %v2161 = vpop.f32.mrb[0].mxu0
  %v2162 = vadd.f32 %v479, %v2161
  %v2163 = vpop.f32.mrb[0].mxu0
  %v2164 = vpop.f32.mrb[0].mxu0
  %2165 = vdwg.mxu0
  %v2166 = vxor.u32 %v2119, 2147483648
  %v2167 = vmul.f32 %v2166, 1.442695
  %v2168 = vpow.pop %v2167
  %v2169 = vadd.f32 %v2168, 1.0
  %v2170 = vrcp.pop %v2169
  %v2171 = vmul.f32 1.0, %v2170
  %v2172 = vxor.u32 %v2121, 2147483648
  %v2173 = vmul.f32 %v2172, 1.442695
  %v2174 = vpow.pop %v2173
  %v2175 = vadd.f32 %v2174, 1.0
  %v2176 = vrcp.pop %v2175
  %v2177 = vmul.f32 1.0, %v2176
  %v2178 = vtanh.pop %v2160
  %v2179 = vxor.u32 %v2162, 2147483648
  %v2180 = vmul.f32 %v2179, 1.442695
  %v2181 = vpow.pop %v2180
  %v2182 = vadd.f32 %v2181, 1.0
  %v2183 = vrcp.pop %v2182
  %v2184 = vmul.f32 1.0, %v2183
  %v2185 = vmul.f32 %v2177, %v1962
  %v2186 = vmul.f32 %v2171, %v2178
  %v2187 = vadd.f32 %v2185, %v2186
  %v2188 = vtanh.pop %v2187
  %v2189 = vmul.f32 %v2184, %v2188
  %v2190 = vpack.c.bf16 %v2189, %v2189
  %s2191 = smul.u32 5, 4
  %s2192 = smul.addr %s2191, 8
  %s2193 = scalar_lea.vmem [#allocation2], %s2192
  %v2194 = vld [vmem:[%s2193] sm:$0xff]
  %v2195 = vld [vmem:[%s2193 + $0x8] sm:$0xff]
  %v2196 = vld [vmem:[%s2193 + $0x10] sm:$0xff]
  %v2197 = vld [vmem:[%s2193 + $0x18] sm:$0xff]
  %2198 = vmatprep.subr.bf16.mxu0 %v626
  %2199 = vmatpush1.bf16.msra.mxu0 %v625
  %2200 = vmatprep.subr.bf16.mxu0 %v630
  %2201 = vmatpush1.bf16.msra.mxu0 %v629
  %2202 = vmatprep.subr.bf16.mxu0 %v634
  %2203 = vmatpush1.bf16.msra.mxu0 %v633
  %2204 = vmatprep.subr.bf16.mxu0 %v638
  %2205 = vmatpush1.bf16.msra.mxu0 %v637
  %2206 = vmatprep.subr.bf16.mxu0 %v642
  %2207 = vmatpush1.bf16.msra.mxu0 %v641
  %2208 = vmatprep.subr.bf16.mxu0 %v646
  %2209 = vmatpush1.bf16.msra.mxu0 %v645
  %2210 = vmatprep.subr.bf16.mxu0 %v650
  %2211 = vmatpush1.bf16.msra.mxu0 %v649
  %2212 = vmatprep.subr.bf16.mxu0 %v654
  %2213 = vmatpush1.bf16.msra.mxu0 %v653
  %2214 = vmatprep.subr.bf16.mxu0 0
  %2215 = vmatpush1.bf16.msra.mxu0 0
  %2216 = vmatprep.subr.bf16.mxu0 0
  %2217 = vmatpush1.bf16.msra.mxu0 0
  %2218 = vmatprep.subr.bf16.mxu0 0
  %2219 = vmatpush1.bf16.msra.mxu0 0
  %2220 = vmatprep.subr.bf16.mxu0 0
  %2221 = vmatpush1.bf16.msra.mxu0 0
  %2222 = vmatprep.subr.bf16.mxu0 0
  %2223 = vmatpush1.bf16.msra.mxu0 0
  %2224 = vmatprep.subr.bf16.mxu0 0
  %2225 = vmatpush1.bf16.msra.mxu0 0
  %2226 = vmatprep.subr.bf16.mxu0 0
  %2227 = vmatpush1.bf16.msra.mxu0 0
  %2228 = vmatprep.subr.bf16.mxu0 0
  %2229 = vmatpush1.bf16.msra.mxu0 0
  %2230 = vmatprep.mubr.bf16.mxu0 0
  %2231 = vmatmul.mubr.bf16.gmra.mrb[0].mxu0 %v2083
  %v2232 = vpop.f32.mrb[0].mxu0
  %v2233 = vadd.f32 0.0, %v2232
  %v2234 = vpop.f32.mrb[0].mxu0
  %v2235 = vadd.f32 0.0, %v2234
  %v2236 = vpop.f32.mrb[0].mxu0
  %v2237 = vpop.f32.mrb[0].mxu0
  %2238 = vdwg.mxu0
  %2239 = vmatprep.subr.bf16.mxu0 %v628
  %2240 = vmatpush1.bf16.msra.mxu0 %v627
  %2241 = vmatprep.subr.bf16.mxu0 %v632
  %2242 = vmatpush1.bf16.msra.mxu0 %v631
  %2243 = vmatprep.subr.bf16.mxu0 %v636
  %2244 = vmatpush1.bf16.msra.mxu0 %v635
  %2245 = vmatprep.subr.bf16.mxu0 %v640
  %2246 = vmatpush1.bf16.msra.mxu0 %v639
  %2247 = vmatprep.subr.bf16.mxu0 %v644
  %2248 = vmatpush1.bf16.msra.mxu0 %v643
  %2249 = vmatprep.subr.bf16.mxu0 %v648
  %2250 = vmatpush1.bf16.msra.mxu0 %v647
  %2251 = vmatprep.subr.bf16.mxu0 %v652
  %2252 = vmatpush1.bf16.msra.mxu0 %v651
  %2253 = vmatprep.subr.bf16.mxu0 %v656
  %2254 = vmatpush1.bf16.msra.mxu0 %v655
  %2255 = vmatprep.subr.bf16.mxu0 0
  %2256 = vmatpush1.bf16.msra.mxu0 0
  %2257 = vmatprep.subr.bf16.mxu0 0
  %2258 = vmatpush1.bf16.msra.mxu0 0
  %2259 = vmatprep.subr.bf16.mxu0 0
  %2260 = vmatpush1.bf16.msra.mxu0 0
  %2261 = vmatprep.subr.bf16.mxu0 0
  %2262 = vmatpush1.bf16.msra.mxu0 0
  %2263 = vmatprep.subr.bf16.mxu0 0
  %2264 = vmatpush1.bf16.msra.mxu0 0
  %2265 = vmatprep.subr.bf16.mxu0 0
  %2266 = vmatpush1.bf16.msra.mxu0 0
  %2267 = vmatprep.subr.bf16.mxu0 0
  %2268 = vmatpush1.bf16.msra.mxu0 0
  %2269 = vmatprep.subr.bf16.mxu0 0
  %2270 = vmatpush1.bf16.msra.mxu0 0
  %2271 = vmatprep.mubr.bf16.mxu0 0
  %2272 = vmatmul.mubr.bf16.gmra.mrb[0].mxu0 %v2083
  %v2273 = vpop.f32.mrb[0].mxu0
  %v2274 = vadd.f32 0.0, %v2273
  %v2275 = vpop.f32.mrb[0].mxu0
  %v2276 = vadd.f32 0.0, %v2275
  %v2277 = vpop.f32.mrb[0].mxu0
  %v2278 = vpop.f32.mrb[0].mxu0
  %2279 = vdwg.mxu0
  %v2280 = vadd.f32 %v2194, %v2233
  %v2281 = vadd.f32 %v2195, %v2235
  %v2282 = vadd.f32 %v2196, %v2274
  %v2283 = vadd.f32 %v2197, %v2276
  %v2284 = vxor.u32 %v2280, 2147483648
  %v2285 = vmul.f32 %v2284, 1.442695
  %v2286 = vpow.pop %v2285
  %v2287 = vadd.f32 %v2286, 1.0
  %v2288 = vrcp.pop %v2287
  %v2289 = vmul.f32 1.0, %v2288
  %v2290 = vxor.u32 %v2281, 2147483648
  %v2291 = vmul.f32 %v2290, 1.442695
  %v2292 = vpow.pop %v2291
  %v2293 = vadd.f32 %v2292, 1.0
  %v2294 = vrcp.pop %v2293
  %v2295 = vmul.f32 1.0, %v2294
  %v2296 = vtanh.pop %v2282
  %v2297 = vxor.u32 %v2283, 2147483648
  %v2298 = vmul.f32 %v2297, 1.442695
  %v2299 = vpow.pop %v2298
  %v2300 = vadd.f32 %v2299, 1.0
  %v2301 = vrcp.pop %v2300
  %v2302 = vmul.f32 1.0, %v2301
  %v2303 = vmul.f32 %v2295, %v2080
  %v2304 = vmul.f32 %v2289, %v2296
  %v2305 = vadd.f32 %v2303, %v2304
  %v2306 = vtanh.pop %v2305
  %v2307 = vmul.f32 %v2302, %v2306
  %v2308 = vpack.c.bf16 %v2307, %v2307
  %2309 = vmatprep.subr.bf16.mxu0 %v1057
  %2310 = vmatpush1.bf16.msra.mxu0 %v1056
  %2311 = vmatprep.subr.bf16.mxu0 %v1061
  %2312 = vmatpush1.bf16.msra.mxu0 %v1060
  %2313 = vmatprep.subr.bf16.mxu0 %v1065
  %2314 = vmatpush1.bf16.msra.mxu0 %v1064
  %2315 = vmatprep.subr.bf16.mxu0 %v1069
  %2316 = vmatpush1.bf16.msra.mxu0 %v1068
  %2317 = vmatprep.subr.bf16.mxu0 %v1073
  %2318 = vmatpush1.bf16.msra.mxu0 %v1072
  %2319 = vmatprep.subr.bf16.mxu0 %v1077
  %2320 = vmatpush1.bf16.msra.mxu0 %v1076
  %2321 = vmatprep.subr.bf16.mxu0 %v1081
  %2322 = vmatpush1.bf16.msra.mxu0 %v1080
  %2323 = vmatprep.subr.bf16.mxu0 %v1085
  %2324 = vmatpush1.bf16.msra.mxu0 %v1084
  %2325 = vmatprep.subr.bf16.mxu0 %v1089
  %2326 = vmatpush1.bf16.msra.mxu0 %v1088
  %2327 = vmatprep.subr.bf16.mxu0 %v1093
  %2328 = vmatpush1.bf16.msra.mxu0 %v1092
  %2329 = vmatprep.subr.bf16.mxu0 %v1097
  %2330 = vmatpush1.bf16.msra.mxu0 %v1096
  %2331 = vmatprep.subr.bf16.mxu0 %v1101
  %2332 = vmatpush1.bf16.msra.mxu0 %v1100
  %2333 = vmatprep.subr.bf16.mxu0 %v1105
  %2334 = vmatpush1.bf16.msra.mxu0 %v1104
  %2335 = vmatprep.subr.bf16.mxu0 %v1109
  %2336 = vmatpush1.bf16.msra.mxu0 %v1108
  %2337 = vmatprep.subr.bf16.mxu0 %v1113
  %2338 = vmatpush1.bf16.msra.mxu0 %v1112
  %2339 = vmatprep.subr.bf16.mxu0 %v1117
  %2340 = vmatpush1.bf16.msra.mxu0 %v1116
  %2341 = vmatprep.mubr.bf16.mxu0 %v2190
  %2342 = vmatmul.mubr.bf16.gmra.mrb[0].mxu0 %v2308
  %v2343 = vpop.f32.mrb[0].mxu0
  %v2344 = vadd.f32 %v467, %v2343
  %v2345 = vpop.f32.mrb[0].mxu0
  %v2346 = vadd.f32 %v471, %v2345
  %v2347 = vpop.f32.mrb[0].mxu0
  %v2348 = vpop.f32.mrb[0].mxu0
  %2349 = vdwg.mxu0
  %2350 = vmatprep.subr.bf16.mxu0 %v1059
  %2351 = vmatpush1.bf16.msra.mxu0 %v1058
  %2352 = vmatprep.subr.bf16.mxu0 %v1063
  %2353 = vmatpush1.bf16.msra.mxu0 %v1062
  %2354 = vmatprep.subr.bf16.mxu0 %v1067
  %2355 = vmatpush1.bf16.msra.mxu0 %v1066
  %2356 = vmatprep.subr.bf16.mxu0 %v1071
  %2357 = vmatpush1.bf16.msra.mxu0 %v1070
  %2358 = vmatprep.subr.bf16.mxu0 %v1075
  %2359 = vmatpush1.bf16.msra.mxu0 %v1074
  %2360 = vmatprep.subr.bf16.mxu0 %v1079
  %2361 = vmatpush1.bf16.msra.mxu0 %v1078
  %2362 = vmatprep.subr.bf16.mxu0 %v1083
  %2363 = vmatpush1.bf16.msra.mxu0 %v1082
  %2364 = vmatprep.subr.bf16.mxu0 %v1087
  %2365 = vmatpush1.bf16.msra.mxu0 %v1086
  %2366 = vmatprep.subr.bf16.mxu0 %v1091
  %2367 = vmatpush1.bf16.msra.mxu0 %v1090
  %2368 = vmatprep.subr.bf16.mxu0 %v1095
  %2369 = vmatpush1.bf16.msra.mxu0 %v1094
  %2370 = vmatprep.subr.bf16.mxu0 %v1099
  %2371 = vmatpush1.bf16.msra.mxu0 %v1098
  %2372 = vmatprep.subr.bf16.mxu0 %v1103
  %2373 = vmatpush1.bf16.msra.mxu0 %v1102
  %2374 = vmatprep.subr.bf16.mxu0 %v1107
  %2375 = vmatpush1.bf16.msra.mxu0 %v1106
  %2376 = vmatprep.subr.bf16.mxu0 %v1111
  %2377 = vmatpush1.bf16.msra.mxu0 %v1110
  %2378 = vmatprep.subr.bf16.mxu0 %v1115
  %2379 = vmatpush1.bf16.msra.mxu0 %v1114
  %2380 = vmatprep.subr.bf16.mxu0 %v1119
  %2381 = vmatpush1.bf16.msra.mxu0 %v1118
  %2382 = vmatprep.mubr.bf16.mxu0 %v2190
  %2383 = vmatmul.mubr.bf16.gmra.mrb[0].mxu0 %v2308
  %v2384 = vpop.f32.mrb[0].mxu0
  %v2385 = vadd.f32 %v475, %v2384
  %v2386 = vpop.f32.mrb[0].mxu0
  %v2387 = vadd.f32 %v479, %v2386
  %v2388 = vpop.f32.mrb[0].mxu0
  %v2389 = vpop.f32.mrb[0].mxu0
  %2390 = vdwg.mxu0
  %v2391 = vxor.u32 %v2344, 2147483648
  %v2392 = vmul.f32 %v2391, 1.442695
  %v2393 = vpow.pop %v2392
  %v2394 = vadd.f32 %v2393, 1.0
  %v2395 = vrcp.pop %v2394
  %v2396 = vmul.f32 1.0, %v2395
  %v2397 = vxor.u32 %v2346, 2147483648
  %v2398 = vmul.f32 %v2397, 1.442695
  %v2399 = vpow.pop %v2398
  %v2400 = vadd.f32 %v2399, 1.0
  %v2401 = vrcp.pop %v2400
  %v2402 = vmul.f32 1.0, %v2401
  %v2403 = vtanh.pop %v2385
  %v2404 = vxor.u32 %v2387, 2147483648
  %v2405 = vmul.f32 %v2404, 1.442695
  %v2406 = vpow.pop %v2405
  %v2407 = vadd.f32 %v2406, 1.0
  %v2408 = vrcp.pop %v2407
  %v2409 = vmul.f32 1.0, %v2408
  %v2410 = vmul.f32 %v2402, %v2187
  %v2411 = vmul.f32 %v2396, %v2403
  %v2412 = vadd.f32 %v2410, %v2411
  %v2413 = vtanh.pop %v2412
  %v2414 = vmul.f32 %v2409, %v2413
  %v2415 = vpack.c.bf16 %v2414, %v2414
  %s2416 = smul.u32 6, 4
  %s2417 = smul.addr %s2416, 8
  %s2418 = scalar_lea.vmem [#allocation2], %s2417
  %v2419 = vld [vmem:[%s2418] sm:$0xff]
  %v2420 = vld [vmem:[%s2418 + $0x8] sm:$0xff]
  %v2421 = vld [vmem:[%s2418 + $0x10] sm:$0xff]
  %v2422 = vld [vmem:[%s2418 + $0x18] sm:$0xff]
  %2423 = vmatprep.subr.bf16.mxu0 %v626
  %2424 = vmatpush1.bf16.msra.mxu0 %v625
  %2425 = vmatprep.subr.bf16.mxu0 %v630
  %2426 = vmatpush1.bf16.msra.mxu0 %v629
  %2427 = vmatprep.subr.bf16.mxu0 %v634
  %2428 = vmatpush1.bf16.msra.mxu0 %v633
  %2429 = vmatprep.subr.bf16.mxu0 %v638
  %2430 = vmatpush1.bf16.msra.mxu0 %v637
  %2431 = vmatprep.subr.bf16.mxu0 %v642
  %2432 = vmatpush1.bf16.msra.mxu0 %v641
  %2433 = vmatprep.subr.bf16.mxu0 %v646
  %2434 = vmatpush1.bf16.msra.mxu0 %v645
  %2435 = vmatprep.subr.bf16.mxu0 %v650
  %2436 = vmatpush1.bf16.msra.mxu0 %v649
  %2437 = vmatprep.subr.bf16.mxu0 %v654
  %2438 = vmatpush1.bf16.msra.mxu0 %v653
  %2439 = vmatprep.subr.bf16.mxu0 0
  %2440 = vmatpush1.bf16.msra.mxu0 0
  %2441 = vmatprep.subr.bf16.mxu0 0
  %2442 = vmatpush1.bf16.msra.mxu0 0
  %2443 = vmatprep.subr.bf16.mxu0 0
  %2444 = vmatpush1.bf16.msra.mxu0 0
  %2445 = vmatprep.subr.bf16.mxu0 0
  %2446 = vmatpush1.bf16.msra.mxu0 0
  %2447 = vmatprep.subr.bf16.mxu0 0
  %2448 = vmatpush1.bf16.msra.mxu0 0
  %2449 = vmatprep.subr.bf16.mxu0 0
  %2450 = vmatpush1.bf16.msra.mxu0 0
  %2451 = vmatprep.subr.bf16.mxu0 0
  %2452 = vmatpush1.bf16.msra.mxu0 0
  %2453 = vmatprep.subr.bf16.mxu0 0
  %2454 = vmatpush1.bf16.msra.mxu0 0
  %2455 = vmatprep.mubr.bf16.mxu0 0
  %2456 = vmatmul.mubr.bf16.gmra.mrb[0].mxu0 %v2308
  %v2457 = vpop.f32.mrb[0].mxu0
  %v2458 = vadd.f32 0.0, %v2457
  %v2459 = vpop.f32.mrb[0].mxu0
  %v2460 = vadd.f32 0.0, %v2459
  %v2461 = vpop.f32.mrb[0].mxu0
  %v2462 = vpop.f32.mrb[0].mxu0
  %2463 = vdwg.mxu0
  %2464 = vmatprep.subr.bf16.mxu0 %v628
  %2465 = vmatpush1.bf16.msra.mxu0 %v627
  %2466 = vmatprep.subr.bf16.mxu0 %v632
  %2467 = vmatpush1.bf16.msra.mxu0 %v631
  %2468 = vmatprep.subr.bf16.mxu0 %v636
  %2469 = vmatpush1.bf16.msra.mxu0 %v635
  %2470 = vmatprep.subr.bf16.mxu0 %v640
  %2471 = vmatpush1.bf16.msra.mxu0 %v639
  %2472 = vmatprep.subr.bf16.mxu0 %v644
  %2473 = vmatpush1.bf16.msra.mxu0 %v643
  %2474 = vmatprep.subr.bf16.mxu0 %v648
  %2475 = vmatpush1.bf16.msra.mxu0 %v647
  %2476 = vmatprep.subr.bf16.mxu0 %v652
  %2477 = vmatpush1.bf16.msra.mxu0 %v651
  %2478 = vmatprep.subr.bf16.mxu0 %v656
  %2479 = vmatpush1.bf16.msra.mxu0 %v655
  %2480 = vmatprep.subr.bf16.mxu0 0
  %2481 = vmatpush1.bf16.msra.mxu0 0
  %2482 = vmatprep.subr.bf16.mxu0 0
  %2483 = vmatpush1.bf16.msra.mxu0 0
  %2484 = vmatprep.subr.bf16.mxu0 0
  %2485 = vmatpush1.bf16.msra.mxu0 0
  %2486 = vmatprep.subr.bf16.mxu0 0
  %2487 = vmatpush1.bf16.msra.mxu0 0
  %2488 = vmatprep.subr.bf16.mxu0 0
  %2489 = vmatpush1.bf16.msra.mxu0 0
  %2490 = vmatprep.subr.bf16.mxu0 0
  %2491 = vmatpush1.bf16.msra.mxu0 0
  %2492 = vmatprep.subr.bf16.mxu0 0
  %2493 = vmatpush1.bf16.msra.mxu0 0
  %2494 = vmatprep.subr.bf16.mxu0 0
  %2495 = vmatpush1.bf16.msra.mxu0 0
  %2496 = vmatprep.mubr.bf16.mxu0 0
  %2497 = vmatmul.mubr.bf16.gmra.mrb[0].mxu0 %v2308
  %v2498 = vpop.f32.mrb[0].mxu0
  %v2499 = vadd.f32 0.0, %v2498
  %v2500 = vpop.f32.mrb[0].mxu0
  %v2501 = vadd.f32 0.0, %v2500
  %v2502 = vpop.f32.mrb[0].mxu0
  %v2503 = vpop.f32.mrb[0].mxu0
  %2504 = vdwg.mxu0
  %v2505 = vadd.f32 %v2419, %v2458
  %v2506 = vadd.f32 %v2420, %v2460
  %v2507 = vadd.f32 %v2421, %v2499
  %v2508 = vadd.f32 %v2422, %v2501
  %v2509 = vxor.u32 %v2505, 2147483648
  %v2510 = vmul.f32 %v2509, 1.442695
  %v2511 = vpow.pop %v2510
  %v2512 = vadd.f32 %v2511, 1.0
  %v2513 = vrcp.pop %v2512
  %v2514 = vmul.f32 1.0, %v2513
  %v2515 = vxor.u32 %v2506, 2147483648
  %v2516 = vmul.f32 %v2515, 1.442695
  %v2517 = vpow.pop %v2516
  %v2518 = vadd.f32 %v2517, 1.0
  %v2519 = vrcp.pop %v2518
  %v2520 = vmul.f32 1.0, %v2519
  %v2521 = vtanh.pop %v2507
  %v2522 = vxor.u32 %v2508, 2147483648
  %v2523 = vmul.f32 %v2522, 1.442695
  %v2524 = vpow.pop %v2523
  %v2525 = vadd.f32 %v2524, 1.0
  %v2526 = vrcp.pop %v2525
  %v2527 = vmul.f32 1.0, %v2526
  %v2528 = vmul.f32 %v2520, %v2305
  %v2529 = vmul.f32 %v2514, %v2521
  %v2530 = vadd.f32 %v2528, %v2529
  %v2531 = vtanh.pop %v2530
  %v2532 = vmul.f32 %v2527, %v2531
  %v2533 = vpack.c.bf16 %v2532, %v2532
  %2534 = vmatprep.subr.bf16.mxu0 %v1057
  %2535 = vmatpush1.bf16.msra.mxu0 %v1056
  %2536 = vmatprep.subr.bf16.mxu0 %v1061
  %2537 = vmatpush1.bf16.msra.mxu0 %v1060
  %2538 = vmatprep.subr.bf16.mxu0 %v1065
  %2539 = vmatpush1.bf16.msra.mxu0 %v1064
  %2540 = vmatprep.subr.bf16.mxu0 %v1069
  %2541 = vmatpush1.bf16.msra.mxu0 %v1068
  %2542 = vmatprep.subr.bf16.mxu0 %v1073
  %2543 = vmatpush1.bf16.msra.mxu0 %v1072
  %2544 = vmatprep.subr.bf16.mxu0 %v1077
  %2545 = vmatpush1.bf16.msra.mxu0 %v1076
  %2546 = vmatprep.subr.bf16.mxu0 %v1081
  %2547 = vmatpush1.bf16.msra.mxu0 %v1080
  %2548 = vmatprep.subr.bf16.mxu0 %v1085
  %2549 = vmatpush1.bf16.msra.mxu0 %v1084
  %2550 = vmatprep.subr.bf16.mxu0 %v1089
  %2551 = vmatpush1.bf16.msra.mxu0 %v1088
  %2552 = vmatprep.subr.bf16.mxu0 %v1093
  %2553 = vmatpush1.bf16.msra.mxu0 %v1092
  %2554 = vmatprep.subr.bf16.mxu0 %v1097
  %2555 = vmatpush1.bf16.msra.mxu0 %v1096
  %2556 = vmatprep.subr.bf16.mxu0 %v1101
  %2557 = vmatpush1.bf16.msra.mxu0 %v1100
  %2558 = vmatprep.subr.bf16.mxu0 %v1105
  %2559 = vmatpush1.bf16.msra.mxu0 %v1104
  %2560 = vmatprep.subr.bf16.mxu0 %v1109
  %2561 = vmatpush1.bf16.msra.mxu0 %v1108
  %2562 = vmatprep.subr.bf16.mxu0 %v1113
  %2563 = vmatpush1.bf16.msra.mxu0 %v1112
  %2564 = vmatprep.subr.bf16.mxu0 %v1117
  %2565 = vmatpush1.bf16.msra.mxu0 %v1116
  %2566 = vmatprep.mubr.bf16.mxu0 %v2415
  %2567 = vmatmul.mubr.bf16.gmra.mrb[0].mxu0 %v2533
  %v2568 = vpop.f32.mrb[0].mxu0
  %v2569 = vadd.f32 %v467, %v2568
  %v2570 = vpop.f32.mrb[0].mxu0
  %v2571 = vadd.f32 %v471, %v2570
  %v2572 = vpop.f32.mrb[0].mxu0
  %v2573 = vpop.f32.mrb[0].mxu0
  %2574 = vdwg.mxu0
  %2575 = vmatprep.subr.bf16.mxu0 %v1059
  %2576 = vmatpush1.bf16.msra.mxu0 %v1058
  %2577 = vmatprep.subr.bf16.mxu0 %v1063
  %2578 = vmatpush1.bf16.msra.mxu0 %v1062
  %2579 = vmatprep.subr.bf16.mxu0 %v1067
  %2580 = vmatpush1.bf16.msra.mxu0 %v1066
  %2581 = vmatprep.subr.bf16.mxu0 %v1071
  %2582 = vmatpush1.bf16.msra.mxu0 %v1070
  %2583 = vmatprep.subr.bf16.mxu0 %v1075
  %2584 = vmatpush1.bf16.msra.mxu0 %v1074
  %2585 = vmatprep.subr.bf16.mxu0 %v1079
  %2586 = vmatpush1.bf16.msra.mxu0 %v1078
  %2587 = vmatprep.subr.bf16.mxu0 %v1083
  %2588 = vmatpush1.bf16.msra.mxu0 %v1082
  %2589 = vmatprep.subr.bf16.mxu0 %v1087
  %2590 = vmatpush1.bf16.msra.mxu0 %v1086
  %2591 = vmatprep.subr.bf16.mxu0 %v1091
  %2592 = vmatpush1.bf16.msra.mxu0 %v1090
  %2593 = vmatprep.subr.bf16.mxu0 %v1095
  %2594 = vmatpush1.bf16.msra.mxu0 %v1094
  %2595 = vmatprep.subr.bf16.mxu0 %v1099
  %2596 = vmatpush1.bf16.msra.mxu0 %v1098
  %2597 = vmatprep.subr.bf16.mxu0 %v1103
  %2598 = vmatpush1.bf16.msra.mxu0 %v1102
  %2599 = vmatprep.subr.bf16.mxu0 %v1107
  %2600 = vmatpush1.bf16.msra.mxu0 %v1106
  %2601 = vmatprep.subr.bf16.mxu0 %v1111
  %2602 = vmatpush1.bf16.msra.mxu0 %v1110
  %2603 = vmatprep.subr.bf16.mxu0 %v1115
  %2604 = vmatpush1.bf16.msra.mxu0 %v1114
  %2605 = vmatprep.subr.bf16.mxu0 %v1119
  %2606 = vmatpush1.bf16.msra.mxu0 %v1118
  %2607 = vmatprep.mubr.bf16.mxu0 %v2415
  %2608 = vmatmul.mubr.bf16.gmra.mrb[0].mxu0 %v2533
  %v2609 = vpop.f32.mrb[0].mxu0
  %v2610 = vadd.f32 %v475, %v2609
  %v2611 = vpop.f32.mrb[0].mxu0
  %v2612 = vadd.f32 %v479, %v2611
  %v2613 = vpop.f32.mrb[0].mxu0
  %v2614 = vpop.f32.mrb[0].mxu0
  %2615 = vdwg.mxu0
  %v2616 = vxor.u32 %v2569, 2147483648
  %v2617 = vmul.f32 %v2616, 1.442695
  %v2618 = vpow.pop %v2617
  %v2619 = vadd.f32 %v2618, 1.0
  %v2620 = vrcp.pop %v2619
  %v2621 = vmul.f32 1.0, %v2620
  %v2622 = vxor.u32 %v2571, 2147483648
  %v2623 = vmul.f32 %v2622, 1.442695
  %v2624 = vpow.pop %v2623
  %v2625 = vadd.f32 %v2624, 1.0
  %v2626 = vrcp.pop %v2625
  %v2627 = vmul.f32 1.0, %v2626
  %v2628 = vtanh.pop %v2610
  %v2629 = vxor.u32 %v2612, 2147483648
  %v2630 = vmul.f32 %v2629, 1.442695
  %v2631 = vpow.pop %v2630
  %v2632 = vadd.f32 %v2631, 1.0
  %v2633 = vrcp.pop %v2632
  %v2634 = vmul.f32 1.0, %v2633
  %v2635 = vmul.f32 %v2627, %v2412
  %v2636 = vmul.f32 %v2621, %v2628
  %v2637 = vadd.f32 %v2635, %v2636
  %v2638 = vtanh.pop %v2637
  %v2639 = vmul.f32 %v2634, %v2638
  %v2640 = vpack.c.bf16 %v2639, %v2639
  %s2641 = smul.u32 7, 4
  %s2642 = smul.addr %s2641, 8
  %s2643 = scalar_lea.vmem [#allocation2], %s2642
  %v2644 = vld [vmem:[%s2643] sm:$0xff]
  %v2645 = vld [vmem:[%s2643 + $0x8] sm:$0xff]
  %v2646 = vld [vmem:[%s2643 + $0x10] sm:$0xff]
  %v2647 = vld [vmem:[%s2643 + $0x18] sm:$0xff]
  %2648 = vmatprep.subr.bf16.mxu0 %v626
  %2649 = vmatpush1.bf16.msra.mxu0 %v625
  %2650 = vmatprep.subr.bf16.mxu0 %v630
  %2651 = vmatpush1.bf16.msra.mxu0 %v629
  %2652 = vmatprep.subr.bf16.mxu0 %v634
  %2653 = vmatpush1.bf16.msra.mxu0 %v633
  %2654 = vmatprep.subr.bf16.mxu0 %v638
  %2655 = vmatpush1.bf16.msra.mxu0 %v637
  %2656 = vmatprep.subr.bf16.mxu0 %v642
  %2657 = vmatpush1.bf16.msra.mxu0 %v641
  %2658 = vmatprep.subr.bf16.mxu0 %v646
  %2659 = vmatpush1.bf16.msra.mxu0 %v645
  %2660 = vmatprep.subr.bf16.mxu0 %v650
  %2661 = vmatpush1.bf16.msra.mxu0 %v649
  %2662 = vmatprep.subr.bf16.mxu0 %v654
  %2663 = vmatpush1.bf16.msra.mxu0 %v653
  %2664 = vmatprep.subr.bf16.mxu0 0
  %2665 = vmatpush1.bf16.msra.mxu0 0
  %2666 = vmatprep.subr.bf16.mxu0 0
  %2667 = vmatpush1.bf16.msra.mxu0 0
  %2668 = vmatprep.subr.bf16.mxu0 0
  %2669 = vmatpush1.bf16.msra.mxu0 0
  %2670 = vmatprep.subr.bf16.mxu0 0
  %2671 = vmatpush1.bf16.msra.mxu0 0
  %2672 = vmatprep.subr.bf16.mxu0 0
  %2673 = vmatpush1.bf16.msra.mxu0 0
  %2674 = vmatprep.subr.bf16.mxu0 0
  %2675 = vmatpush1.bf16.msra.mxu0 0
  %2676 = vmatprep.subr.bf16.mxu0 0
  %2677 = vmatpush1.bf16.msra.mxu0 0
  %2678 = vmatprep.subr.bf16.mxu0 0
  %2679 = vmatpush1.bf16.msra.mxu0 0
  %2680 = vmatprep.mubr.bf16.mxu0 0
  %2681 = vmatmul.mubr.bf16.gmra.mrb[0].mxu0 %v2533
  %v2682 = vpop.f32.mrb[0].mxu0
  %v2683 = vadd.f32 0.0, %v2682
  %v2684 = vpop.f32.mrb[0].mxu0
  %v2685 = vadd.f32 0.0, %v2684
  %v2686 = vpop.f32.mrb[0].mxu0
  %v2687 = vpop.f32.mrb[0].mxu0
  %2688 = vdwg.mxu0
  %2689 = vmatprep.subr.bf16.mxu0 %v628
  %2690 = vmatpush1.bf16.msra.mxu0 %v627
  %2691 = vmatprep.subr.bf16.mxu0 %v632
  %2692 = vmatpush1.bf16.msra.mxu0 %v631
  %2693 = vmatprep.subr.bf16.mxu0 %v636
  %2694 = vmatpush1.bf16.msra.mxu0 %v635
  %2695 = vmatprep.subr.bf16.mxu0 %v640
  %2696 = vmatpush1.bf16.msra.mxu0 %v639
  %2697 = vmatprep.subr.bf16.mxu0 %v644
  %2698 = vmatpush1.bf16.msra.mxu0 %v643
  %2699 = vmatprep.subr.bf16.mxu0 %v648
  %2700 = vmatpush1.bf16.msra.mxu0 %v647
  %2701 = vmatprep.subr.bf16.mxu0 %v652
  %2702 = vmatpush1.bf16.msra.mxu0 %v651
  %2703 = vmatprep.subr.bf16.mxu0 %v656
  %2704 = vmatpush1.bf16.msra.mxu0 %v655
  %2705 = vmatprep.subr.bf16.mxu0 0
  %2706 = vmatpush1.bf16.msra.mxu0 0
  %2707 = vmatprep.subr.bf16.mxu0 0
  %2708 = vmatpush1.bf16.msra.mxu0 0
  %2709 = vmatprep.subr.bf16.mxu0 0
  %2710 = vmatpush1.bf16.msra.mxu0 0
  %2711 = vmatprep.subr.bf16.mxu0 0
  %2712 = vmatpush1.bf16.msra.mxu0 0
  %2713 = vmatprep.subr.bf16.mxu0 0
  %2714 = vmatpush1.bf16.msra.mxu0 0
  %2715 = vmatprep.subr.bf16.mxu0 0
  %2716 = vmatpush1.bf16.msra.mxu0 0
  %2717 = vmatprep.subr.bf16.mxu0 0
  %2718 = vmatpush1.bf16.msra.mxu0 0
  %2719 = vmatprep.subr.bf16.mxu0 0
  %2720 = vmatpush1.bf16.msra.mxu0 0
  %2721 = vmatprep.mubr.bf16.mxu0 0
  %2722 = vmatmul.mubr.bf16.gmra.mrb[0].mxu0 %v2533
  %v2723 = vpop.f32.mrb[0].mxu0
  %v2724 = vadd.f32 0.0, %v2723
  %v2725 = vpop.f32.mrb[0].mxu0
  %v2726 = vadd.f32 0.0, %v2725
  %v2727 = vpop.f32.mrb[0].mxu0
  %v2728 = vpop.f32.mrb[0].mxu0
  %2729 = vdwg.mxu0
  %v2730 = vadd.f32 %v2644, %v2683
  %v2731 = vadd.f32 %v2645, %v2685
  %v2732 = vadd.f32 %v2646, %v2724
  %v2733 = vadd.f32 %v2647, %v2726
  %v2734 = vxor.u32 %v2730, 2147483648
  %v2735 = vmul.f32 %v2734, 1.442695
  %v2736 = vpow.pop %v2735
  %v2737 = vadd.f32 %v2736, 1.0
  %v2738 = vrcp.pop %v2737
  %v2739 = vmul.f32 1.0, %v2738
  %v2740 = vxor.u32 %v2731, 2147483648
  %v2741 = vmul.f32 %v2740, 1.442695
  %v2742 = vpow.pop %v2741
  %v2743 = vadd.f32 %v2742, 1.0
  %v2744 = vrcp.pop %v2743
  %v2745 = vmul.f32 1.0, %v2744
  %v2746 = vtanh.pop %v2732
  %v2747 = vxor.u32 %v2733, 2147483648
  %v2748 = vmul.f32 %v2747, 1.442695
  %v2749 = vpow.pop %v2748
  %v2750 = vadd.f32 %v2749, 1.0
  %v2751 = vrcp.pop %v2750
  %v2752 = vmul.f32 1.0, %v2751
  %v2753 = vmul.f32 %v2745, %v2530
  %v2754 = vmul.f32 %v2739, %v2746
  %v2755 = vadd.f32 %v2753, %v2754
  %v2756 = vtanh.pop %v2755
  %v2757 = vmul.f32 %v2752, %v2756
  %v2758 = vpack.c.bf16 %v2757, %v2757
  %2759 = vmatprep.subr.bf16.mxu0 %v1057
  %2760 = vmatpush1.bf16.msra.mxu0 %v1056
  %2761 = vmatprep.subr.bf16.mxu0 %v1061
  %2762 = vmatpush1.bf16.msra.mxu0 %v1060
  %2763 = vmatprep.subr.bf16.mxu0 %v1065
  %2764 = vmatpush1.bf16.msra.mxu0 %v1064
  %2765 = vmatprep.subr.bf16.mxu0 %v1069
  %2766 = vmatpush1.bf16.msra.mxu0 %v1068
  %2767 = vmatprep.subr.bf16.mxu0 %v1073
  %2768 = vmatpush1.bf16.msra.mxu0 %v1072
  %2769 = vmatprep.subr.bf16.mxu0 %v1077
  %2770 = vmatpush1.bf16.msra.mxu0 %v1076
  %2771 = vmatprep.subr.bf16.mxu0 %v1081
  %2772 = vmatpush1.bf16.msra.mxu0 %v1080
  %2773 = vmatprep.subr.bf16.mxu0 %v1085
  %2774 = vmatpush1.bf16.msra.mxu0 %v1084
  %2775 = vmatprep.subr.bf16.mxu0 %v1089
  %2776 = vmatpush1.bf16.msra.mxu0 %v1088
  %2777 = vmatprep.subr.bf16.mxu0 %v1093
  %2778 = vmatpush1.bf16.msra.mxu0 %v1092
  %2779 = vmatprep.subr.bf16.mxu0 %v1097
  %2780 = vmatpush1.bf16.msra.mxu0 %v1096
  %2781 = vmatprep.subr.bf16.mxu0 %v1101
  %2782 = vmatpush1.bf16.msra.mxu0 %v1100
  %2783 = vmatprep.subr.bf16.mxu0 %v1105
  %2784 = vmatpush1.bf16.msra.mxu0 %v1104
  %2785 = vmatprep.subr.bf16.mxu0 %v1109
  %2786 = vmatpush1.bf16.msra.mxu0 %v1108
  %2787 = vmatprep.subr.bf16.mxu0 %v1113
  %2788 = vmatpush1.bf16.msra.mxu0 %v1112
  %2789 = vmatprep.subr.bf16.mxu0 %v1117
  %2790 = vmatpush1.bf16.msra.mxu0 %v1116
  %2791 = vmatprep.mubr.bf16.mxu0 %v2640
  %2792 = vmatmul.mubr.bf16.gmra.mrb[0].mxu0 %v2758
  %v2793 = vpop.f32.mrb[0].mxu0
  %v2794 = vadd.f32 %v467, %v2793
  %v2795 = vpop.f32.mrb[0].mxu0
  %v2796 = vadd.f32 %v471, %v2795
  %v2797 = vpop.f32.mrb[0].mxu0
  %v2798 = vpop.f32.mrb[0].mxu0
  %2799 = vdwg.mxu0
  %2800 = vmatprep.subr.bf16.mxu0 %v1059
  %2801 = vmatpush1.bf16.msra.mxu0 %v1058
  %2802 = vmatprep.subr.bf16.mxu0 %v1063
  %2803 = vmatpush1.bf16.msra.mxu0 %v1062
  %2804 = vmatprep.subr.bf16.mxu0 %v1067
  %2805 = vmatpush1.bf16.msra.mxu0 %v1066
  %2806 = vmatprep.subr.bf16.mxu0 %v1071
  %2807 = vmatpush1.bf16.msra.mxu0 %v1070
  %2808 = vmatprep.subr.bf16.mxu0 %v1075
  %2809 = vmatpush1.bf16.msra.mxu0 %v1074
  %2810 = vmatprep.subr.bf16.mxu0 %v1079
  %2811 = vmatpush1.bf16.msra.mxu0 %v1078
  %2812 = vmatprep.subr.bf16.mxu0 %v1083
  %2813 = vmatpush1.bf16.msra.mxu0 %v1082
  %2814 = vmatprep.subr.bf16.mxu0 %v1087
  %2815 = vmatpush1.bf16.msra.mxu0 %v1086
  %2816 = vmatprep.subr.bf16.mxu0 %v1091
  %2817 = vmatpush1.bf16.msra.mxu0 %v1090
  %2818 = vmatprep.subr.bf16.mxu0 %v1095
  %2819 = vmatpush1.bf16.msra.mxu0 %v1094
  %2820 = vmatprep.subr.bf16.mxu0 %v1099
  %2821 = vmatpush1.bf16.msra.mxu0 %v1098
  %2822 = vmatprep.subr.bf16.mxu0 %v1103
  %2823 = vmatpush1.bf16.msra.mxu0 %v1102
  %2824 = vmatprep.subr.bf16.mxu0 %v1107
  %2825 = vmatpush1.bf16.msra.mxu0 %v1106
  %2826 = vmatprep.subr.bf16.mxu0 %v1111
  %2827 = vmatpush1.bf16.msra.mxu0 %v1110
  %2828 = vmatprep.subr.bf16.mxu0 %v1115
  %2829 = vmatpush1.bf16.msra.mxu0 %v1114
  %2830 = vmatprep.subr.bf16.mxu0 %v1119
  %2831 = vmatpush1.bf16.msra.mxu0 %v1118
  %2832 = vmatprep.mubr.bf16.mxu0 %v2640
  %2833 = vmatmul.mubr.bf16.gmra.mrb[0].mxu0 %v2758
  %v2834 = vpop.f32.mrb[0].mxu0
  %v2835 = vadd.f32 %v475, %v2834
  %v2836 = vpop.f32.mrb[0].mxu0
  %v2837 = vadd.f32 %v479, %v2836
  %v2838 = vpop.f32.mrb[0].mxu0
  %v2839 = vpop.f32.mrb[0].mxu0
  %2840 = vdwg.mxu0
  %v2841 = vxor.u32 %v2794, 2147483648
  %v2842 = vmul.f32 %v2841, 1.442695
  %v2843 = vpow.pop %v2842
  %v2844 = vadd.f32 %v2843, 1.0
  %v2845 = vrcp.pop %v2844
  %v2846 = vmul.f32 1.0, %v2845
  %v2847 = vxor.u32 %v2796, 2147483648
  %v2848 = vmul.f32 %v2847, 1.442695
  %v2849 = vpow.pop %v2848
  %v2850 = vadd.f32 %v2849, 1.0
  %v2851 = vrcp.pop %v2850
  %v2852 = vmul.f32 1.0, %v2851
  %v2853 = vtanh.pop %v2835
  %v2854 = vxor.u32 %v2837, 2147483648
  %v2855 = vmul.f32 %v2854, 1.442695
  %v2856 = vpow.pop %v2855
  %v2857 = vadd.f32 %v2856, 1.0
  %v2858 = vrcp.pop %v2857
  %v2859 = vmul.f32 1.0, %v2858
  %v2860 = vmul.f32 %v2852, %v2637
  %v2861 = vmul.f32 %v2846, %v2853
  %v2862 = vadd.f32 %v2860, %v2861
  %v2863 = vtanh.pop %v2862
  %v2864 = vmul.f32 %v2859, %v2863
  %v2865 = vpack.c.bf16 %v2864, %v2864
  %2866 = vst [vmem:[#allocation3] sm:$0xf] %v2758
  %2867 = vst [vmem:[#allocation4] sm:$0xff] %v2755
  %2868 = vst [vmem:[%s485] sm:$0xf] %v2865
  %2869 = vst [vmem:[%s488] sm:$0xff] %v2862
  // Predicated region
  $region38: #{lstm_soh_forward.1} parent=0 // pred_check
    %p2870 = pneg %p30
  $region39: #{lstm_soh_forward.1} parent=0 // pred_check_branch
    %2872 = sbr.rel (%p2870) target = $region41
  $region40: #{lstm_soh_forward.1} parent=0 // pred_region
    %v2873 = vld [vmem:[%s6] sm:$0xf]
    %v2874 = vld [vmem:[%s6 + $0x4] sm:$0xf]
    %v2875 = vld [vmem:[%s6 + $0x8] sm:$0xf]
    %v2876 = vld [vmem:[%s6 + $0xc] sm:$0xf]
    %v2877 = vld [vmem:[%s6 + $0x10] sm:$0xf]
    %v2878 = vld [vmem:[%s6 + $0x14] sm:$0xf]
    %v2879 = vld [vmem:[%s6 + $0x18] sm:$0xf]
    %v2880 = vld [vmem:[%s6 + $0x1c] sm:$0xf]
    %v2881 = vld [vmem:[%s6 + $0x20] sm:$0xf]
    %v2882 = vld [vmem:[%s6 + $0x24] sm:$0xf]
    %v2883 = vld [vmem:[%s6 + $0x28] sm:$0xf]
    %v2884 = vld [vmem:[%s6 + $0x2c] sm:$0xf]
    %v2885 = vld [vmem:[%s6 + $0x30] sm:$0xf]
    %v2886 = vld [vmem:[%s6 + $0x34] sm:$0xf]
    %v2887 = vld [vmem:[%s6 + $0x38] sm:$0xf]
    %v2888 = vld [vmem:[%s6 + $0x3c] sm:$0xf]
    %v2889 = vld [vmem:[%s7] sm:$0x1]
    %v2891 = vlaneseq
    %v2892 = vshrl.u32 %v2891, 7
    %v2893 = vsub.s32 0, %v2892
    %v2894 = vrot.slane %v2889, %v2893
    %v2912 = vunpack.c.l.b16 %v2873
    %v2913 = vunpack.c.l.b16 %v2874
    %v2914 = vunpack.c.l.b16 %v2875
    %v2915 = vunpack.c.l.b16 %v2876
    %v2916 = vunpack.c.l.b16 %v2877
    %v2917 = vunpack.c.l.b16 %v2878
    %v2918 = vunpack.c.l.b16 %v2879
    %v2919 = vunpack.c.l.b16 %v2880
    %v2920 = vunpack.c.l.b16 %v2881
    %v2921 = vunpack.c.l.b16 %v2882
    %v2922 = vunpack.c.l.b16 %v2883
    %v2923 = vunpack.c.l.b16 %v2884
    %v2924 = vunpack.c.l.b16 %v2885
    %v2925 = vunpack.c.l.b16 %v2886
    %v2926 = vunpack.c.l.b16 %v2887
    %v2927 = vunpack.c.l.b16 %v2888
    %v2928 = vpack.c.b16 %v2913, %v2912
    %v2929 = vpack.c.b16 %v2915, %v2914
    %v2930 = vpack.c.b16 %v2917, %v2916
    %v2931 = vpack.c.b16 %v2919, %v2918
    %v2932 = vpack.c.b16 %v2921, %v2920
    %v2933 = vpack.c.b16 %v2923, %v2922
    %v2934 = vpack.c.b16 %v2925, %v2924
    %v2935 = vpack.c.b16 %v2927, %v2926
    %2944 = vmatprep.subr.bf16.mxu0 0
    %2945 = vmatpush1.bf16.msra.mxu0 %v2928
    %2946 = vmatprep.subr.bf16.mxu0 0
    %2947 = vmatpush1.bf16.msra.mxu0 %v2929
    %2948 = vmatprep.subr.bf16.mxu0 0
    %2949 = vmatpush1.bf16.msra.mxu0 %v2930
    %2950 = vmatprep.subr.bf16.mxu0 0
    %2951 = vmatpush1.bf16.msra.mxu0 %v2931
    %2952 = vmatprep.subr.bf16.mxu0 0
    %2953 = vmatpush1.bf16.msra.mxu0 %v2932
    %2954 = vmatprep.subr.bf16.mxu0 0
    %2955 = vmatpush1.bf16.msra.mxu0 %v2933
    %2956 = vmatprep.subr.bf16.mxu0 0
    %2957 = vmatpush1.bf16.msra.mxu0 %v2934
    %2958 = vmatprep.subr.bf16.mxu0 0
    %2959 = vmatpush1.bf16.msra.mxu0 %v2935
    %2960 = vmatprep.subr.bf16.mxu0 0
    %2961 = vmatpush1.bf16.msra.mxu0 0
    %2962 = vmatprep.subr.bf16.mxu0 0
    %2963 = vmatpush1.bf16.msra.mxu0 0
    %2964 = vmatprep.subr.bf16.mxu0 0
    %2965 = vmatpush1.bf16.msra.mxu0 0
    %2966 = vmatprep.subr.bf16.mxu0 0
    %2967 = vmatpush1.bf16.msra.mxu0 0
    %2968 = vmatprep.subr.bf16.mxu0 0
    %2969 = vmatpush1.bf16.msra.mxu0 0
    %2970 = vmatprep.subr.bf16.mxu0 0
    %2971 = vmatpush1.bf16.msra.mxu0 0
    %2972 = vmatprep.subr.bf16.mxu0 0
    %2973 = vmatpush1.bf16.msra.mxu0 0
    %2974 = vmatprep.subr.bf16.mxu0 0
    %2975 = vmatpush1.bf16.msra.mxu0 0
    %2976 = vmatprep.mubr.bf16.mxu0 0
    %2977 = vmatmul.mubr.bf16.gmra.mrb[0].mxu0 %v2865
    %v2978 = vpop.f32.mrb[0].mxu0
    %v2979 = vadd.f32 %v2894, %v2978
    %v2980 = vpop.f32.mrb[0].mxu0
    %v2981 = vpop.f32.mrb[0].mxu0
    %v2982 = vpop.f32.mrb[0].mxu0
    %2983 = vdwg.mxu0
    %2984 = vst [vmem:[%s8] sm:$0xff] %v2979
  $region41: #{lstm_soh_forward.1} parent=0 // pred_fallthru
    _
  // Predicated region
  $region42: #{lstm_soh_forward.1} parent=0 // pred_check
    _
  $region43: #{lstm_soh_forward.1} parent=0 // pred_check_branch
    %2986 = sbr.rel (0) target = $region45
  $region44: #{lstm_soh_forward.1} parent=0 // pred_region
    _
  $region45: #{lstm_soh_forward.1} parent=0 // pred_fallthru
    _
  // Predicated region
  $region46: #{lstm_soh_forward.1} parent=0 // pred_check
    _
  $region47: #{lstm_soh_forward.1} parent=0 // pred_check_branch
    %2988 = sbr.rel (0) target = $region49
  $region48: #{lstm_soh_forward.1} parent=0 // pred_region
    _
  $region49: #{lstm_soh_forward.1} parent=0 // pred_fallthru
    _

</llo_original>
